<compile_context>
chip_gen: v5e
topology: v5e:2x2
jax: 0.10.0
libtpu: 0.0.40
codegen_flags: <defaults>
</compile_context>

<pallas_src>
import jax
import jax.numpy as jnp
from jax import lax
from jax.experimental import pallas as pl
from jax.experimental.pallas import tpu as pltpu

LANE = 128


def _ceil_to(x, m):
    return (x + m - 1) // m * m


def _pad_last(x, size):
    c = x.shape[-1]
    if c == size:
        return x
    return jnp.pad(x, [(0, 0)] * (x.ndim - 1) + [(0, size - c)])


# ----------------------------- Pallas kernel -------------------------------

def _make_conv_kernel(K, s, H_out, W_out, has_res, has_lin):
    M = H_out * W_out

    def kernel(*refs):
        if has_res and has_lin:
            (x_ref, w_ref, scale_ref, shift_ref, alpha_ref,
             res_ref, wlin_ref, blin_ref, o_ref, acc_ref) = refs
        elif has_res:
            (x_ref, w_ref, scale_ref, shift_ref, alpha_ref,
             res_ref, o_ref, acc_ref) = refs
        else:
            (x_ref, w_ref, scale_ref, shift_ref, alpha_ref,
             o_ref, acc_ref) = refs

        # Unrolled K*K tap loop: conv = sum of shifted [M, Cin] x [Cin, ct] matmuls,
        # accumulated in an f32 VMEM scratch.  Patch formation happens in-kernel from
        # the VMEM-resident phase-decomposed image (no im2col blow-up in HBM).
        acc_ref[...] = jnp.zeros_like(acc_ref)
        for kh in range(K):
            for kw in range(K):
                p = (kh % s) * s + (kw % s)          # phase plane
                dh, dw = kh // s, kw // s            # offset within the phase grid
                tap = x_ref[0, p, dh:dh + H_out, dw:dw + W_out, :]
                tap = tap.reshape(M, tap.shape[-1])
                acc_ref[...] += jnp.dot(tap, w_ref[kh * K + kw],
                                        preferred_element_type=jnp.float32)

        y = acc_ref[...] * scale_ref[...] + shift_ref[...]   # conv-bias + BN folded
        a = alpha_ref[0]                                     # PReLU slope from SMEM
        y = jnp.where(y >= 0.0, y, a * y)
        if has_res:
            r = res_ref[0]
            if has_lin:                                      # fused 1x1 shortcut Linear
                r = jnp.dot(r, wlin_ref[...],
                            preferred_element_type=jnp.float32) + blin_ref[...]
            y = y + r
        o_ref[0] = y.astype(o_ref.dtype)

    return kernel


# --------------------------- fused conv wrapper -----------------------------

def _conv_bn_prelu_pallas(x_nhwc, W, b, bn, alpha, K, stride, cout_pad,
                          residual=None, wlin=None, blin=None):
    """Fused Conv2d(K, stride, pad=K//2) + eval-BN + PReLU (+ residual / +linear).

    x_nhwc:   [N, H, W, Cp]   channel dim already zero-padded to a lane multiple.
    residual: optional [N, H_out, W_out, Crp] added after PReLU (through the 1x1
              Linear first when wlin/blin are given).
    Returns   [N, H_out, W_out, cout_pad] float32 (padded channels are zero).
    """
    N, H, Wd, Cp = x_nhwc.shape
    Cout, Cin, _, _ = W.shape
    s, pad = stride, K // 2
    H_out = (H + 2 * pad - K) // s + 1
    W_out = (Wd + 2 * pad - K) // s + 1
    M = H_out * W_out

    # phase-decomposed, spatially padded input: [N, s*s, Hq, Wq, Cp]
    Hq = -(-(H + 2 * pad) // s)
    Wq = -(-(Wd + 2 * pad) // s)
    xq = jnp.pad(x_nhwc, ((0, 0),
                          (pad, s * Hq - H - pad),
                          (pad, s * Wq - Wd - pad),
                          (0, 0)))
    xph = (xq.reshape(N, Hq, s, Wq, s, Cp)
             .transpose(0, 2, 4, 1, 3, 5)
             .reshape(N, s * s, Hq, Wq, Cp))

    # weights [K*K, Cp, cout_pad]; BN folded into per-channel scale/shift
    wk = jnp.transpose(W, (2, 3, 1, 0)).reshape(K * K, Cin, Cout).astype(jnp.float32)
    wk = jnp.pad(wk, ((0, 0), (0, Cp - Cin), (0, cout_pad - Cout)))
    eps = 1e-5
    scale = (bn["gamma"] / jnp.sqrt(bn["var"] + eps)).astype(jnp.float32)
    shift = ((b - bn["mean"]) * scale + bn["beta"]).astype(jnp.float32)
    scale = jnp.pad(scale, (0, cout_pad - Cout)).reshape(1, cout_pad)
    shift = jnp.pad(shift, (0, cout_pad - Cout)).reshape(1, cout_pad)
    a_arr = jnp.asarray(alpha, jnp.float32).reshape(1)

    has_res = residual is not None
    has_lin = wlin is not None
    crp = residual.shape[-1] if has_res else 0
    if has_res:
        residual = residual.reshape(N, M, crp).astype(jnp.float32)

    # lane-dense output-channel tile (one MXU-wide slab per grid step)
    ct = 256 if cout_pad % 256 == 0 else 128
    ct = min(ct, cout_pad)
    n_ct = cout_pad // ct
    grid = (N, n_ct)

    kernel = _make_conv_kernel(K, s, H_out, W_out, has_res, has_lin)

    in_specs = [
        pl.BlockSpec((1, s * s, Hq, Wq, Cp), lambda n, j: (n, 0, 0, 0, 0)),
        pl.BlockSpec((K * K, Cp, ct), lambda n, j: (0, 0, j)),
        pl.BlockSpec((1, ct), lambda n, j: (0, j)),
        pl.BlockSpec((1, ct), lambda n, j: (0, j)),
        pl.BlockSpec(memory_space=pltpu.MemorySpace.SMEM),   # PReLU slope scalar
    ]
    args = [xph, wk, scale, shift, a_arr]
    if has_res:
        in_specs.append(pl.BlockSpec((1, M, crp), lambda n, j: (n, 0, 0)))
        args.append(residual)
        if has_lin:
            in_specs.append(pl.BlockSpec((crp, ct), lambda n, j: (0, j)))
            in_specs.append(pl.BlockSpec((1, ct), lambda n, j: (0, j)))
            args += [wlin, blin]

    out_specs = pl.BlockSpec((1, M, ct), lambda n, j: (n, 0, j))
    out_shape = jax.ShapeDtypeStruct((N, M, cout_pad), jnp.float32)

    # compiler hints: explicit VMEM budget (v7x-safe cap) + cost estimate
    blk_bytes = 4 * (s * s * Hq * Wq * Cp + K * K * Cp * ct + 2 * ct + M * ct
                     + (M * crp if has_res else 0)
                     + (crp * ct + ct if has_lin else 0))
    vmem_limit = int(min(max(3 * blk_bytes + (1 << 20), 32 << 20), 64 << 20))
    flops = 2 * N * K * K * M * Cp * cout_pad
    if has_lin:
        flops += 2 * N * M * crp * cout_pad
    bytes_accessed = 4 * (xph.size + wk.size + 2 * cout_pad + N * M * cout_pad
                          + (N * M * crp if has_res else 0)
                          + (crp * cout_pad + cout_pad if has_lin else 0))

    out = pl.pallas_call(
        kernel,
        out_shape=out_shape,
        grid=grid,
        in_specs=in_specs,
        out_specs=out_specs,
        scratch_shapes=[pltpu.VMEM((M, ct), jnp.float32)],
        compiler_params=pltpu.CompilerParams(
            dimension_semantics=("parallel", "parallel"),
            vmem_limit_bytes=vmem_limit),
        cost_estimate=pl.CostEstimate(flops=flops, transcendentals=0,
                                      bytes_accessed=bytes_accessed),
    )(*args)
    return out.reshape(N, H_out, W_out, cout_pad)


# ------------------------------- forward ------------------------------------

def resnet_block_forward(x_nchw, params, kernel_size, stride):
    K = kernel_size
    x = jnp.transpose(x_nchw, (0, 2, 3, 1)).astype(jnp.float32)   # NCHW -> NHWC
    N, H, Wd, Cin = x.shape
    Cout = params["W1"].shape[0]
    cin_p = max(LANE, _ceil_to(Cin, LANE))
    cout_p = max(LANE, _ceil_to(Cout, LANE))

    # cnn_1: Conv(stride) + BN + PReLU  (fused)
    z1 = _conv_bn_prelu_pallas(_pad_last(x, cin_p), params["W1"], params["b1"],
                               params["bn1"], params["a1"], K, stride, cout_p)

    # shortcut: subsample BEFORE the (optional) 1x1 Linear -- identical result at
    # 1/stride^2 of the work; the Linear itself is fused into the cnn_2 kernel.
    x_sub = x[:, ::stride, ::stride, :]
    if params.get("Wlin") is not None:
        res = _pad_last(x_sub, cin_p)
        wlin = jnp.transpose(params["Wlin"]).astype(jnp.float32)       # (Cin, Cout)
        wlin = jnp.pad(wlin, ((0, cin_p - Cin), (0, cout_p - Cout)))
        blin = jnp.pad(params["blin"].astype(jnp.float32),
                       (0, cout_p - Cout)).reshape(1, cout_p)
    else:
        res = _pad_last(x_sub, cout_p)
        wlin = blin = None

    # cnn_2: Conv(1) + BN + PReLU + (Linear-)residual add, all fused
    z2 = _conv_bn_prelu_pallas(z1, params["W2"], params["b2"], params["bn2"],
                               params["a2"], K, 1, cout_p,
                               residual=res, wlin=wlin, blin=blin)

    return jnp.transpose(z2[..., :Cout], (0, 3, 1, 2))    # NHWC -> NCHW


# --------------------------- parameter creation -----------------------------

def init_params(key, in_channels, out_channels, kernel_size):
    ks = jax.random.split(key, 6)

    def conv_init(k, cin, cout):
        k1, k2 = jax.random.split(k)
        bound = 1.0 / float(jnp.sqrt(cin * kernel_size * kernel_size))
        W = jax.random.uniform(k1, (cout, cin, kernel_size, kernel_size),
                               jnp.float32, -bound, bound)
        b = jax.random.uniform(k2, (cout,), jnp.float32, -bound, bound)
        return W, b

    def bn_default(c):
        return dict(gamma=jnp.ones((c,), jnp.float32),
                    beta=jnp.zeros((c,), jnp.float32),
                    mean=jnp.zeros((c,), jnp.float32),
                    var=jnp.ones((c,), jnp.float32))

    W1, b1 = conv_init(ks[0], in_channels, out_channels)
    W2, b2 = conv_init(ks[1], out_channels, out_channels)

    params = dict(W1=W1, b1=b1, bn1=bn_default(out_channels), a1=0.25,
                  W2=W2, b2=b2, bn2=bn_default(out_channels), a2=0.25,
                  Wlin=None, blin=None)

    if in_channels != out_channels:
        bound = 1.0 / float(jnp.sqrt(in_channels))
        params["Wlin"] = jax.random.uniform(ks[2], (out_channels, in_channels),
                                            jnp.float32, -bound, bound)
        params["blin"] = jax.random.uniform(ks[3], (out_channels,),
                                            jnp.float32, -bound, bound)
    return params


# ------------------------------ reference ----------------------------------

def ref_forward(x_nchw, params, kernel_size, stride):
    pad = kernel_size // 2
    x = jnp.transpose(x_nchw, (0, 2, 3, 1)).astype(jnp.float32)

    def block(xin, W, b, bn, a, s):
        wt = jnp.transpose(W, (2, 3, 1, 0))
        y = lax.conv_general_dilated(xin, wt, (s, s),
                                     ((pad, pad), (pad, pad)),
                                     dimension_numbers=("NHWC", "HWIO", "NHWC"))
        y = y + b
        y = (y - bn["mean"]) / jnp.sqrt(bn["var"] + 1e-5) * bn["gamma"] + bn["beta"]
        return jnp.where(y >= 0, y, a * y)

    z = block(x, params["W1"], params["b1"], params["bn1"], params["a1"], stride)
    z = block(z, params["W2"], params["b2"], params["bn2"], params["a2"], 1)
    sc = x
    if params.get("Wlin") is not None:
        sc = jnp.einsum("nhwc,oc->nhwo", x, params["Wlin"]) + params["blin"]
    if stride > 1:
        sc = sc[:, ::stride, ::stride, :]
    return jnp.transpose(z + sc, (0, 3, 1, 2))


# --------------------------------- main -------------------------------------

if __name__ == "__main__":
    key = jax.random.PRNGKey(0)
    k_x, k_p = jax.random.split(key)

    in_channels, out_channels = 4, 8
    kernel_size, stride = 3, 2
    N, H, W = 2, 16, 16

    x = jax.random.normal(k_x, (N, in_channels, H, W), jnp.float32)   # NCHW
    params = init_params(k_p, in_channels, out_channels, kernel_size)

    fwd = jax.jit(resnet_block_forward, static_argnums=(2, 3))
    out = jax.block_until_ready(fwd(x, params, kernel_size, stride))

    ref = jax.block_until_ready(ref_forward(x, params, kernel_size, stride))

    assert out.shape == (N, out_channels, H // stride, W // stride), out.shape
    err = float(jnp.max(jnp.abs(out - ref)))
    assert jnp.allclose(out, ref, atol=1e-4, rtol=1e-4), err

    print("KERNEL_OK")
</pallas_src>

<mosaic_0001>
module attributes {stable_mosaic.version = 11 : i64} {
  func.func @kernel(%arg0: i32, %arg1: i32, %arg2: memref<1x4x9x9x128xf32, #tpu.memory_space<vmem>>, %arg3: memref<9x128x128xf32, #tpu.memory_space<vmem>>, %arg4: memref<1x128xf32, #tpu.memory_space<vmem>>, %arg5: memref<1x128xf32, #tpu.memory_space<vmem>>, %arg6: memref<1xf32, #tpu.memory_space<smem>>, %arg7: memref<1x64x128xf32, #tpu.memory_space<vmem>>, %arg8: memref<64x128xf32, #tpu.memory_space<vmem>>) attributes {dimension_semantics = [#tpu.dimension_semantics<parallel>, #tpu.dimension_semantics<parallel>], iteration_bounds = array<i64: 2, 1>, scalar_prefetch = 0 : i64, scratch_operands = 1 : i64, tpu.core_type = #tpu.core_type<tc>, window_params = [{transform_indices = @transform_0, window_bounds = array<i64: 1, 4, 9, 9, 128>}, {transform_indices = @transform_1, window_bounds = array<i64: 9, 128, 128>}, {transform_indices = @transform_2, window_bounds = array<i64: 1, 128>}, {transform_indices = @transform_3, window_bounds = array<i64: 1, 128>}, {transform_indices = @transform_4, window_bounds = array<i64: 1>}, {transform_indices = @transform_5, window_bounds = array<i64: 1, 64, 128>}]} {
    %cst = arith.constant 0.000000e+00 : f32
    %0 = vector.broadcast %cst : f32 to vector<64x128xf32>
    %c0 = arith.constant 0 : index
    %c0_0 = arith.constant 0 : index
    %1 = vector.load %arg8[%c0, %c0_0] : memref<64x128xf32, #tpu.memory_space<vmem>>, vector<64x128xf32>
    tpu.vector_store %arg8[%c0, %c0_0], %0 {strides = array<i32>} : memref<64x128xf32, #tpu.memory_space<vmem>>, vector<64x128xf32>,
    %c0_1 = arith.constant 0 : index
    %c0_2 = arith.constant 0 : index
    %c0_3 = arith.constant 0 : index
    %c0_4 = arith.constant 0 : index
    %c0_5 = arith.constant 0 : index
    %2 = vector.load %arg2[%c0_1, %c0_2, %c0_3, %c0_4, %c0_5] : memref<1x4x9x9x128xf32, #tpu.memory_space<vmem>>, vector<1x1x8x8x128xf32>
    %3 = vector.shape_cast %2 : vector<1x1x8x8x128xf32> to vector<8x8x128xf32>
    %4 = vector.shape_cast %3 : vector<8x8x128xf32> to vector<64x128xf32>
    %c0_6 = arith.constant 0 : index
    %c0_7 = arith.constant 0 : index
    %5 = vector.load %arg8[%c0_6, %c0_7] : memref<64x128xf32, #tpu.memory_space<vmem>>, vector<64x128xf32>
    %c0_8 = arith.constant 0 : index
    %c0_9 = arith.constant 0 : index
    %c0_10 = arith.constant 0 : index
    %6 = vector.load %arg3[%c0_8, %c0_9, %c0_10] : memref<9x128x128xf32, #tpu.memory_space<vmem>>, vector<1x128x128xf32>
    %7 = vector.shape_cast %6 : vector<1x128x128xf32> to vector<128x128xf32>
    %cst_11 = arith.constant dense<0.000000e+00> : vector<64x128xf32>
    %8 = tpu.matmul %4, %7, %cst_11 {dimension_numbers = #tpu.dot_dimension_numbers<[1], [0], [0], [1], [0, 0, 1, 1], [], []>} : vector<64x128xf32>, vector<128x128xf32>, vector<64x128xf32> -> vector<64x128xf32>
    %9 = arith.addf %5, %8 : vector<64x128xf32>
    %c0_12 = arith.constant 0 : index
    %c0_13 = arith.constant 0 : index
    %10 = vector.load %arg8[%c0_12, %c0_13] : memref<64x128xf32, #tpu.memory_space<vmem>>, vector<64x128xf32>
    tpu.vector_store %arg8[%c0_12, %c0_13], %9 {strides = array<i32>} : memref<64x128xf32, #tpu.memory_space<vmem>>, vector<64x128xf32>,
    %c0_14 = arith.constant 0 : index
    %c1 = arith.constant 1 : index
    %c0_15 = arith.constant 0 : index
    %c0_16 = arith.constant 0 : index
    %c0_17 = arith.constant 0 : index
    %11 = vector.load %arg2[%c0_14, %c1, %c0_15, %c0_16, %c0_17] : memref<1x4x9x9x128xf32, #tpu.memory_space<vmem>>, vector<1x1x8x8x128xf32>
    %12 = vector.shape_cast %11 : vector<1x1x8x8x128xf32> to vector<8x8x128xf32>
    %13 = vector.shape_cast %12 : vector<8x8x128xf32> to vector<64x128xf32>
    %c0_18 = arith.constant 0 : index
    %c0_19 = arith.constant 0 : index
    %14 = vector.load %arg8[%c0_18, %c0_19] : memref<64x128xf32, #tpu.memory_space<vmem>>, vector<64x128xf32>
    %c1_20 = arith.constant 1 : index
    %c0_21 = arith.constant 0 : index
    %c0_22 = arith.constant 0 : index
    %15 = vector.load %arg3[%c1_20, %c0_21, %c0_22] : memref<9x128x128xf32, #tpu.memory_space<vmem>>, vector<1x128x128xf32>
    %16 = vector.shape_cast %15 : vector<1x128x128xf32> to vector<128x128xf32>
    %cst_23 = arith.constant dense<0.000000e+00> : vector<64x128xf32>
    %17 = tpu.matmul %13, %16, %cst_23 {dimension_numbers = #tpu.dot_dimension_numbers<[1], [0], [0], [1], [0, 0, 1, 1], [], []>} : vector<64x128xf32>, vector<128x128xf32>, vector<64x128xf32> -> vector<64x128xf32>
    %18 = arith.addf %14, %17 : vector<64x128xf32>
    %c0_24 = arith.constant 0 : index
    %c0_25 = arith.constant 0 : index
    %19 = vector.load %arg8[%c0_24, %c0_25] : memref<64x128xf32, #tpu.memory_space<vmem>>, vector<64x128xf32>
    tpu.vector_store %arg8[%c0_24, %c0_25], %18 {strides = array<i32>} : memref<64x128xf32, #tpu.memory_space<vmem>>, vector<64x128xf32>,
    %c0_26 = arith.constant 0 : index
    %c0_27 = arith.constant 0 : index
    %c0_28 = arith.constant 0 : index
    %c1_29 = arith.constant 1 : index
    %c0_30 = arith.constant 0 : index
    %20 = vector.load %arg2[%c0_26, %c0_27, %c0_28, %c1_29, %c0_30] : memref<1x4x9x9x128xf32, #tpu.memory_space<vmem>>, vector<1x1x8x8x128xf32>
    %21 = vector.shape_cast %20 : vector<1x1x8x8x128xf32> to vector<8x8x128xf32>
    %22 = vector.shape_cast %21 : vector<8x8x128xf32> to vector<64x128xf32>
    %c0_31 = arith.constant 0 : index
    %c0_32 = arith.constant 0 : index
    %23 = vector.load %arg8[%c0_31, %c0_32] : memref<64x128xf32, #tpu.memory_space<vmem>>, vector<64x128xf32>
    %c2 = arith.constant 2 : index
    %c0_33 = arith.constant 0 : index
    %c0_34 = arith.constant 0 : index
    %24 = vector.load %arg3[%c2, %c0_33, %c0_34] : memref<9x128x128xf32, #tpu.memory_space<vmem>>, vector<1x128x128xf32>
    %25 = vector.shape_cast %24 : vector<1x128x128xf32> to vector<128x128xf32>
    %cst_35 = arith.constant dense<0.000000e+00> : vector<64x128xf32>
    %26 = tpu.matmul %22, %25, %cst_35 {dimension_numbers = #tpu.dot_dimension_numbers<[1], [0], [0], [1], [0, 0, 1, 1], [], []>} : vector<64x128xf32>, vector<128x128xf32>, vector<64x128xf32> -> vector<64x128xf32>
    %27 = arith.addf %23, %26 : vector<64x128xf32>
    %c0_36 = arith.constant 0 : index
    %c0_37 = arith.constant 0 : index
    %28 = vector.load %arg8[%c0_36, %c0_37] : memref<64x128xf32, #tpu.memory_space<vmem>>, vector<64x128xf32>
    tpu.vector_store %arg8[%c0_36, %c0_37], %27 {strides = array<i32>} : memref<64x128xf32, #tpu.memory_space<vmem>>, vector<64x128xf32>,
    %c0_38 = arith.constant 0 : index
    %c2_39 = arith.constant 2 : index
    %c0_40 = arith.constant 0 : index
    %c0_41 = arith.constant 0 : index
    %c0_42 = arith.constant 0 : index
    %29 = vector.load %arg2[%c0_38, %c2_39, %c0_40, %c0_41, %c0_42] : memref<1x4x9x9x128xf32, #tpu.memory_space<vmem>>, vector<1x1x8x8x128xf32>
    %30 = vector.shape_cast %29 : vector<1x1x8x8x128xf32> to vector<8x8x128xf32>
    %31 = vector.shape_cast %30 : vector<8x8x128xf32> to vector<64x128xf32>
    %c0_43 = arith.constant 0 : index
    %c0_44 = arith.constant 0 : index
    %32 = vector.load %arg8[%c0_43, %c0_44] : memref<64x128xf32, #tpu.memory_space<vmem>>, vector<64x128xf32>
    %c3 = arith.constant 3 : index
    %c0_45 = arith.constant 0 : index
    %c0_46 = arith.constant 0 : index
    %33 = vector.load %arg3[%c3, %c0_45, %c0_46] : memref<9x128x128xf32, #tpu.memory_space<vmem>>, vector<1x128x128xf32>
    %34 = vector.shape_cast %33 : vector<1x128x128xf32> to vector<128x128xf32>
    %cst_47 = arith.constant dense<0.000000e+00> : vector<64x128xf32>
    %35 = tpu.matmul %31, %34, %cst_47 {dimension_numbers = #tpu.dot_dimension_numbers<[1], [0], [0], [1], [0, 0, 1, 1], [], []>} : vector<64x128xf32>, vector<128x128xf32>, vector<64x128xf32> -> vector<64x128xf32>
    %36 = arith.addf %32, %35 : vector<64x128xf32>
    %c0_48 = arith.constant 0 : index
    %c0_49 = arith.constant 0 : index
    %37 = vector.load %arg8[%c0_48, %c0_49] : memref<64x128xf32, #tpu.memory_space<vmem>>, vector<64x128xf32>
    tpu.vector_store %arg8[%c0_48, %c0_49], %36 {strides = array<i32>} : memref<64x128xf32, #tpu.memory_space<vmem>>, vector<64x128xf32>,
    %c0_50 = arith.constant 0 : index
    %c3_51 = arith.constant 3 : index
    %c0_52 = arith.constant 0 : index
    %c0_53 = arith.constant 0 : index
    %c0_54 = arith.constant 0 : index
    %38 = vector.load %arg2[%c0_50, %c3_51, %c0_52, %c0_53, %c0_54] : memref<1x4x9x9x128xf32, #tpu.memory_space<vmem>>, vector<1x1x8x8x128xf32>
    %39 = vector.shape_cast %38 : vector<1x1x8x8x128xf32> to vector<8x8x128xf32>
    %40 = vector.shape_cast %39 : vector<8x8x128xf32> to vector<64x128xf32>
    %c0_55 = arith.constant 0 : index
    %c0_56 = arith.constant 0 : index
    %41 = vector.load %arg8[%c0_55, %c0_56] : memref<64x128xf32, #tpu.memory_space<vmem>>, vector<64x128xf32>
    %c4 = arith.constant 4 : index
    %c0_57 = arith.constant 0 : index
    %c0_58 = arith.constant 0 : index
    %42 = vector.load %arg3[%c4, %c0_57, %c0_58] : memref<9x128x128xf32, #tpu.memory_space<vmem>>, vector<1x128x128xf32>
    %43 = vector.shape_cast %42 : vector<1x128x128xf32> to vector<128x128xf32>
    %cst_59 = arith.constant dense<0.000000e+00> : vector<64x128xf32>
    %44 = tpu.matmul %40, %43, %cst_59 {dimension_numbers = #tpu.dot_dimension_numbers<[1], [0], [0], [1], [0, 0, 1, 1], [], []>} : vector<64x128xf32>, vector<128x128xf32>, vector<64x128xf32> -> vector<64x128xf32>
    %45 = arith.addf %41, %44 : vector<64x128xf32>
    %c0_60 = arith.constant 0 : index
    %c0_61 = arith.constant 0 : index
    %46 = vector.load %arg8[%c0_60, %c0_61] : memref<64x128xf32, #tpu.memory_space<vmem>>, vector<64x128xf32>
    tpu.vector_store %arg8[%c0_60, %c0_61], %45 {strides = array<i32>} : memref<64x128xf32, #tpu.memory_space<vmem>>, vector<64x128xf32>,
    %c0_62 = arith.constant 0 : index
    %c2_63 = arith.constant 2 : index
    %c0_64 = arith.constant 0 : index
    %c1_65 = arith.constant 1 : index
    %c0_66 = arith.constant 0 : index
    %47 = vector.load %arg2[%c0_62, %c2_63, %c0_64, %c1_65, %c0_66] : memref<1x4x9x9x128xf32, #tpu.memory_space<vmem>>, vector<1x1x8x8x128xf32>
    %48 = vector.shape_cast %47 : vector<1x1x8x8x128xf32> to vector<8x8x128xf32>
    %49 = vector.shape_cast %48 : vector<8x8x128xf32> to vector<64x128xf32>
    %c0_67 = arith.constant 0 : index
    %c0_68 = arith.constant 0 : index
    %50 = vector.load %arg8[%c0_67, %c0_68] : memref<64x128xf32, #tpu.memory_space<vmem>>, vector<64x128xf32>
    %c5 = arith.constant 5 : index
    %c0_69 = arith.constant 0 : index
    %c0_70 = arith.constant 0 : index
    %51 = vector.load %arg3[%c5, %c0_69, %c0_70] : memref<9x128x128xf32, #tpu.memory_space<vmem>>, vector<1x128x128xf32>
    %52 = vector.shape_cast %51 : vector<1x128x128xf32> to vector<128x128xf32>
    %cst_71 = arith.constant dense<0.000000e+00> : vector<64x128xf32>
    %53 = tpu.matmul %49, %52, %cst_71 {dimension_numbers = #tpu.dot_dimension_numbers<[1], [0], [0], [1], [0, 0, 1, 1], [], []>} : vector<64x128xf32>, vector<128x128xf32>, vector<64x128xf32> -> vector<64x128xf32>
    %54 = arith.addf %50, %53 : vector<64x128xf32>
    %c0_72 = arith.constant 0 : index
    %c0_73 = arith.constant 0 : index
    %55 = vector.load %arg8[%c0_72, %c0_73] : memref<64x128xf32, #tpu.memory_space<vmem>>, vector<64x128xf32>
    tpu.vector_store %arg8[%c0_72, %c0_73], %54 {strides = array<i32>} : memref<64x128xf32, #tpu.memory_space<vmem>>, vector<64x128xf32>,
    %c0_74 = arith.constant 0 : index
    %c0_75 = arith.constant 0 : index
    %c1_76 = arith.constant 1 : index
    %c0_77 = arith.constant 0 : index
    %c0_78 = arith.constant 0 : index
    %56 = vector.load %arg2[%c0_74, %c0_75, %c1_76, %c0_77, %c0_78] : memref<1x4x9x9x128xf32, #tpu.memory_space<vmem>>, vector<1x1x8x8x128xf32>
    %57 = vector.shape_cast %56 : vector<1x1x8x8x128xf32> to vector<8x8x128xf32>
    %58 = vector.shape_cast %57 : vector<8x8x128xf32> to vector<64x128xf32>
    %c0_79 = arith.constant 0 : index
    %c0_80 = arith.constant 0 : index
    %59 = vector.load %arg8[%c0_79, %c0_80] : memref<64x128xf32, #tpu.memory_space<vmem>>, vector<64x128xf32>
    %c6 = arith.constant 6 : index
    %c0_81 = arith.constant 0 : index
    %c0_82 = arith.constant 0 : index
    %60 = vector.load %arg3[%c6, %c0_81, %c0_82] : memref<9x128x128xf32, #tpu.memory_space<vmem>>, vector<1x128x128xf32>
    %61 = vector.shape_cast %60 : vector<1x128x128xf32> to vector<128x128xf32>
    %cst_83 = arith.constant dense<0.000000e+00> : vector<64x128xf32>
    %62 = tpu.matmul %58, %61, %cst_83 {dimension_numbers = #tpu.dot_dimension_numbers<[1], [0], [0], [1], [0, 0, 1, 1], [], []>} : vector<64x128xf32>, vector<128x128xf32>, vector<64x128xf32> -> vector<64x128xf32>
    %63 = arith.addf %59, %62 : vector<64x128xf32>
    %c0_84 = arith.constant 0 : index
    %c0_85 = arith.constant 0 : index
    %64 = vector.load %arg8[%c0_84, %c0_85] : memref<64x128xf32, #tpu.memory_space<vmem>>, vector<64x128xf32>
    tpu.vector_store %arg8[%c0_84, %c0_85], %63 {strides = array<i32>} : memref<64x128xf32, #tpu.memory_space<vmem>>, vector<64x128xf32>,
    %c0_86 = arith.constant 0 : index
    %c1_87 = arith.constant 1 : index
    %c1_88 = arith.constant 1 : index
    %c0_89 = arith.constant 0 : index
    %c0_90 = arith.constant 0 : index
    %65 = vector.load %arg2[%c0_86, %c1_87, %c1_88, %c0_89, %c0_90] : memref<1x4x9x9x128xf32, #tpu.memory_space<vmem>>, vector<1x1x8x8x128xf32>
    %66 = vector.shape_cast %65 : vector<1x1x8x8x128xf32> to vector<8x8x128xf32>
    %67 = vector.shape_cast %66 : vector<8x8x128xf32> to vector<64x128xf32>
    %c0_91 = arith.constant 0 : index
    %c0_92 = arith.constant 0 : index
    %68 = vector.load %arg8[%c0_91, %c0_92] : memref<64x128xf32, #tpu.memory_space<vmem>>, vector<64x128xf32>
    %c7 = arith.constant 7 : index
    %c0_93 = arith.constant 0 : index
    %c0_94 = arith.constant 0 : index
    %69 = vector.load %arg3[%c7, %c0_93, %c0_94] : memref<9x128x128xf32, #tpu.memory_space<vmem>>, vector<1x128x128xf32>
    %70 = vector.shape_cast %69 : vector<1x128x128xf32> to vector<128x128xf32>
    %cst_95 = arith.constant dense<0.000000e+00> : vector<64x128xf32>
    %71 = tpu.matmul %67, %70, %cst_95 {dimension_numbers = #tpu.dot_dimension_numbers<[1], [0], [0], [1], [0, 0, 1, 1], [], []>} : vector<64x128xf32>, vector<128x128xf32>, vector<64x128xf32> -> vector<64x128xf32>
    %72 = arith.addf %68, %71 : vector<64x128xf32>
    %c0_96 = arith.constant 0 : index
    %c0_97 = arith.constant 0 : index
    %73 = vector.load %arg8[%c0_96, %c0_97] : memref<64x128xf32, #tpu.memory_space<vmem>>, vector<64x128xf32>
    tpu.vector_store %arg8[%c0_96, %c0_97], %72 {strides = array<i32>} : memref<64x128xf32, #tpu.memory_space<vmem>>, vector<64x128xf32>,
    %c0_98 = arith.constant 0 : index
    %c0_99 = arith.constant 0 : index
    %c1_100 = arith.constant 1 : index
    %c1_101 = arith.constant 1 : index
    %c0_102 = arith.constant 0 : index
    %74 = vector.load %arg2[%c0_98, %c0_99, %c1_100, %c1_101, %c0_102] : memref<1x4x9x9x128xf32, #tpu.memory_space<vmem>>, vector<1x1x8x8x128xf32>
    %75 = vector.shape_cast %74 : vector<1x1x8x8x128xf32> to vector<8x8x128xf32>
    %76 = vector.shape_cast %75 : vector<8x8x128xf32> to vector<64x128xf32>
    %c0_103 = arith.constant 0 : index
    %c0_104 = arith.constant 0 : index
    %77 = vector.load %arg8[%c0_103, %c0_104] : memref<64x128xf32, #tpu.memory_space<vmem>>, vector<64x128xf32>
    %c8 = arith.constant 8 : index
    %c0_105 = arith.constant 0 : index
    %c0_106 = arith.constant 0 : index
    %78 = vector.load %arg3[%c8, %c0_105, %c0_106] : memref<9x128x128xf32, #tpu.memory_space<vmem>>, vector<1x128x128xf32>
    %79 = vector.shape_cast %78 : vector<1x128x128xf32> to vector<128x128xf32>
    %cst_107 = arith.constant dense<0.000000e+00> : vector<64x128xf32>
    %80 = tpu.matmul %76, %79, %cst_107 {dimension_numbers = #tpu.dot_dimension_numbers<[1], [0], [0], [1], [0, 0, 1, 1], [], []>} : vector<64x128xf32>, vector<128x128xf32>, vector<64x128xf32> -> vector<64x128xf32>
    %81 = arith.addf %77, %80 : vector<64x128xf32>
    %c0_108 = arith.constant 0 : index
    %c0_109 = arith.constant 0 : index
    %82 = vector.load %arg8[%c0_108, %c0_109] : memref<64x128xf32, #tpu.memory_space<vmem>>, vector<64x128xf32>
    tpu.vector_store %arg8[%c0_108, %c0_109], %81 {strides = array<i32>} : memref<64x128xf32, #tpu.memory_space<vmem>>, vector<64x128xf32>,
    %c0_110 = arith.constant 0 : index
    %c0_111 = arith.constant 0 : index
    %83 = vector.load %arg8[%c0_110, %c0_111] : memref<64x128xf32, #tpu.memory_space<vmem>>, vector<64x128xf32>
    %c0_112 = arith.constant 0 : index
    %c0_113 = arith.constant 0 : index
    %84 = vector.load %arg4[%c0_112, %c0_113] : memref<1x128xf32, #tpu.memory_space<vmem>>, vector<1x128xf32>
    %85 = vector.broadcast %84 : vector<1x128xf32> to vector<64x128xf32>
    %86 = arith.mulf %83, %85 : vector<64x128xf32>
    %c0_114 = arith.constant 0 : index
    %c0_115 = arith.constant 0 : index
    %87 = vector.load %arg5[%c0_114, %c0_115] : memref<1x128xf32, #tpu.memory_space<vmem>>, vector<1x128xf32>
    %88 = vector.broadcast %87 : vector<1x128xf32> to vector<64x128xf32>
    %89 = arith.addf %86, %88 : vector<64x128xf32>
    %c0_116 = arith.constant 0 : index
    %90 = memref.load %arg6[%c0_116] : memref<1xf32, #tpu.memory_space<smem>>
    %cst_117 = arith.constant 0.000000e+00 : f32
    %91 = vector.broadcast %cst_117 : f32 to vector<64x128xf32>
    %92 = arith.cmpf oge, %89, %91 : vector<64x128xf32>
    %93 = vector.broadcast %90 : f32 to vector<64x128xf32>
    %94 = arith.mulf %93, %89 : vector<64x128xf32>
    %95 = arith.select %92, %89, %94 : vector<64x128xi1>, vector<64x128xf32>
    %c0_118 = arith.constant 0 : index
    %c0_119 = arith.constant 0 : index
    %c0_120 = arith.constant 0 : index
    %96 = vector.load %arg7[%c0_118, %c0_119, %c0_120] : memref<1x64x128xf32, #tpu.memory_space<vmem>>, vector<1x64x128xf32>
    %97 = vector.shape_cast %96 : vector<1x64x128xf32> to vector<64x128xf32>
    %98 = vector.shape_cast %95 : vector<64x128xf32> to vector<1x64x128xf32>
    tpu.vector_store %arg7[%c0_118, %c0_119, %c0_120], %98 {strides = array<i32>} : memref<1x64x128xf32, #tpu.memory_space<vmem>>, vector<1x64x128xf32>,
    return
  }
  func.func @transform_0(%arg0: i32, %arg1: i32) -> (i32, i32, i32, i32, i32) {
    %c0_i32 = arith.constant 0 : i32
    %c0_i32_0 = arith.constant 0 : i32
    %c0_i32_1 = arith.constant 0 : i32
    %c0_i32_2 = arith.constant 0 : i32
    %c0_i32_3 = arith.constant 0 : i32
    return %arg0, %c0_i32, %c0_i32_0, %c0_i32_1, %c0_i32_2 : i32, i32, i32, i32, i32
  }
  func.func @transform_1(%arg0: i32, %arg1: i32) -> (i32, i32, i32) {
    %c0_i32 = arith.constant 0 : i32
    %c0_i32_0 = arith.constant 0 : i32
    %c0_i32_1 = arith.constant 0 : i32
    return %c0_i32, %c0_i32_0, %arg1 : i32, i32, i32
  }
  func.func @transform_2(%arg0: i32, %arg1: i32) -> (i32, i32) {
    %c0_i32 = arith.constant 0 : i32
    %c0_i32_0 = arith.constant 0 : i32
    return %c0_i32, %arg1 : i32, i32
  }
  func.func @transform_3(%arg0: i32, %arg1: i32) -> (i32, i32) {
    %c0_i32 = arith.constant 0 : i32
    %c0_i32_0 = arith.constant 0 : i32
    return %c0_i32, %arg1 : i32, i32
  }
  func.func @transform_4(%arg0: i32, %arg1: i32) -> i32 {
    %c0_i32 = arith.constant 0 : i32
    %c0_i32_0 = arith.constant 0 : i32
    return %c0_i32 : i32
  }
  func.func @transform_5(%arg0: i32, %arg1: i32) -> (i32, i32, i32) {
    %c0_i32 = arith.constant 0 : i32
    %c0_i32_0 = arith.constant 0 : i32
    return %arg0, %c0_i32, %arg1 : i32, i32, i32
  }
}

module attributes {stable_mosaic.version = 11 : i64} {
  func.func @kernel(%arg0: i32, %arg1: i32, %arg2: memref<1x1x10x10x128xf32, #tpu.memory_space<vmem>>, %arg3: memref<9x128x128xf32, #tpu.memory_space<vmem>>, %arg4: memref<1x128xf32, #tpu.memory_space<vmem>>, %arg5: memref<1x128xf32, #tpu.memory_space<vmem>>, %arg6: memref<1xf32, #tpu.memory_space<smem>>, %arg7: memref<1x64x128xf32, #tpu.memory_space<vmem>>, %arg8: memref<128x128xf32, #tpu.memory_space<vmem>>, %arg9: memref<1x128xf32, #tpu.memory_space<vmem>>, %arg10: memref<1x64x128xf32, #tpu.memory_space<vmem>>, %arg11: memref<64x128xf32, #tpu.memory_space<vmem>>) attributes {dimension_semantics = [#tpu.dimension_semantics<parallel>, #tpu.dimension_semantics<parallel>], iteration_bounds = array<i64: 2, 1>, scalar_prefetch = 0 : i64, scratch_operands = 1 : i64, tpu.core_type = #tpu.core_type<tc>, window_params = [{transform_indices = @transform_0, window_bounds = array<i64: 1, 1, 10, 10, 128>}, {transform_indices = @transform_1, window_bounds = array<i64: 9, 128, 128>}, {transform_indices = @transform_2, window_bounds = array<i64: 1, 128>}, {transform_indices = @transform_3, window_bounds = array<i64: 1, 128>}, {transform_indices = @transform_4, window_bounds = array<i64: 1>}, {transform_indices = @transform_5, window_bounds = array<i64: 1, 64, 128>}, {transform_indices = @transform_6, window_bounds = array<i64: 128, 128>}, {transform_indices = @transform_7, window_bounds = array<i64: 1, 128>}, {transform_indices = @transform_8, window_bounds = array<i64: 1, 64, 128>}]} {
    %cst = arith.constant 0.000000e+00 : f32
    %0 = vector.broadcast %cst : f32 to vector<64x128xf32>
    %c0 = arith.constant 0 : index
    %c0_0 = arith.constant 0 : index
    %1 = vector.load %arg11[%c0, %c0_0] : memref<64x128xf32, #tpu.memory_space<vmem>>, vector<64x128xf32>
    tpu.vector_store %arg11[%c0, %c0_0], %0 {strides = array<i32>} : memref<64x128xf32, #tpu.memory_space<vmem>>, vector<64x128xf32>,
    %c0_1 = arith.constant 0 : index
    %c0_2 = arith.constant 0 : index
    %c0_3 = arith.constant 0 : index
    %c0_4 = arith.constant 0 : index
    %c0_5 = arith.constant 0 : index
    %2 = vector.load %arg2[%c0_1, %c0_2, %c0_3, %c0_4, %c0_5] : memref<1x1x10x10x128xf32, #tpu.memory_space<vmem>>, vector<1x1x8x8x128xf32>
    %3 = vector.shape_cast %2 : vector<1x1x8x8x128xf32> to vector<8x8x128xf32>
    %4 = vector.shape_cast %3 : vector<8x8x128xf32> to vector<64x128xf32>
    %c0_6 = arith.constant 0 : index
    %c0_7 = arith.constant 0 : index
    %5 = vector.load %arg11[%c0_6, %c0_7] : memref<64x128xf32, #tpu.memory_space<vmem>>, vector<64x128xf32>
    %c0_8 = arith.constant 0 : index
    %c0_9 = arith.constant 0 : index
    %c0_10 = arith.constant 0 : index
    %6 = vector.load %arg3[%c0_8, %c0_9, %c0_10] : memref<9x128x128xf32, #tpu.memory_space<vmem>>, vector<1x128x128xf32>
    %7 = vector.shape_cast %6 : vector<1x128x128xf32> to vector<128x128xf32>
    %cst_11 = arith.constant dense<0.000000e+00> : vector<64x128xf32>
    %8 = tpu.matmul %4, %7, %cst_11 {dimension_numbers = #tpu.dot_dimension_numbers<[1], [0], [0], [1], [0, 0, 1, 1], [], []>} : vector<64x128xf32>, vector<128x128xf32>, vector<64x128xf32> -> vector<64x128xf32>
    %9 = arith.addf %5, %8 : vector<64x128xf32>
    %c0_12 = arith.constant 0 : index
    %c0_13 = arith.constant 0 : index
    %10 = vector.load %arg11[%c0_12, %c0_13] : memref<64x128xf32, #tpu.memory_space<vmem>>, vector<64x128xf32>
    tpu.vector_store %arg11[%c0_12, %c0_13], %9 {strides = array<i32>} : memref<64x128xf32, #tpu.memory_space<vmem>>, vector<64x128xf32>,
    %c0_14 = arith.constant 0 : index
    %c0_15 = arith.constant 0 : index
    %c0_16 = arith.constant 0 : index
    %c1 = arith.constant 1 : index
    %c0_17 = arith.constant 0 : index
    %11 = vector.load %arg2[%c0_14, %c0_15, %c0_16, %c1, %c0_17] : memref<1x1x10x10x128xf32, #tpu.memory_space<vmem>>, vector<1x1x8x8x128xf32>
    %12 = vector.shape_cast %11 : vector<1x1x8x8x128xf32> to vector<8x8x128xf32>
    %13 = vector.shape_cast %12 : vector<8x8x128xf32> to vector<64x128xf32>
    %c0_18 = arith.constant 0 : index
    %c0_19 = arith.constant 0 : index
    %14 = vector.load %arg11[%c0_18, %c0_19] : memref<64x128xf32, #tpu.memory_space<vmem>>, vector<64x128xf32>
    %c1_20 = arith.constant 1 : index
    %c0_21 = arith.constant 0 : index
    %c0_22 = arith.constant 0 : index
    %15 = vector.load %arg3[%c1_20, %c0_21, %c0_22] : memref<9x128x128xf32, #tpu.memory_space<vmem>>, vector<1x128x128xf32>
    %16 = vector.shape_cast %15 : vector<1x128x128xf32> to vector<128x128xf32>
    %cst_23 = arith.constant dense<0.000000e+00> : vector<64x128xf32>
    %17 = tpu.matmul %13, %16, %cst_23 {dimension_numbers = #tpu.dot_dimension_numbers<[1], [0], [0], [1], [0, 0, 1, 1], [], []>} : vector<64x128xf32>, vector<128x128xf32>, vector<64x128xf32> -> vector<64x128xf32>
    %18 = arith.addf %14, %17 : vector<64x128xf32>
    %c0_24 = arith.constant 0 : index
    %c0_25 = arith.constant 0 : index
    %19 = vector.load %arg11[%c0_24, %c0_25] : memref<64x128xf32, #tpu.memory_space<vmem>>, vector<64x128xf32>
    tpu.vector_store %arg11[%c0_24, %c0_25], %18 {strides = array<i32>} : memref<64x128xf32, #tpu.memory_space<vmem>>, vector<64x128xf32>,
    %c0_26 = arith.constant 0 : index
    %c0_27 = arith.constant 0 : index
    %c0_28 = arith.constant 0 : index
    %c2 = arith.constant 2 : index
    %c0_29 = arith.constant 0 : index
    %20 = vector.load %arg2[%c0_26, %c0_27, %c0_28, %c2, %c0_29] : memref<1x1x10x10x128xf32, #tpu.memory_space<vmem>>, vector<1x1x8x8x128xf32>
    %21 = vector.shape_cast %20 : vector<1x1x8x8x128xf32> to vector<8x8x128xf32>
    %22 = vector.shape_cast %21 : vector<8x8x128xf32> to vector<64x128xf32>
    %c0_30 = arith.constant 0 : index
    %c0_31 = arith.constant 0 : index
    %23 = vector.load %arg11[%c0_30, %c0_31] : memref<64x128xf32, #tpu.memory_space<vmem>>, vector<64x128xf32>
    %c2_32 = arith.constant 2 : index
    %c0_33 = arith.constant 0 : index
    %c0_34 = arith.constant 0 : index
    %24 = vector.load %arg3[%c2_32, %c0_33, %c0_34] : memref<9x128x128xf32, #tpu.memory_space<vmem>>, vector<1x128x128xf32>
    %25 = vector.shape_cast %24 : vector<1x128x128xf32> to vector<128x128xf32>
    %cst_35 = arith.constant dense<0.000000e+00> : vector<64x128xf32>
    %26 = tpu.matmul %22, %25, %cst_35 {dimension_numbers = #tpu.dot_dimension_numbers<[1], [0], [0], [1], [0, 0, 1, 1], [], []>} : vector<64x128xf32>, vector<128x128xf32>, vector<64x128xf32> -> vector<64x128xf32>
    %27 = arith.addf %23, %26 : vector<64x128xf32>
    %c0_36 = arith.constant 0 : index
    %c0_37 = arith.constant 0 : index
    %28 = vector.load %arg11[%c0_36, %c0_37] : memref<64x128xf32, #tpu.memory_space<vmem>>, vector<64x128xf32>
    tpu.vector_store %arg11[%c0_36, %c0_37], %27 {strides = array<i32>} : memref<64x128xf32, #tpu.memory_space<vmem>>, vector<64x128xf32>,
    %c0_38 = arith.constant 0 : index
    %c0_39 = arith.constant 0 : index
    %c1_40 = arith.constant 1 : index
    %c0_41 = arith.constant 0 : index
    %c0_42 = arith.constant 0 : index
    %29 = vector.load %arg2[%c0_38, %c0_39, %c1_40, %c0_41, %c0_42] : memref<1x1x10x10x128xf32, #tpu.memory_space<vmem>>, vector<1x1x8x8x128xf32>
    %30 = vector.shape_cast %29 : vector<1x1x8x8x128xf32> to vector<8x8x128xf32>
    %31 = vector.shape_cast %30 : vector<8x8x128xf32> to vector<64x128xf32>
    %c0_43 = arith.constant 0 : index
    %c0_44 = arith.constant 0 : index
    %32 = vector.load %arg11[%c0_43, %c0_44] : memref<64x128xf32, #tpu.memory_space<vmem>>, vector<64x128xf32>
    %c3 = arith.constant 3 : index
    %c0_45 = arith.constant 0 : index
    %c0_46 = arith.constant 0 : index
    %33 = vector.load %arg3[%c3, %c0_45, %c0_46] : memref<9x128x128xf32, #tpu.memory_space<vmem>>, vector<1x128x128xf32>
    %34 = vector.shape_cast %33 : vector<1x128x128xf32> to vector<128x128xf32>
    %cst_47 = arith.constant dense<0.000000e+00> : vector<64x128xf32>
    %35 = tpu.matmul %31, %34, %cst_47 {dimension_numbers = #tpu.dot_dimension_numbers<[1], [0], [0], [1], [0, 0, 1, 1], [], []>} : vector<64x128xf32>, vector<128x128xf32>, vector<64x128xf32> -> vector<64x128xf32>
    %36 = arith.addf %32, %35 : vector<64x128xf32>
    %c0_48 = arith.constant 0 : index
    %c0_49 = arith.constant 0 : index
    %37 = vector.load %arg11[%c0_48, %c0_49] : memref<64x128xf32, #tpu.memory_space<vmem>>, vector<64x128xf32>
    tpu.vector_store %arg11[%c0_48, %c0_49], %36 {strides = array<i32>} : memref<64x128xf32, #tpu.memory_space<vmem>>, vector<64x128xf32>,
    %c0_50 = arith.constant 0 : index
    %c0_51 = arith.constant 0 : index
    %c1_52 = arith.constant 1 : index
    %c1_53 = arith.constant 1 : index
    %c0_54 = arith.constant 0 : index
    %38 = vector.load %arg2[%c0_50, %c0_51, %c1_52, %c1_53, %c0_54] : memref<1x1x10x10x128xf32, #tpu.memory_space<vmem>>, vector<1x1x8x8x128xf32>
    %39 = vector.shape_cast %38 : vector<1x1x8x8x128xf32> to vector<8x8x128xf32>
    %40 = vector.shape_cast %39 : vector<8x8x128xf32> to vector<64x128xf32>
    %c0_55 = arith.constant 0 : index
    %c0_56 = arith.constant 0 : index
    %41 = vector.load %arg11[%c0_55, %c0_56] : memref<64x128xf32, #tpu.memory_space<vmem>>, vector<64x128xf32>
    %c4 = arith.constant 4 : index
    %c0_57 = arith.constant 0 : index
    %c0_58 = arith.constant 0 : index
    %42 = vector.load %arg3[%c4, %c0_57, %c0_58] : memref<9x128x128xf32, #tpu.memory_space<vmem>>, vector<1x128x128xf32>
    %43 = vector.shape_cast %42 : vector<1x128x128xf32> to vector<128x128xf32>
    %cst_59 = arith.constant dense<0.000000e+00> : vector<64x128xf32>
    %44 = tpu.matmul %40, %43, %cst_59 {dimension_numbers = #tpu.dot_dimension_numbers<[1], [0], [0], [1], [0, 0, 1, 1], [], []>} : vector<64x128xf32>, vector<128x128xf32>, vector<64x128xf32> -> vector<64x128xf32>
    %45 = arith.addf %41, %44 : vector<64x128xf32>
    %c0_60 = arith.constant 0 : index
    %c0_61 = arith.constant 0 : index
    %46 = vector.load %arg11[%c0_60, %c0_61] : memref<64x128xf32, #tpu.memory_space<vmem>>, vector<64x128xf32>
    tpu.vector_store %arg11[%c0_60, %c0_61], %45 {strides = array<i32>} : memref<64x128xf32, #tpu.memory_space<vmem>>, vector<64x128xf32>,
    %c0_62 = arith.constant 0 : index
    %c0_63 = arith.constant 0 : index
    %c1_64 = arith.constant 1 : index
    %c2_65 = arith.constant 2 : index
    %c0_66 = arith.constant 0 : index
    %47 = vector.load %arg2[%c0_62, %c0_63, %c1_64, %c2_65, %c0_66] : memref<1x1x10x10x128xf32, #tpu.memory_space<vmem>>, vector<1x1x8x8x128xf32>
    %48 = vector.shape_cast %47 : vector<1x1x8x8x128xf32> to vector<8x8x128xf32>
    %49 = vector.shape_cast %48 : vector<8x8x128xf32> to vector<64x128xf32>
    %c0_67 = arith.constant 0 : index
    %c0_68 = arith.constant 0 : index
    %50 = vector.load %arg11[%c0_67, %c0_68] : memref<64x128xf32, #tpu.memory_space<vmem>>, vector<64x128xf32>
    %c5 = arith.constant 5 : index
    %c0_69 = arith.constant 0 : index
    %c0_70 = arith.constant 0 : index
    %51 = vector.load %arg3[%c5, %c0_69, %c0_70] : memref<9x128x128xf32, #tpu.memory_space<vmem>>, vector<1x128x128xf32>
    %52 = vector.shape_cast %51 : vector<1x128x128xf32> to vector<128x128xf32>
    %cst_71 = arith.constant dense<0.000000e+00> : vector<64x128xf32>
    %53 = tpu.matmul %49, %52, %cst_71 {dimension_numbers = #tpu.dot_dimension_numbers<[1], [0], [0], [1], [0, 0, 1, 1], [], []>} : vector<64x128xf32>, vector<128x128xf32>, vector<64x128xf32> -> vector<64x128xf32>
    %54 = arith.addf %50, %53 : vector<64x128xf32>
    %c0_72 = arith.constant 0 : index
    %c0_73 = arith.constant 0 : index
    %55 = vector.load %arg11[%c0_72, %c0_73] : memref<64x128xf32, #tpu.memory_space<vmem>>, vector<64x128xf32>
    tpu.vector_store %arg11[%c0_72, %c0_73], %54 {strides = array<i32>} : memref<64x128xf32, #tpu.memory_space<vmem>>, vector<64x128xf32>,
    %c0_74 = arith.constant 0 : index
    %c0_75 = arith.constant 0 : index
    %c2_76 = arith.constant 2 : index
    %c0_77 = arith.constant 0 : index
    %c0_78 = arith.constant 0 : index
    %56 = vector.load %arg2[%c0_74, %c0_75, %c2_76, %c0_77, %c0_78] : memref<1x1x10x10x128xf32, #tpu.memory_space<vmem>>, vector<1x1x8x8x128xf32>
    %57 = vector.shape_cast %56 : vector<1x1x8x8x128xf32> to vector<8x8x128xf32>
    %58 = vector.shape_cast %57 : vector<8x8x128xf32> to vector<64x128xf32>
    %c0_79 = arith.constant 0 : index
    %c0_80 = arith.constant 0 : index
    %59 = vector.load %arg11[%c0_79, %c0_80] : memref<64x128xf32, #tpu.memory_space<vmem>>, vector<64x128xf32>
    %c6 = arith.constant 6 : index
    %c0_81 = arith.constant 0 : index
    %c0_82 = arith.constant 0 : index
    %60 = vector.load %arg3[%c6, %c0_81, %c0_82] : memref<9x128x128xf32, #tpu.memory_space<vmem>>, vector<1x128x128xf32>
    %61 = vector.shape_cast %60 : vector<1x128x128xf32> to vector<128x128xf32>
    %cst_83 = arith.constant dense<0.000000e+00> : vector<64x128xf32>
    %62 = tpu.matmul %58, %61, %cst_83 {dimension_numbers = #tpu.dot_dimension_numbers<[1], [0], [0], [1], [0, 0, 1, 1], [], []>} : vector<64x128xf32>, vector<128x128xf32>, vector<64x128xf32> -> vector<64x128xf32>
    %63 = arith.addf %59, %62 : vector<64x128xf32>
    %c0_84 = arith.constant 0 : index
    %c0_85 = arith.constant 0 : index
    %64 = vector.load %arg11[%c0_84, %c0_85] : memref<64x128xf32, #tpu.memory_space<vmem>>, vector<64x128xf32>
    tpu.vector_store %arg11[%c0_84, %c0_85], %63 {strides = array<i32>} : memref<64x128xf32, #tpu.memory_space<vmem>>, vector<64x128xf32>,
    %c0_86 = arith.constant 0 : index
    %c0_87 = arith.constant 0 : index
    %c2_88 = arith.constant 2 : index
    %c1_89 = arith.constant 1 : index
    %c0_90 = arith.constant 0 : index
    %65 = vector.load %arg2[%c0_86, %c0_87, %c2_88, %c1_89, %c0_90] : memref<1x1x10x10x128xf32, #tpu.memory_space<vmem>>, vector<1x1x8x8x128xf32>
    %66 = vector.shape_cast %65 : vector<1x1x8x8x128xf32> to vector<8x8x128xf32>
    %67 = vector.shape_cast %66 : vector<8x8x128xf32> to vector<64x128xf32>
    %c0_91 = arith.constant 0 : index
    %c0_92 = arith.constant 0 : index
    %68 = vector.load %arg11[%c0_91, %c0_92] : memref<64x128xf32, #tpu.memory_space<vmem>>, vector<64x128xf32>
    %c7 = arith.constant 7 : index
    %c0_93 = arith.constant 0 : index
    %c0_94 = arith.constant 0 : index
    %69 = vector.load %arg3[%c7, %c0_93, %c0_94] : memref<9x128x128xf32, #tpu.memory_space<vmem>>, vector<1x128x128xf32>
    %70 = vector.shape_cast %69 : vector<1x128x128xf32> to vector<128x128xf32>
    %cst_95 = arith.constant dense<0.000000e+00> : vector<64x128xf32>
    %71 = tpu.matmul %67, %70, %cst_95 {dimension_numbers = #tpu.dot_dimension_numbers<[1], [0], [0], [1], [0, 0, 1, 1], [], []>} : vector<64x128xf32>, vector<128x128xf32>, vector<64x128xf32> -> vector<64x128xf32>
    %72 = arith.addf %68, %71 : vector<64x128xf32>
    %c0_96 = arith.constant 0 : index
    %c0_97 = arith.constant 0 : index
    %73 = vector.load %arg11[%c0_96, %c0_97] : memref<64x128xf32, #tpu.memory_space<vmem>>, vector<64x128xf32>
    tpu.vector_store %arg11[%c0_96, %c0_97], %72 {strides = array<i32>} : memref<64x128xf32, #tpu.memory_space<vmem>>, vector<64x128xf32>,
    %c0_98 = arith.constant 0 : index
    %c0_99 = arith.constant 0 : index
    %c2_100 = arith.constant 2 : index
    %c2_101 = arith.constant 2 : index
    %c0_102 = arith.constant 0 : index
    %74 = vector.load %arg2[%c0_98, %c0_99, %c2_100, %c2_101, %c0_102] : memref<1x1x10x10x128xf32, #tpu.memory_space<vmem>>, vector<1x1x8x8x128xf32>
    %75 = vector.shape_cast %74 : vector<1x1x8x8x128xf32> to vector<8x8x128xf32>
    %76 = vector.shape_cast %75 : vector<8x8x128xf32> to vector<64x128xf32>
    %c0_103 = arith.constant 0 : index
    %c0_104 = arith.constant 0 : index
    %77 = vector.load %arg11[%c0_103, %c0_104] : memref<64x128xf32, #tpu.memory_space<vmem>>, vector<64x128xf32>
    %c8 = arith.constant 8 : index
    %c0_105 = arith.constant 0 : index
    %c0_106 = arith.constant 0 : index
    %78 = vector.load %arg3[%c8, %c0_105, %c0_106] : memref<9x128x128xf32, #tpu.memory_space<vmem>>, vector<1x128x128xf32>
    %79 = vector.shape_cast %78 : vector<1x128x128xf32> to vector<128x128xf32>
    %cst_107 = arith.constant dense<0.000000e+00> : vector<64x128xf32>
    %80 = tpu.matmul %76, %79, %cst_107 {dimension_numbers = #tpu.dot_dimension_numbers<[1], [0], [0], [1], [0, 0, 1, 1], [], []>} : vector<64x128xf32>, vector<128x128xf32>, vector<64x128xf32> -> vector<64x128xf32>
    %81 = arith.addf %77, %80 : vector<64x128xf32>
    %c0_108 = arith.constant 0 : index
    %c0_109 = arith.constant 0 : index
    %82 = vector.load %arg11[%c0_108, %c0_109] : memref<64x128xf32, #tpu.memory_space<vmem>>, vector<64x128xf32>
    tpu.vector_store %arg11[%c0_108, %c0_109], %81 {strides = array<i32>} : memref<64x128xf32, #tpu.memory_space<vmem>>, vector<64x128xf32>,
    %c0_110 = arith.constant 0 : index
    %c0_111 = arith.constant 0 : index
    %83 = vector.load %arg11[%c0_110, %c0_111] : memref<64x128xf32, #tpu.memory_space<vmem>>, vector<64x128xf32>
    %c0_112 = arith.constant 0 : index
    %c0_113 = arith.constant 0 : index
    %84 = vector.load %arg4[%c0_112, %c0_113] : memref<1x128xf32, #tpu.memory_space<vmem>>, vector<1x128xf32>
    %85 = vector.broadcast %84 : vector<1x128xf32> to vector<64x128xf32>
    %86 = arith.mulf %83, %85 : vector<64x128xf32>
    %c0_114 = arith.constant 0 : index
    %c0_115 = arith.constant 0 : index
    %87 = vector.load %arg5[%c0_114, %c0_115] : memref<1x128xf32, #tpu.memory_space<vmem>>, vector<1x128xf32>
    %88 = vector.broadcast %87 : vector<1x128xf32> to vector<64x128xf32>
    %89 = arith.addf %86, %88 : vector<64x128xf32>
    %c0_116 = arith.constant 0 : index
    %90 = memref.load %arg6[%c0_116] : memref<1xf32, #tpu.memory_space<smem>>
    %cst_117 = arith.constant 0.000000e+00 : f32
    %91 = vector.broadcast %cst_117 : f32 to vector<64x128xf32>
    %92 = arith.cmpf oge, %89, %91 : vector<64x128xf32>
    %93 = vector.broadcast %90 : f32 to vector<64x128xf32>
    %94 = arith.mulf %93, %89 : vector<64x128xf32>
    %95 = arith.select %92, %89, %94 : vector<64x128xi1>, vector<64x128xf32>
    %c0_118 = arith.constant 0 : index
    %c0_119 = arith.constant 0 : index
    %c0_120 = arith.constant 0 : index
    %96 = vector.load %arg7[%c0_118, %c0_119, %c0_120] : memref<1x64x128xf32, #tpu.memory_space<vmem>>, vector<1x64x128xf32>
    %97 = vector.shape_cast %96 : vector<1x64x128xf32> to vector<64x128xf32>
    %c0_121 = arith.constant 0 : index
    %c0_122 = arith.constant 0 : index
    %98 = vector.load %arg8[%c0_121, %c0_122] : memref<128x128xf32, #tpu.memory_space<vmem>>, vector<128x128xf32>
    %cst_123 = arith.constant dense<0.000000e+00> : vector<64x128xf32>
    %99 = tpu.matmul %97, %98, %cst_123 {dimension_numbers = #tpu.dot_dimension_numbers<[1], [0], [0], [1], [0, 0, 1, 1], [], []>} : vector<64x128xf32>, vector<128x128xf32>, vector<64x128xf32> -> vector<64x128xf32>
    %c0_124 = arith.constant 0 : index
    %c0_125 = arith.constant 0 : index
    %100 = vector.load %arg9[%c0_124, %c0_125] : memref<1x128xf32, #tpu.memory_space<vmem>>, vector<1x128xf32>
    %101 = vector.broadcast %100 : vector<1x128xf32> to vector<64x128xf32>
    %102 = arith.addf %99, %101 : vector<64x128xf32>
    %103 = arith.addf %95, %102 : vector<64x128xf32>
    %c0_126 = arith.constant 0 : index
    %c0_127 = arith.constant 0 : index
    %c0_128 = arith.constant 0 : index
    %104 = vector.load %arg10[%c0_126, %c0_127, %c0_128] : memref<1x64x128xf32, #tpu.memory_space<vmem>>, vector<1x64x128xf32>
    %105 = vector.shape_cast %104 : vector<1x64x128xf32> to vector<64x128xf32>
    %106 = vector.shape_cast %103 : vector<64x128xf32> to vector<1x64x128xf32>
    tpu.vector_store %arg10[%c0_126, %c0_127, %c0_128], %106 {strides = array<i32>} : memref<1x64x128xf32, #tpu.memory_space<vmem>>, vector<1x64x128xf32>,
    return
  }
  func.func @transform_0(%arg0: i32, %arg1: i32) -> (i32, i32, i32, i32, i32) {
    %c0_i32 = arith.constant 0 : i32
    %c0_i32_0 = arith.constant 0 : i32
    %c0_i32_1 = arith.constant 0 : i32
    %c0_i32_2 = arith.constant 0 : i32
    %c0_i32_3 = arith.constant 0 : i32
    return %arg0, %c0_i32, %c0_i32_0, %c0_i32_1, %c0_i32_2 : i32, i32, i32, i32, i32
  }
  func.func @transform_1(%arg0: i32, %arg1: i32) -> (i32, i32, i32) {
    %c0_i32 = arith.constant 0 : i32
    %c0_i32_0 = arith.constant 0 : i32
    %c0_i32_1 = arith.constant 0 : i32
    return %c0_i32, %c0_i32_0, %arg1 : i32, i32, i32
  }
  func.func @transform_2(%arg0: i32, %arg1: i32) -> (i32, i32) {
    %c0_i32 = arith.constant 0 : i32
    %c0_i32_0 = arith.constant 0 : i32
    return %c0_i32, %arg1 : i32, i32
  }
  func.func @transform_3(%arg0: i32, %arg1: i32) -> (i32, i32) {
    %c0_i32 = arith.constant 0 : i32
    %c0_i32_0 = arith.constant 0 : i32
    return %c0_i32, %arg1 : i32, i32
  }
  func.func @transform_4(%arg0: i32, %arg1: i32) -> i32 {
    %c0_i32 = arith.constant 0 : i32
    %c0_i32_0 = arith.constant 0 : i32
    return %c0_i32 : i32
  }
  func.func @transform_5(%arg0: i32, %arg1: i32) -> (i32, i32, i32) {
    %c0_i32 = arith.constant 0 : i32
    %c0_i32_0 = arith.constant 0 : i32
    %c0_i32_1 = arith.constant 0 : i32
    return %arg0, %c0_i32, %c0_i32_0 : i32, i32, i32
  }
  func.func @transform_6(%arg0: i32, %arg1: i32) -> (i32, i32) {
    %c0_i32 = arith.constant 0 : i32
    %c0_i32_0 = arith.constant 0 : i32
    return %c0_i32, %arg1 : i32, i32
  }
  func.func @transform_7(%arg0: i32, %arg1: i32) -> (i32, i32) {
    %c0_i32 = arith.constant 0 : i32
    %c0_i32_0 = arith.constant 0 : i32
    return %c0_i32, %arg1 : i32, i32
  }
  func.func @transform_8(%arg0: i32, %arg1: i32) -> (i32, i32, i32) {
    %c0_i32 = arith.constant 0 : i32
    %c0_i32_0 = arith.constant 0 : i32
    return %arg0, %c0_i32, %arg1 : i32, i32, i32
  }
}

</mosaic_0001>

<llo_original>
// kernel: resnet_block_forward.2
$region0: #{resnet_block_forward.2}
  #allocation0 [shape = 'u32[]', space=smem, size = 0x4, offset = 0x4, fixed_abs, tag = 'smem constant byte address 0x4 - core index']
  #allocation1 [shape = 'u32[72,128]{1,0:T(1,128)}', space=vmem, size = 0x9000, scoped, tag = 'internal scratch']
  #allocation2 [shape = 'f32[64,128]{1,0:T(8,128)}', space=vmem, size = 0x8000, scoped, tag = 'scratch operand']
  #allocation3 [shape = 'f32[1]{0:T(128)S(6)}', space=smem, size = 0x200, scoped, tag = 'scoped memory for resnet_block_forward.2']
  %s0 = inlined_call_operand.vmem [shape: f32[2,4,9,9,128], index: 0, kind: input, shape index: {}]
  %s1 = inlined_call_operand.vmem [shape: f32[9,128,128], index: 1, kind: input, shape index: {}]
  %s2 = inlined_call_operand.vmem [shape: f32[1,128], index: 2, kind: input, shape index: {}]
  %s3 = inlined_call_operand.vmem [shape: f32[1,128], index: 3, kind: input, shape index: {}]
  %s4 = inlined_call_operand.<no memory space> [shape: f32[1], index: 4, kind: input, shape index: {}]
  %s5 = inlined_call_operand.vmem [shape: f32[2,64,128], index: 5, kind: output, shape index: {}]
  %s6 = sld [smem:[#allocation0]]
  $region53: #{resnet_block_forward.2} parent=0
    _
  %s8 = ssub.s32 1, %s6
  %s9 = scalar_select 0, %s8, %s6
  %10 = sst [smem:[#allocation3]] %s4
  loop: start=0, step=1, limit=4
  $region2: #{resnet_block_forward.2} parent=0 // loop_pre_header
    _
  $region3: #{resnet_block_forward.2} parent=0 // loop_header
    %s12 = sphi 0, %s16
    %p13 = scmp.ge.s32.totalorder %s12, 4
    %s19 = sphi 0, %s31
    %s20 = sphi 0, %s27
    %s21 = sphi 0, %s19
    %s22 = sphi 0, %s20
    %s23 = sphi 0, %s21
    %s24 = sphi 0, %s22
    %s34 = sphi 0, %s36
    %s37 = sphi 0, %s34
    %s38 = sphi 0, %s37
    %s54 = sphi 0, %s38
    %s60 = sphi 0, %s62
    %s63 = sphi 0, %s60
    %s64 = sphi 0, %s63
    %s80 = sphi 0, %s64
    %s86 = sphi 0, %s88
    %s89 = sphi 0, %s86
    %s90 = sphi 0, %s89
    %s106 = sphi 0, %s90
    %s112 = sphi 0, %s114
    %s115 = sphi 0, %s112
    %s116 = sphi 0, %s115
    %s132 = sphi 0, %s116
    %s136 = sphi 0, %s136
    %s138 = sphi 0, %s136
    %s139 = sphi 0, %s138
    %s153 = sphi 0, %s139
    %s161 = sphi 0, %s163
    %s164 = sphi 0, %s161
    %s165 = sphi 0, %s164
    %s181 = sphi 0, %s165
  $region4: #{resnet_block_forward.2} parent=0 // loop_header_branch
    %15 = sbr.rel (%p13) target = $region8
  $region5: #{resnet_block_forward.2} parent=0 // loop_body
    %s17 = ssub.s32 %s12, 1
    %s18 = ssub.s32 %s12, 2
    %s25 = sadd.s32 1, %s20
    %p26 = scmp.ge.s32.totalorder %s25, 1
    %s27 = scalar_select %p26, 0, %s25
    %s28 = sadd.s32 1, %s19
    %s29 = scalar_select %p26, %s28, %s19
    %p30 = scmp.ge.s32.totalorder %s29, 2
    %s31 = scalar_select %p30, 0, %s29
    %s32 = ssub.s32 %s19, %s31
    %p33 = scmp.eq.s32.totalorder %s32, 0
    %s35 = sadd.s32 %s34, 1
    %s36 = scalar_select %p33, %s34, %s35
    %p39 = pneg %p33
    %p40 = scmp.eq.s32.totalorder %s12, 1
    %p41 = por %p39, %p40
    %p42 = scmp.ne.s32.totalorder %s34, %s37
    %p43 = scmp.eq.s32.totalorder %s12, 0
    %p44 = por %p42, %p43
    %p45 = scmp.ne.s32.totalorder %s34, %s37
    %p46 = scmp.eq.s32.totalorder %s17, 1
    %p47 = por %p45, %p46
    %p48 = scmp.ne.s32.totalorder %s37, %s38
    %p49 = scmp.eq.s32.totalorder %s17, 0
    %p50 = por %p48, %p49
    %p51 = scmp.ne.s32.totalorder %s37, %s38
    %p52 = scmp.eq.s32.totalorder %s18, 1
    %p53 = por %p51, %p52
    %p55 = scmp.ne.s32.totalorder %s38, %s54
    %p56 = scmp.eq.s32.totalorder %s18, 0
    %p57 = por %p55, %p56
    %s58 = ssub.s32 %s20, %s27
    %p59 = scmp.eq.s32.totalorder %s58, 0
    %s61 = sadd.s32 %s60, 1
    %s62 = scalar_select %p59, %s60, %s61
    %p65 = pneg %p59
    %p66 = scmp.eq.s32.totalorder %s12, 1
    %p67 = por %p65, %p66
    %p68 = scmp.ne.s32.totalorder %s60, %s63
    %p69 = scmp.eq.s32.totalorder %s12, 0
    %p70 = por %p68, %p69
    %p71 = scmp.ne.s32.totalorder %s60, %s63
    %p72 = scmp.eq.s32.totalorder %s17, 1
    %p73 = por %p71, %p72
    %p74 = scmp.ne.s32.totalorder %s63, %s64
    %p75 = scmp.eq.s32.totalorder %s17, 0
    %p76 = por %p74, %p75
    %p77 = scmp.ne.s32.totalorder %s63, %s64
    %p78 = scmp.eq.s32.totalorder %s18, 1
    %p79 = por %p77, %p78
    %p81 = scmp.ne.s32.totalorder %s64, %s80
    %p82 = scmp.eq.s32.totalorder %s18, 0
    %p83 = por %p81, %p82
    %s84 = ssub.s32 %s20, %s27
    %p85 = scmp.eq.s32.totalorder %s84, 0
    %s87 = sadd.s32 %s86, 1
    %s88 = scalar_select %p85, %s86, %s87
    %p91 = pneg %p85
    %p92 = scmp.eq.s32.totalorder %s12, 1
    %p93 = por %p91, %p92
    %p94 = scmp.ne.s32.totalorder %s86, %s89
    %p95 = scmp.eq.s32.totalorder %s12, 0
    %p96 = por %p94, %p95
    %p97 = scmp.ne.s32.totalorder %s86, %s89
    %p98 = scmp.eq.s32.totalorder %s17, 1
    %p99 = por %p97, %p98
    %p100 = scmp.ne.s32.totalorder %s89, %s90
    %p101 = scmp.eq.s32.totalorder %s17, 0
    %p102 = por %p100, %p101
    %p103 = scmp.ne.s32.totalorder %s89, %s90
    %p104 = scmp.eq.s32.totalorder %s18, 1
    %p105 = por %p103, %p104
    %p107 = scmp.ne.s32.totalorder %s90, %s106
    %p108 = scmp.eq.s32.totalorder %s18, 0
    %p109 = por %p107, %p108
    %s110 = ssub.s32 %s20, %s27
    %p111 = scmp.eq.s32.totalorder %s110, 0
    %s113 = sadd.s32 %s112, 1
    %s114 = scalar_select %p111, %s112, %s113
    %p117 = pneg %p111
    %p118 = scmp.eq.s32.totalorder %s12, 1
    %p119 = por %p117, %p118
    %p120 = scmp.ne.s32.totalorder %s112, %s115
    %p121 = scmp.eq.s32.totalorder %s12, 0
    %p122 = por %p120, %p121
    %p123 = scmp.ne.s32.totalorder %s112, %s115
    %p124 = scmp.eq.s32.totalorder %s17, 1
    %p125 = por %p123, %p124
    %p126 = scmp.ne.s32.totalorder %s115, %s116
    %p127 = scmp.eq.s32.totalorder %s17, 0
    %p128 = por %p126, %p127
    %p129 = scmp.ne.s32.totalorder %s115, %s116
    %p130 = scmp.eq.s32.totalorder %s18, 1
    %p131 = por %p129, %p130
    %p133 = scmp.ne.s32.totalorder %s116, %s132
    %p134 = scmp.eq.s32.totalorder %s18, 0
    %p135 = por %p133, %p134
    %s137 = sadd.s32 %s136, 1
    %p140 = scmp.eq.s32.totalorder %s12, 1
    %p141 = scmp.ne.s32.totalorder %s136, %s138
    %p142 = scmp.eq.s32.totalorder %s12, 0
    %p143 = por %p141, %p142
    %p144 = scmp.ne.s32.totalorder %s136, %s138
    %p145 = scmp.eq.s32.totalorder %s17, 1
    %p146 = por %p144, %p145
    %p147 = scmp.ne.s32.totalorder %s138, %s139
    %p148 = scmp.eq.s32.totalorder %s17, 0
    %p149 = por %p147, %p148
    %p150 = scmp.ne.s32.totalorder %s138, %s139
    %p151 = scmp.eq.s32.totalorder %s18, 1
    %p152 = por %p150, %p151
    %p154 = scmp.ne.s32.totalorder %s139, %s153
    %p155 = scmp.eq.s32.totalorder %s18, 0
    %p156 = por %p154, %p155
    %s157 = ssub.s32 %s19, %s31
    %s158 = ssub.s32 %s20, %s27
    %s159 = sor.u32 %s157, %s158
    %p160 = scmp.eq.s32.totalorder %s159, 0
    %s162 = sadd.s32 %s161, 1
    %s163 = scalar_select %p160, %s161, %s162
    %p166 = pneg %p160
    %p167 = scmp.eq.s32.totalorder %s12, 1
    %p168 = por %p166, %p167
    %p169 = scmp.ne.s32.totalorder %s161, %s164
    %p170 = scmp.eq.s32.totalorder %s12, 0
    %p171 = por %p169, %p170
    %p172 = scmp.ne.s32.totalorder %s161, %s164
    %p173 = scmp.eq.s32.totalorder %s17, 1
    %p174 = por %p172, %p173
    %p175 = scmp.ne.s32.totalorder %s164, %s165
    %p176 = scmp.eq.s32.totalorder %s17, 0
    %p177 = por %p175, %p176
    %p178 = scmp.ne.s32.totalorder %s164, %s165
    %p179 = scmp.eq.s32.totalorder %s18, 1
    %p180 = por %p178, %p179
    %p182 = scmp.ne.s32.totalorder %s165, %s181
    %p183 = scmp.eq.s32.totalorder %s18, 0
    %p184 = por %p182, %p183
    %p185 = scmp.le.s32.totalorder 1, %s12
    %p186 = scmp.lt.s32.totalorder %s12, 3
    %p187 = pnand %p185, %p186
    %p188 = pneg %p187
    // Predicated region
    $region9: #{resnet_block_forward.2} parent=5 // pred_check
      _
    $region10: #{resnet_block_forward.2} parent=5 // pred_check_branch
      %190 = sbr.rel (%p187) target = $region12
    $region11: #{resnet_block_forward.2} parent=5 // pred_region
      %s191 = ssub.s32 %s12, 1
      // Predicated region
      $region13: #{resnet_block_forward.2} parent=11 // pred_check
        %p192 = pneg %p76
      $region14: #{resnet_block_forward.2} parent=11 // pred_check_branch
        %194 = sbr.rel (%p192) target = $region16
      $region15: #{resnet_block_forward.2} parent=11 // pred_region
        %p195 = scmp.lt.s32.totalorder %s22, 0
        %s196 = scalar_select %p195, %s22, 0
        %s197 = smul.addr %s196, 8
        %s198 = scalar_lea.vmem %s1, %s197
      $region16: #{resnet_block_forward.2} parent=11 // pred_fallthru
        _
      // Predicated region
      $region17: #{resnet_block_forward.2} parent=11 // pred_check
        %p199 = pneg %p102
      $region18: #{resnet_block_forward.2} parent=11 // pred_check_branch
        %201 = sbr.rel (%p199) target = $region20
      $region19: #{resnet_block_forward.2} parent=11 // pred_region
        %p202 = scmp.lt.s32.totalorder %s22, 0
        %s203 = scalar_select %p202, %s22, 0
        %s204 = scalar_lea.vmem %s2, %s203
      $region20: #{resnet_block_forward.2} parent=11 // pred_fallthru
        _
      // Predicated region
      $region21: #{resnet_block_forward.2} parent=11 // pred_check
        %p205 = pneg %p128
      $region22: #{resnet_block_forward.2} parent=11 // pred_check_branch
        %207 = sbr.rel (%p205) target = $region24
      $region23: #{resnet_block_forward.2} parent=11 // pred_region
        %p208 = scmp.lt.s32.totalorder %s22, 0
        %s209 = scalar_select %p208, %s22, 0
        %s210 = scalar_lea.vmem %s3, %s209
      $region24: #{resnet_block_forward.2} parent=11 // pred_fallthru
        _
      // Predicated region
      $region25: #{resnet_block_forward.2} parent=11 // pred_check
        %p211 = pneg %p149
      $region26: #{resnet_block_forward.2} parent=11 // pred_check_branch
        %213 = sbr.rel (%p211) target = $region28
      $region27: #{resnet_block_forward.2} parent=11 // pred_region
        _
      $region28: #{resnet_block_forward.2} parent=11 // pred_fallthru
        _
    $region12: #{resnet_block_forward.2} parent=5 // pred_fallthru
      _
    %p214 = scmp.lt.s32.totalorder %s12, 2
    // Predicated region
    $region29: #{resnet_block_forward.2} parent=5 // pred_check
      %p215 = pneg %p214
    $region30: #{resnet_block_forward.2} parent=5 // pred_check_branch
      %217 = sbr.rel (%p215) target = $region32
    $region31: #{resnet_block_forward.2} parent=5 // pred_region
      // Predicated region
      $region33: #{resnet_block_forward.2} parent=31 // pred_check
        %p218 = pneg %p44
      $region34: #{resnet_block_forward.2} parent=31 // pred_check_branch
        %220 = sbr.rel (%p218) target = $region36
      $region35: #{resnet_block_forward.2} parent=31 // pred_region
        %p221 = scmp.lt.s32.totalorder %s19, 1
        %s222 = scalar_select %p221, %s19, 1
        %s223 = smul.addr %s222, 72
        %s224 = smul.addr %s223, 8
        %s225 = scalar_lea.vmem %s0, %s224
      $region36: #{resnet_block_forward.2} parent=31 // pred_fallthru
        _
    $region32: #{resnet_block_forward.2} parent=5 // pred_fallthru
      _
    %p226 = scmp.le.s32.totalorder 1, %s12
    %p227 = scmp.lt.s32.totalorder %s12, 3
    %p228 = pnand %p226, %p227
    %p229 = pneg %p228
    // Predicated region
    $region37: #{resnet_block_forward.2} parent=5 // pred_check
      _
    $region38: #{resnet_block_forward.2} parent=5 // pred_check_branch
      %231 = sbr.rel (%p228) target = $region40
    $region39: #{resnet_block_forward.2} parent=5 // pred_region
      %s232 = ssub.s32 %s12, 1
      %p233 = scmp.lt.s32.totalorder %s21, 1
      %s234 = scalar_select %p233, %s21, 1
      %s235 = smul.addr %s234, 72
      %s236 = smul.addr %s235, 8
      %s237 = scalar_lea.vmem %s0, %s236
      %p238 = pneg %p50
      %p239 = pneg %p47
      %p240 = scmp.lt.s32.totalorder %s22, 0
      %s241 = scalar_select %p240, %s22, 0
      %s242 = smul.addr %s241, 8
      %s243 = scalar_lea.vmem %s1, %s242
      %p244 = pneg %p76
      %p245 = pneg %p73
      %p246 = scmp.lt.s32.totalorder %s22, 0
      %s247 = scalar_select %p246, %s22, 0
      %s248 = scalar_lea.vmem %s2, %s247
      %p249 = pneg %p102
      %p250 = pneg %p99
      %p251 = scmp.lt.s32.totalorder %s22, 0
      %s252 = scalar_select %p251, %s22, 0
      %s253 = scalar_lea.vmem %s3, %s252
      %p254 = pneg %p128
      %p255 = pneg %p125
      %p256 = pneg %p149
      %p257 = pneg %p146
      %p258 = pneg %p177
      %p259 = pneg %p174
      %p260 = scmp.lt.s32.totalorder %s21, 1
      %s261 = scalar_select %p260, %s21, 1
      %p262 = scmp.lt.s32.totalorder %s22, 0
      %s263 = scalar_select %p262, %s22, 0
      %s264 = smul.addr %s261, 8
      %s265 = sadd.s32 %s263, %s264
      %s266 = smul.addr %s265, 8
      %s267 = scalar_lea.vmem %s5, %s266
      %p268 = scmp.lt.s32.totalorder %s21, 1
      %s269 = scalar_select %p268, %s21, 1
      %s270 = smul.addr %s269, 72
      %s271 = smul.addr %s270, 8
      %s272 = scalar_lea.vmem %s0, %s271
      %p273 = scmp.lt.s32.totalorder %s22, 0
      %s274 = scalar_select %p273, %s22, 0
      %s275 = smul.addr %s274, 8
      %s276 = scalar_lea.vmem %s1, %s275
      %p277 = scmp.lt.s32.totalorder %s22, 0
      %s278 = scalar_select %p277, %s22, 0
      %s279 = scalar_lea.vmem %s2, %s278
      %p280 = scmp.lt.s32.totalorder %s22, 0
      %s281 = scalar_select %p280, %s22, 0
      %s282 = scalar_lea.vmem %s3, %s281
      %p283 = scmp.lt.s32.totalorder %s21, 1
      %s284 = scalar_select %p283, %s21, 1
      %p285 = scmp.lt.s32.totalorder %s22, 0
      %s286 = scalar_select %p285, %s22, 0
      %s287 = smul.addr %s284, 8
      %s288 = sadd.s32 %s286, %s287
      %s289 = smul.addr %s288, 8
      %s290 = scalar_lea.vmem %s5, %s289
      %291 = vst [vmem:[#allocation2] sm:$0xff] 0.0
      %292 = vst [vmem:[#allocation2 + $0x8] sm:$0xff] 0.0
      %293 = vst [vmem:[#allocation2 + $0x10] sm:$0xff] 0.0
      %294 = vst [vmem:[#allocation2 + $0x18] sm:$0xff] 0.0
      %295 = vst [vmem:[#allocation2 + $0x20] sm:$0xff] 0.0
      %296 = vst [vmem:[#allocation2 + $0x28] sm:$0xff] 0.0
      %297 = vst [vmem:[#allocation2 + $0x30] sm:$0xff] 0.0
      %298 = vst [vmem:[#allocation2 + $0x38] sm:$0xff] 0.0
      %v299 = vld [vmem:[%s272] sm:$0xff]
      %v300 = vld [vmem:[%s272 + $0x10] sm:$0xff]
      %v301 = vld [vmem:[%s272 + $0x20] sm:$0xff]
      %v302 = vld [vmem:[%s272 + $0x30] sm:$0xff]
      %v303 = vld [vmem:[%s272 + $0x40] sm:$0xff]
      %v304 = vld [vmem:[%s272 + $0x50] sm:$0xff]
      %v305 = vld [vmem:[%s272 + $0x60] sm:$0xff]
      %v306 = vld [vmem:[%s272 + $0x70] sm:$0xff]
      %v307 = vld [vmem:[#allocation2] sm:$0xff]
      %v308 = vld [vmem:[#allocation2 + $0x8] sm:$0xff]
      %v309 = vld [vmem:[#allocation2 + $0x10] sm:$0xff]
      %v310 = vld [vmem:[#allocation2 + $0x18] sm:$0xff]
      %v311 = vld [vmem:[#allocation2 + $0x20] sm:$0xff]
      %v312 = vld [vmem:[#allocation2 + $0x28] sm:$0xff]
      %v313 = vld [vmem:[#allocation2 + $0x30] sm:$0xff]
      %v314 = vld [vmem:[#allocation2 + $0x38] sm:$0xff]
      %v315 = vld [vmem:[%s276] sm:$0xff]
      %v316 = vld [vmem:[%s276 + $0x8] sm:$0xff]
      %v317 = vld [vmem:[%s276 + $0x10] sm:$0xff]
      %v318 = vld [vmem:[%s276 + $0x18] sm:$0xff]
      %v319 = vld [vmem:[%s276 + $0x20] sm:$0xff]
      %v320 = vld [vmem:[%s276 + $0x28] sm:$0xff]
      %v321 = vld [vmem:[%s276 + $0x30] sm:$0xff]
      %v322 = vld [vmem:[%s276 + $0x38] sm:$0xff]
      %v323 = vld [vmem:[%s276 + $0x40] sm:$0xff]
      %v324 = vld [vmem:[%s276 + $0x48] sm:$0xff]
      %v325 = vld [vmem:[%s276 + $0x50] sm:$0xff]
      %v326 = vld [vmem:[%s276 + $0x58] sm:$0xff]
      %v327 = vld [vmem:[%s276 + $0x60] sm:$0xff]
      %v328 = vld [vmem:[%s276 + $0x68] sm:$0xff]
      %v329 = vld [vmem:[%s276 + $0x70] sm:$0xff]
      %v330 = vld [vmem:[%s276 + $0x78] sm:$0xff]
      %331 = vmatpush.msra.mxu0 %v330
      %332 = vmatpush.msra.mxu0 %v329
      %333 = vmatpush.msra.mxu0 %v328
      %334 = vmatpush.msra.mxu0 %v327
      %335 = vmatpush.msra.mxu0 %v326
      %336 = vmatpush.msra.mxu0 %v325
      %337 = vmatpush.msra.mxu0 %v324
      %338 = vmatpush.msra.mxu0 %v323
      %339 = vmatpush.msra.mxu0 %v322
      %340 = vmatpush.msra.mxu0 %v321
      %341 = vmatpush.msra.mxu0 %v320
      %342 = vmatpush.msra.mxu0 %v319
      %343 = vmatpush.msra.mxu0 %v318
      %344 = vmatpush.msra.mxu0 %v317
      %345 = vmatpush.msra.mxu0 %v316
      %346 = vmatpush.msra.mxu0 %v315
      %347 = vmatmul.f32.gmra.mxu0 %v299
      %v348 = vpop.f32.mrf.mxu0
      %v349 = vadd.f32 0.0, %v348
      %350 = vmatmul.f32.gmra.mxu0 %v300
      %v351 = vpop.f32.mrf.mxu0
      %v352 = vadd.f32 0.0, %v351
      %353 = vmatmul.f32.gmra.mxu0 %v301
      %v354 = vpop.f32.mrf.mxu0
      %v355 = vadd.f32 0.0, %v354
      %356 = vmatmul.f32.gmra.mxu0 %v302
      %v357 = vpop.f32.mrf.mxu0
      %v358 = vadd.f32 0.0, %v357
      %359 = vmatmul.f32.gmra.mxu0 %v303
      %v360 = vpop.f32.mrf.mxu0
      %v361 = vadd.f32 0.0, %v360
      %362 = vmatmul.f32.gmra.mxu0 %v304
      %v363 = vpop.f32.mrf.mxu0
      %v364 = vadd.f32 0.0, %v363
      %365 = vmatmul.f32.gmra.mxu0 %v305
      %v366 = vpop.f32.mrf.mxu0
      %v367 = vadd.f32 0.0, %v366
      %368 = vmatmul.f32.gmra.mxu0 %v306
      %v369 = vpop.f32.mrf.mxu0
      %v370 = vadd.f32 0.0, %v369
      %371 = vdwg.mxu0
      %v372 = vadd.f32 %v307, %v349
      %v373 = vadd.f32 %v308, %v352
      %v374 = vadd.f32 %v309, %v355
      %v375 = vadd.f32 %v310, %v358
      %v376 = vadd.f32 %v311, %v361
      %v377 = vadd.f32 %v312, %v364
      %v378 = vadd.f32 %v313, %v367
      %v379 = vadd.f32 %v314, %v370
      %380 = vst [vmem:[#allocation2] sm:$0xff] %v372
      %381 = vst [vmem:[#allocation2 + $0x8] sm:$0xff] %v373
      %382 = vst [vmem:[#allocation2 + $0x10] sm:$0xff] %v374
      %383 = vst [vmem:[#allocation2 + $0x18] sm:$0xff] %v375
      %384 = vst [vmem:[#allocation2 + $0x20] sm:$0xff] %v376
      %385 = vst [vmem:[#allocation2 + $0x28] sm:$0xff] %v377
      %386 = vst [vmem:[#allocation2 + $0x30] sm:$0xff] %v378
      %387 = vst [vmem:[#allocation2 + $0x38] sm:$0xff] %v379
      %s388 = scalar_lea.vmem %s272, 144
      %v389 = vld [vmem:[%s388] sm:$0xff]
      %v390 = vld [vmem:[%s388 + $0x10] sm:$0xff]
      %v391 = vld [vmem:[%s388 + $0x20] sm:$0xff]
      %v392 = vld [vmem:[%s388 + $0x30] sm:$0xff]
      %v393 = vld [vmem:[%s388 + $0x40] sm:$0xff]
      %v394 = vld [vmem:[%s388 + $0x50] sm:$0xff]
      %v395 = vld [vmem:[%s388 + $0x60] sm:$0xff]
      %v396 = vld [vmem:[%s388 + $0x70] sm:$0xff]
      %v397 = vld [vmem:[#allocation2] sm:$0xff]
      %v398 = vld [vmem:[#allocation2 + $0x8] sm:$0xff]
      %v399 = vld [vmem:[#allocation2 + $0x10] sm:$0xff]
      %v400 = vld [vmem:[#allocation2 + $0x18] sm:$0xff]
      %v401 = vld [vmem:[#allocation2 + $0x20] sm:$0xff]
      %v402 = vld [vmem:[#allocation2 + $0x28] sm:$0xff]
      %v403 = vld [vmem:[#allocation2 + $0x30] sm:$0xff]
      %v404 = vld [vmem:[#allocation2 + $0x38] sm:$0xff]
      %s405 = scalar_lea.vmem %s276, 128
      %v406 = vld [vmem:[%s405] sm:$0xff]
      %v407 = vld [vmem:[%s405 + $0x8] sm:$0xff]
      %v408 = vld [vmem:[%s405 + $0x10] sm:$0xff]
      %v409 = vld [vmem:[%s405 + $0x18] sm:$0xff]
      %v410 = vld [vmem:[%s405 + $0x20] sm:$0xff]
      %v411 = vld [vmem:[%s405 + $0x28] sm:$0xff]
      %v412 = vld [vmem:[%s405 + $0x30] sm:$0xff]
      %v413 = vld [vmem:[%s405 + $0x38] sm:$0xff]
      %v414 = vld [vmem:[%s405 + $0x40] sm:$0xff]
      %v415 = vld [vmem:[%s405 + $0x48] sm:$0xff]
      %v416 = vld [vmem:[%s405 + $0x50] sm:$0xff]
      %v417 = vld [vmem:[%s405 + $0x58] sm:$0xff]
      %v418 = vld [vmem:[%s405 + $0x60] sm:$0xff]
      %v419 = vld [vmem:[%s405 + $0x68] sm:$0xff]
      %v420 = vld [vmem:[%s405 + $0x70] sm:$0xff]
      %v421 = vld [vmem:[%s405 + $0x78] sm:$0xff]
      %422 = vmatpush.msra.mxu0 %v421
      %423 = vmatpush.msra.mxu0 %v420
      %424 = vmatpush.msra.mxu0 %v419
      %425 = vmatpush.msra.mxu0 %v418
      %426 = vmatpush.msra.mxu0 %v417
      %427 = vmatpush.msra.mxu0 %v416
      %428 = vmatpush.msra.mxu0 %v415
      %429 = vmatpush.msra.mxu0 %v414
      %430 = vmatpush.msra.mxu0 %v413
      %431 = vmatpush.msra.mxu0 %v412
      %432 = vmatpush.msra.mxu0 %v411
      %433 = vmatpush.msra.mxu0 %v410
      %434 = vmatpush.msra.mxu0 %v409
      %435 = vmatpush.msra.mxu0 %v408
      %436 = vmatpush.msra.mxu0 %v407
      %437 = vmatpush.msra.mxu0 %v406
      %438 = vmatmul.f32.gmra.mxu0 %v389
      %v439 = vpop.f32.mrf.mxu0
      %v440 = vadd.f32 0.0, %v439
      %441 = vmatmul.f32.gmra.mxu0 %v390
      %v442 = vpop.f32.mrf.mxu0
      %v443 = vadd.f32 0.0, %v442
      %444 = vmatmul.f32.gmra.mxu0 %v391
      %v445 = vpop.f32.mrf.mxu0
      %v446 = vadd.f32 0.0, %v445
      %447 = vmatmul.f32.gmra.mxu0 %v392
      %v448 = vpop.f32.mrf.mxu0
      %v449 = vadd.f32 0.0, %v448
      %450 = vmatmul.f32.gmra.mxu0 %v393
      %v451 = vpop.f32.mrf.mxu0
      %v452 = vadd.f32 0.0, %v451
      %453 = vmatmul.f32.gmra.mxu0 %v394
      %v454 = vpop.f32.mrf.mxu0
      %v455 = vadd.f32 0.0, %v454
      %456 = vmatmul.f32.gmra.mxu0 %v395
      %v457 = vpop.f32.mrf.mxu0
      %v458 = vadd.f32 0.0, %v457
      %459 = vmatmul.f32.gmra.mxu0 %v396
      %v460 = vpop.f32.mrf.mxu0
      %v461 = vadd.f32 0.0, %v460
      %462 = vdwg.mxu0
      %v463 = vadd.f32 %v397, %v440
      %v464 = vadd.f32 %v398, %v443
      %v465 = vadd.f32 %v399, %v446
      %v466 = vadd.f32 %v400, %v449
      %v467 = vadd.f32 %v401, %v452
      %v468 = vadd.f32 %v402, %v455
      %v469 = vadd.f32 %v403, %v458
      %v470 = vadd.f32 %v404, %v461
      %471 = vst [vmem:[#allocation2] sm:$0xff] %v463
      %472 = vst [vmem:[#allocation2 + $0x8] sm:$0xff] %v464
      %473 = vst [vmem:[#allocation2 + $0x10] sm:$0xff] %v465
      %474 = vst [vmem:[#allocation2 + $0x18] sm:$0xff] %v466
      %475 = vst [vmem:[#allocation2 + $0x20] sm:$0xff] %v467
      %476 = vst [vmem:[#allocation2 + $0x28] sm:$0xff] %v468
      %477 = vst [vmem:[#allocation2 + $0x30] sm:$0xff] %v469
      %478 = vst [vmem:[#allocation2 + $0x38] sm:$0xff] %v470
      %v479 = vld [vmem:[%s272 + $0x1] sm:$0xff]
      %v480 = vld [vmem:[%s272 + $0x11] sm:$0xff]
      %v481 = vld [vmem:[%s272 + $0x21] sm:$0xff]
      %v482 = vld [vmem:[%s272 + $0x31] sm:$0xff]
      %v483 = vld [vmem:[%s272 + $0x41] sm:$0xff]
      %v484 = vld [vmem:[%s272 + $0x51] sm:$0xff]
      %v485 = vld [vmem:[%s272 + $0x61] sm:$0xff]
      %v486 = vld [vmem:[%s272 + $0x71] sm:$0xff]
      %v487 = vld [vmem:[#allocation2] sm:$0xff]
      %v488 = vld [vmem:[#allocation2 + $0x8] sm:$0xff]
      %v489 = vld [vmem:[#allocation2 + $0x10] sm:$0xff]
      %v490 = vld [vmem:[#allocation2 + $0x18] sm:$0xff]
      %v491 = vld [vmem:[#allocation2 + $0x20] sm:$0xff]
      %v492 = vld [vmem:[#allocation2 + $0x28] sm:$0xff]
      %v493 = vld [vmem:[#allocation2 + $0x30] sm:$0xff]
      %v494 = vld [vmem:[#allocation2 + $0x38] sm:$0xff]
      %s495 = scalar_lea.vmem %s276, 256
      %v496 = vld [vmem:[%s495] sm:$0xff]
      %v497 = vld [vmem:[%s495 + $0x8] sm:$0xff]
      %v498 = vld [vmem:[%s495 + $0x10] sm:$0xff]
      %v499 = vld [vmem:[%s495 + $0x18] sm:$0xff]
      %v500 = vld [vmem:[%s495 + $0x20] sm:$0xff]
      %v501 = vld [vmem:[%s495 + $0x28] sm:$0xff]
      %v502 = vld [vmem:[%s495 + $0x30] sm:$0xff]
      %v503 = vld [vmem:[%s495 + $0x38] sm:$0xff]
      %v504 = vld [vmem:[%s495 + $0x40] sm:$0xff]
      %v505 = vld [vmem:[%s495 + $0x48] sm:$0xff]
      %v506 = vld [vmem:[%s495 + $0x50] sm:$0xff]
      %v507 = vld [vmem:[%s495 + $0x58] sm:$0xff]
      %v508 = vld [vmem:[%s495 + $0x60] sm:$0xff]
      %v509 = vld [vmem:[%s495 + $0x68] sm:$0xff]
      %v510 = vld [vmem:[%s495 + $0x70] sm:$0xff]
      %v511 = vld [vmem:[%s495 + $0x78] sm:$0xff]
      %512 = vmatpush.msra.mxu0 %v511
      %513 = vmatpush.msra.mxu0 %v510
      %514 = vmatpush.msra.mxu0 %v509
      %515 = vmatpush.msra.mxu0 %v508
      %516 = vmatpush.msra.mxu0 %v507
      %517 = vmatpush.msra.mxu0 %v506
      %518 = vmatpush.msra.mxu0 %v505
      %519 = vmatpush.msra.mxu0 %v504
      %520 = vmatpush.msra.mxu0 %v503
      %521 = vmatpush.msra.mxu0 %v502
      %522 = vmatpush.msra.mxu0 %v501
      %523 = vmatpush.msra.mxu0 %v500
      %524 = vmatpush.msra.mxu0 %v499
      %525 = vmatpush.msra.mxu0 %v498
      %526 = vmatpush.msra.mxu0 %v497
      %527 = vmatpush.msra.mxu0 %v496
      %528 = vmatmul.f32.gmra.mxu0 %v479
      %v529 = vpop.f32.mrf.mxu0
      %v530 = vadd.f32 0.0, %v529
      %531 = vmatmul.f32.gmra.mxu0 %v480
      %v532 = vpop.f32.mrf.mxu0
      %v533 = vadd.f32 0.0, %v532
      %534 = vmatmul.f32.gmra.mxu0 %v481
      %v535 = vpop.f32.mrf.mxu0
      %v536 = vadd.f32 0.0, %v535
      %537 = vmatmul.f32.gmra.mxu0 %v482
      %v538 = vpop.f32.mrf.mxu0
      %v539 = vadd.f32 0.0, %v538
      %540 = vmatmul.f32.gmra.mxu0 %v483
      %v541 = vpop.f32.mrf.mxu0
      %v542 = vadd.f32 0.0, %v541
      %543 = vmatmul.f32.gmra.mxu0 %v484
      %v544 = vpop.f32.mrf.mxu0
      %v545 = vadd.f32 0.0, %v544
      %546 = vmatmul.f32.gmra.mxu0 %v485
      %v547 = vpop.f32.mrf.mxu0
      %v548 = vadd.f32 0.0, %v547
      %549 = vmatmul.f32.gmra.mxu0 %v486
      %v550 = vpop.f32.mrf.mxu0
      %v551 = vadd.f32 0.0, %v550
      %552 = vdwg.mxu0
      %v553 = vadd.f32 %v487, %v530
      %v554 = vadd.f32 %v488, %v533
      %v555 = vadd.f32 %v489, %v536
      %v556 = vadd.f32 %v490, %v539
      %v557 = vadd.f32 %v491, %v542
      %v558 = vadd.f32 %v492, %v545
      %v559 = vadd.f32 %v493, %v548
      %v560 = vadd.f32 %v494, %v551
      %561 = vst [vmem:[#allocation2] sm:$0xff] %v553
      %562 = vst [vmem:[#allocation2 + $0x8] sm:$0xff] %v554
      %563 = vst [vmem:[#allocation2 + $0x10] sm:$0xff] %v555
      %564 = vst [vmem:[#allocation2 + $0x18] sm:$0xff] %v556
      %565 = vst [vmem:[#allocation2 + $0x20] sm:$0xff] %v557
      %566 = vst [vmem:[#allocation2 + $0x28] sm:$0xff] %v558
      %567 = vst [vmem:[#allocation2 + $0x30] sm:$0xff] %v559
      %568 = vst [vmem:[#allocation2 + $0x38] sm:$0xff] %v560
      %s569 = scalar_lea.vmem %s272, 288
      %v570 = vld [vmem:[%s569] sm:$0xff]
      %v571 = vld [vmem:[%s569 + $0x10] sm:$0xff]
      %v572 = vld [vmem:[%s569 + $0x20] sm:$0xff]
      %v573 = vld [vmem:[%s569 + $0x30] sm:$0xff]
      %v574 = vld [vmem:[%s569 + $0x40] sm:$0xff]
      %v575 = vld [vmem:[%s569 + $0x50] sm:$0xff]
      %v576 = vld [vmem:[%s569 + $0x60] sm:$0xff]
      %v577 = vld [vmem:[%s569 + $0x70] sm:$0xff]
      %v578 = vld [vmem:[#allocation2] sm:$0xff]
      %v579 = vld [vmem:[#allocation2 + $0x8] sm:$0xff]
      %v580 = vld [vmem:[#allocation2 + $0x10] sm:$0xff]
      %v581 = vld [vmem:[#allocation2 + $0x18] sm:$0xff]
      %v582 = vld [vmem:[#allocation2 + $0x20] sm:$0xff]
      %v583 = vld [vmem:[#allocation2 + $0x28] sm:$0xff]
      %v584 = vld [vmem:[#allocation2 + $0x30] sm:$0xff]
      %v585 = vld [vmem:[#allocation2 + $0x38] sm:$0xff]
      %s586 = scalar_lea.vmem %s276, 384
      %v587 = vld [vmem:[%s586] sm:$0xff]
      %v588 = vld [vmem:[%s586 + $0x8] sm:$0xff]
      %v589 = vld [vmem:[%s586 + $0x10] sm:$0xff]
      %v590 = vld [vmem:[%s586 + $0x18] sm:$0xff]
      %v591 = vld [vmem:[%s586 + $0x20] sm:$0xff]
      %v592 = vld [vmem:[%s586 + $0x28] sm:$0xff]
      %v593 = vld [vmem:[%s586 + $0x30] sm:$0xff]
      %v594 = vld [vmem:[%s586 + $0x38] sm:$0xff]
      %v595 = vld [vmem:[%s586 + $0x40] sm:$0xff]
      %v596 = vld [vmem:[%s586 + $0x48] sm:$0xff]
      %v597 = vld [vmem:[%s586 + $0x50] sm:$0xff]
      %v598 = vld [vmem:[%s586 + $0x58] sm:$0xff]
      %v599 = vld [vmem:[%s586 + $0x60] sm:$0xff]
      %v600 = vld [vmem:[%s586 + $0x68] sm:$0xff]
      %v601 = vld [vmem:[%s586 + $0x70] sm:$0xff]
      %v602 = vld [vmem:[%s586 + $0x78] sm:$0xff]
      %603 = vmatpush.msra.mxu0 %v602
      %604 = vmatpush.msra.mxu0 %v601
      %605 = vmatpush.msra.mxu0 %v600
      %606 = vmatpush.msra.mxu0 %v599
      %607 = vmatpush.msra.mxu0 %v598
      %608 = vmatpush.msra.mxu0 %v597
      %609 = vmatpush.msra.mxu0 %v596
      %610 = vmatpush.msra.mxu0 %v595
      %611 = vmatpush.msra.mxu0 %v594
      %612 = vmatpush.msra.mxu0 %v593
      %613 = vmatpush.msra.mxu0 %v592
      %614 = vmatpush.msra.mxu0 %v591
      %615 = vmatpush.msra.mxu0 %v590
      %616 = vmatpush.msra.mxu0 %v589
      %617 = vmatpush.msra.mxu0 %v588
      %618 = vmatpush.msra.mxu0 %v587
      %619 = vmatmul.f32.gmra.mxu0 %v570
      %v620 = vpop.f32.mrf.mxu0
      %v621 = vadd.f32 0.0, %v620
      %622 = vmatmul.f32.gmra.mxu0 %v571
      %v623 = vpop.f32.mrf.mxu0
      %v624 = vadd.f32 0.0, %v623
      %625 = vmatmul.f32.gmra.mxu0 %v572
      %v626 = vpop.f32.mrf.mxu0
      %v627 = vadd.f32 0.0, %v626
      %628 = vmatmul.f32.gmra.mxu0 %v573
      %v629 = vpop.f32.mrf.mxu0
      %v630 = vadd.f32 0.0, %v629
      %631 = vmatmul.f32.gmra.mxu0 %v574
      %v632 = vpop.f32.mrf.mxu0
      %v633 = vadd.f32 0.0, %v632
      %634 = vmatmul.f32.gmra.mxu0 %v575
      %v635 = vpop.f32.mrf.mxu0
      %v636 = vadd.f32 0.0, %v635
      %637 = vmatmul.f32.gmra.mxu0 %v576
      %v638 = vpop.f32.mrf.mxu0
      %v639 = vadd.f32 0.0, %v638
      %640 = vmatmul.f32.gmra.mxu0 %v577
      %v641 = vpop.f32.mrf.mxu0
      %v642 = vadd.f32 0.0, %v641
      %643 = vdwg.mxu0
      %v644 = vadd.f32 %v578, %v621
      %v645 = vadd.f32 %v579, %v624
      %v646 = vadd.f32 %v580, %v627
      %v647 = vadd.f32 %v581, %v630
      %v648 = vadd.f32 %v582, %v633
      %v649 = vadd.f32 %v583, %v636
      %v650 = vadd.f32 %v584, %v639
      %v651 = vadd.f32 %v585, %v642
      %652 = vst [vmem:[#allocation2] sm:$0xff] %v644
      %653 = vst [vmem:[#allocation2 + $0x8] sm:$0xff] %v645
      %654 = vst [vmem:[#allocation2 + $0x10] sm:$0xff] %v646
      %655 = vst [vmem:[#allocation2 + $0x18] sm:$0xff] %v647
      %656 = vst [vmem:[#allocation2 + $0x20] sm:$0xff] %v648
      %657 = vst [vmem:[#allocation2 + $0x28] sm:$0xff] %v649
      %658 = vst [vmem:[#allocation2 + $0x30] sm:$0xff] %v650
      %659 = vst [vmem:[#allocation2 + $0x38] sm:$0xff] %v651
      %s660 = scalar_lea.vmem %s272, 432
      %v661 = vld [vmem:[%s660] sm:$0xff]
      %v662 = vld [vmem:[%s660 + $0x10] sm:$0xff]
      %v663 = vld [vmem:[%s660 + $0x20] sm:$0xff]
      %v664 = vld [vmem:[%s660 + $0x30] sm:$0xff]
      %v665 = vld [vmem:[%s660 + $0x40] sm:$0xff]
      %v666 = vld [vmem:[%s660 + $0x50] sm:$0xff]
      %v667 = vld [vmem:[%s660 + $0x60] sm:$0xff]
      %v668 = vld [vmem:[%s660 + $0x70] sm:$0xff]
      %v669 = vld [vmem:[#allocation2] sm:$0xff]
      %v670 = vld [vmem:[#allocation2 + $0x8] sm:$0xff]
      %v671 = vld [vmem:[#allocation2 + $0x10] sm:$0xff]
      %v672 = vld [vmem:[#allocation2 + $0x18] sm:$0xff]
      %v673 = vld [vmem:[#allocation2 + $0x20] sm:$0xff]
      %v674 = vld [vmem:[#allocation2 + $0x28] sm:$0xff]
      %v675 = vld [vmem:[#allocation2 + $0x30] sm:$0xff]
      %v676 = vld [vmem:[#allocation2 + $0x38] sm:$0xff]
      %s677 = scalar_lea.vmem %s276, 512
      %v678 = vld [vmem:[%s677] sm:$0xff]
      %v679 = vld [vmem:[%s677 + $0x8] sm:$0xff]
      %v680 = vld [vmem:[%s677 + $0x10] sm:$0xff]
      %v681 = vld [vmem:[%s677 + $0x18] sm:$0xff]
      %v682 = vld [vmem:[%s677 + $0x20] sm:$0xff]
      %v683 = vld [vmem:[%s677 + $0x28] sm:$0xff]
      %v684 = vld [vmem:[%s677 + $0x30] sm:$0xff]
      %v685 = vld [vmem:[%s677 + $0x38] sm:$0xff]
      %v686 = vld [vmem:[%s677 + $0x40] sm:$0xff]
      %v687 = vld [vmem:[%s677 + $0x48] sm:$0xff]
      %v688 = vld [vmem:[%s677 + $0x50] sm:$0xff]
      %v689 = vld [vmem:[%s677 + $0x58] sm:$0xff]
      %v690 = vld [vmem:[%s677 + $0x60] sm:$0xff]
      %v691 = vld [vmem:[%s677 + $0x68] sm:$0xff]
      %v692 = vld [vmem:[%s677 + $0x70] sm:$0xff]
      %v693 = vld [vmem:[%s677 + $0x78] sm:$0xff]
      %694 = vmatpush.msra.mxu0 %v693
      %695 = vmatpush.msra.mxu0 %v692
      %696 = vmatpush.msra.mxu0 %v691
      %697 = vmatpush.msra.mxu0 %v690
      %698 = vmatpush.msra.mxu0 %v689
      %699 = vmatpush.msra.mxu0 %v688
      %700 = vmatpush.msra.mxu0 %v687
      %701 = vmatpush.msra.mxu0 %v686
      %702 = vmatpush.msra.mxu0 %v685
      %703 = vmatpush.msra.mxu0 %v684
      %704 = vmatpush.msra.mxu0 %v683
      %705 = vmatpush.msra.mxu0 %v682
      %706 = vmatpush.msra.mxu0 %v681
      %707 = vmatpush.msra.mxu0 %v680
      %708 = vmatpush.msra.mxu0 %v679
      %709 = vmatpush.msra.mxu0 %v678
      %710 = vmatmul.f32.gmra.mxu0 %v661
      %v711 = vpop.f32.mrf.mxu0
      %v712 = vadd.f32 0.0, %v711
      %713 = vmatmul.f32.gmra.mxu0 %v662
      %v714 = vpop.f32.mrf.mxu0
      %v715 = vadd.f32 0.0, %v714
      %716 = vmatmul.f32.gmra.mxu0 %v663
      %v717 = vpop.f32.mrf.mxu0
      %v718 = vadd.f32 0.0, %v717
      %719 = vmatmul.f32.gmra.mxu0 %v664
      %v720 = vpop.f32.mrf.mxu0
      %v721 = vadd.f32 0.0, %v720
      %722 = vmatmul.f32.gmra.mxu0 %v665
      %v723 = vpop.f32.mrf.mxu0
      %v724 = vadd.f32 0.0, %v723
      %725 = vmatmul.f32.gmra.mxu0 %v666
      %v726 = vpop.f32.mrf.mxu0
      %v727 = vadd.f32 0.0, %v726
      %728 = vmatmul.f32.gmra.mxu0 %v667
      %v729 = vpop.f32.mrf.mxu0
      %v730 = vadd.f32 0.0, %v729
      %731 = vmatmul.f32.gmra.mxu0 %v668
      %v732 = vpop.f32.mrf.mxu0
      %v733 = vadd.f32 0.0, %v732
      %734 = vdwg.mxu0
      %v735 = vadd.f32 %v669, %v712
      %v736 = vadd.f32 %v670, %v715
      %v737 = vadd.f32 %v671, %v718
      %v738 = vadd.f32 %v672, %v721
      %v739 = vadd.f32 %v673, %v724
      %v740 = vadd.f32 %v674, %v727
      %v741 = vadd.f32 %v675, %v730
      %v742 = vadd.f32 %v676, %v733
      %743 = vst [vmem:[#allocation2] sm:$0xff] %v735
      %744 = vst [vmem:[#allocation2 + $0x8] sm:$0xff] %v736
      %745 = vst [vmem:[#allocation2 + $0x10] sm:$0xff] %v737
      %746 = vst [vmem:[#allocation2 + $0x18] sm:$0xff] %v738
      %747 = vst [vmem:[#allocation2 + $0x20] sm:$0xff] %v739
      %748 = vst [vmem:[#allocation2 + $0x28] sm:$0xff] %v740
      %749 = vst [vmem:[#allocation2 + $0x30] sm:$0xff] %v741
      %750 = vst [vmem:[#allocation2 + $0x38] sm:$0xff] %v742
      %v751 = vld [vmem:[%s569 + $0x1] sm:$0xff]
      %v752 = vld [vmem:[%s569 + $0x11] sm:$0xff]
      %v753 = vld [vmem:[%s569 + $0x21] sm:$0xff]
      %v754 = vld [vmem:[%s569 + $0x31] sm:$0xff]
      %v755 = vld [vmem:[%s569 + $0x41] sm:$0xff]
      %v756 = vld [vmem:[%s569 + $0x51] sm:$0xff]
      %v757 = vld [vmem:[%s569 + $0x61] sm:$0xff]
      %v758 = vld [vmem:[%s569 + $0x71] sm:$0xff]
      %v759 = vld [vmem:[#allocation2] sm:$0xff]
      %v760 = vld [vmem:[#allocation2 + $0x8] sm:$0xff]
      %v761 = vld [vmem:[#allocation2 + $0x10] sm:$0xff]
      %v762 = vld [vmem:[#allocation2 + $0x18] sm:$0xff]
      %v763 = vld [vmem:[#allocation2 + $0x20] sm:$0xff]
      %v764 = vld [vmem:[#allocation2 + $0x28] sm:$0xff]
      %v765 = vld [vmem:[#allocation2 + $0x30] sm:$0xff]
      %v766 = vld [vmem:[#allocation2 + $0x38] sm:$0xff]
      %s767 = scalar_lea.vmem %s276, 640
      %v768 = vld [vmem:[%s767] sm:$0xff]
      %v769 = vld [vmem:[%s767 + $0x8] sm:$0xff]
      %v770 = vld [vmem:[%s767 + $0x10] sm:$0xff]
      %v771 = vld [vmem:[%s767 + $0x18] sm:$0xff]
      %v772 = vld [vmem:[%s767 + $0x20] sm:$0xff]
      %v773 = vld [vmem:[%s767 + $0x28] sm:$0xff]
      %v774 = vld [vmem:[%s767 + $0x30] sm:$0xff]
      %v775 = vld [vmem:[%s767 + $0x38] sm:$0xff]
      %v776 = vld [vmem:[%s767 + $0x40] sm:$0xff]
      %v777 = vld [vmem:[%s767 + $0x48] sm:$0xff]
      %v778 = vld [vmem:[%s767 + $0x50] sm:$0xff]
      %v779 = vld [vmem:[%s767 + $0x58] sm:$0xff]
      %v780 = vld [vmem:[%s767 + $0x60] sm:$0xff]
      %v781 = vld [vmem:[%s767 + $0x68] sm:$0xff]
      %v782 = vld [vmem:[%s767 + $0x70] sm:$0xff]
      %v783 = vld [vmem:[%s767 + $0x78] sm:$0xff]
      %784 = vmatpush.msra.mxu0 %v783
      %785 = vmatpush.msra.mxu0 %v782
      %786 = vmatpush.msra.mxu0 %v781
      %787 = vmatpush.msra.mxu0 %v780
      %788 = vmatpush.msra.mxu0 %v779
      %789 = vmatpush.msra.mxu0 %v778
      %790 = vmatpush.msra.mxu0 %v777
      %791 = vmatpush.msra.mxu0 %v776
      %792 = vmatpush.msra.mxu0 %v775
      %793 = vmatpush.msra.mxu0 %v774
      %794 = vmatpush.msra.mxu0 %v773
      %795 = vmatpush.msra.mxu0 %v772
      %796 = vmatpush.msra.mxu0 %v771
      %797 = vmatpush.msra.mxu0 %v770
      %798 = vmatpush.msra.mxu0 %v769
      %799 = vmatpush.msra.mxu0 %v768
      %800 = vmatmul.f32.gmra.mxu0 %v751
      %v801 = vpop.f32.mrf.mxu0
      %v802 = vadd.f32 0.0, %v801
      %803 = vmatmul.f32.gmra.mxu0 %v752
      %v804 = vpop.f32.mrf.mxu0
      %v805 = vadd.f32 0.0, %v804
      %806 = vmatmul.f32.gmra.mxu0 %v753
      %v807 = vpop.f32.mrf.mxu0
      %v808 = vadd.f32 0.0, %v807
      %809 = vmatmul.f32.gmra.mxu0 %v754
      %v810 = vpop.f32.mrf.mxu0
      %v811 = vadd.f32 0.0, %v810
      %812 = vmatmul.f32.gmra.mxu0 %v755
      %v813 = vpop.f32.mrf.mxu0
      %v814 = vadd.f32 0.0, %v813
      %815 = vmatmul.f32.gmra.mxu0 %v756
      %v816 = vpop.f32.mrf.mxu0
      %v817 = vadd.f32 0.0, %v816
      %818 = vmatmul.f32.gmra.mxu0 %v757
      %v819 = vpop.f32.mrf.mxu0
      %v820 = vadd.f32 0.0, %v819
      %821 = vmatmul.f32.gmra.mxu0 %v758
      %v822 = vpop.f32.mrf.mxu0
      %v823 = vadd.f32 0.0, %v822
      %824 = vdwg.mxu0
      %v825 = vadd.f32 %v759, %v802
      %v826 = vadd.f32 %v760, %v805
      %v827 = vadd.f32 %v761, %v808
      %v828 = vadd.f32 %v762, %v811
      %v829 = vadd.f32 %v763, %v814
      %v830 = vadd.f32 %v764, %v817
      %v831 = vadd.f32 %v765, %v820
      %v832 = vadd.f32 %v766, %v823
      %833 = vst [vmem:[#allocation2] sm:$0xff] %v825
      %834 = vst [vmem:[#allocation2 + $0x8] sm:$0xff] %v826
      %835 = vst [vmem:[#allocation2 + $0x10] sm:$0xff] %v827
      %836 = vst [vmem:[#allocation2 + $0x18] sm:$0xff] %v828
      %837 = vst [vmem:[#allocation2 + $0x20] sm:$0xff] %v829
      %838 = vst [vmem:[#allocation2 + $0x28] sm:$0xff] %v830
      %839 = vst [vmem:[#allocation2 + $0x30] sm:$0xff] %v831
      %840 = vst [vmem:[#allocation2 + $0x38] sm:$0xff] %v832
      %s841 = scalar_lea.vmem %s272, 16
      %v842 = vld [vmem:[%s841] sm:$0xff]
      %v843 = vld [vmem:[%s841 + $0x10] sm:$0xff]
      %v844 = vld [vmem:[%s841 + $0x20] sm:$0xff]
      %v845 = vld [vmem:[%s841 + $0x30] sm:$0xff]
      %v846 = vld [vmem:[%s841 + $0x40] sm:$0xff]
      %v847 = vld [vmem:[%s841 + $0x50] sm:$0xff]
      %v848 = vld [vmem:[%s841 + $0x60] sm:$0xff]
      %v849 = vld [vmem:[%s841 + $0x70] sm:$0xff]
      %v850 = vld [vmem:[#allocation2] sm:$0xff]
      %v851 = vld [vmem:[#allocation2 + $0x8] sm:$0xff]
      %v852 = vld [vmem:[#allocation2 + $0x10] sm:$0xff]
      %v853 = vld [vmem:[#allocation2 + $0x18] sm:$0xff]
      %v854 = vld [vmem:[#allocation2 + $0x20] sm:$0xff]
      %v855 = vld [vmem:[#allocation2 + $0x28] sm:$0xff]
      %v856 = vld [vmem:[#allocation2 + $0x30] sm:$0xff]
      %v857 = vld [vmem:[#allocation2 + $0x38] sm:$0xff]
      %s858 = scalar_lea.vmem %s276, 768
      %v859 = vld [vmem:[%s858] sm:$0xff]
      %v860 = vld [vmem:[%s858 + $0x8] sm:$0xff]
      %v861 = vld [vmem:[%s858 + $0x10] sm:$0xff]
      %v862 = vld [vmem:[%s858 + $0x18] sm:$0xff]
      %v863 = vld [vmem:[%s858 + $0x20] sm:$0xff]
      %v864 = vld [vmem:[%s858 + $0x28] sm:$0xff]
      %v865 = vld [vmem:[%s858 + $0x30] sm:$0xff]
      %v866 = vld [vmem:[%s858 + $0x38] sm:$0xff]
      %v867 = vld [vmem:[%s858 + $0x40] sm:$0xff]
      %v868 = vld [vmem:[%s858 + $0x48] sm:$0xff]
      %v869 = vld [vmem:[%s858 + $0x50] sm:$0xff]
      %v870 = vld [vmem:[%s858 + $0x58] sm:$0xff]
      %v871 = vld [vmem:[%s858 + $0x60] sm:$0xff]
      %v872 = vld [vmem:[%s858 + $0x68] sm:$0xff]
      %v873 = vld [vmem:[%s858 + $0x70] sm:$0xff]
      %v874 = vld [vmem:[%s858 + $0x78] sm:$0xff]
      %875 = vmatpush.msra.mxu0 %v874
      %876 = vmatpush.msra.mxu0 %v873
      %877 = vmatpush.msra.mxu0 %v872
      %878 = vmatpush.msra.mxu0 %v871
      %879 = vmatpush.msra.mxu0 %v870
      %880 = vmatpush.msra.mxu0 %v869
      %881 = vmatpush.msra.mxu0 %v868
      %882 = vmatpush.msra.mxu0 %v867
      %883 = vmatpush.msra.mxu0 %v866
      %884 = vmatpush.msra.mxu0 %v865
      %885 = vmatpush.msra.mxu0 %v864
      %886 = vmatpush.msra.mxu0 %v863
      %887 = vmatpush.msra.mxu0 %v862
      %888 = vmatpush.msra.mxu0 %v861
      %889 = vmatpush.msra.mxu0 %v860
      %890 = vmatpush.msra.mxu0 %v859
      %891 = vmatmul.f32.gmra.mxu0 %v842
      %v892 = vpop.f32.mrf.mxu0
      %v893 = vadd.f32 0.0, %v892
      %894 = vmatmul.f32.gmra.mxu0 %v843
      %v895 = vpop.f32.mrf.mxu0
      %v896 = vadd.f32 0.0, %v895
      %897 = vmatmul.f32.gmra.mxu0 %v844
      %v898 = vpop.f32.mrf.mxu0
      %v899 = vadd.f32 0.0, %v898
      %900 = vmatmul.f32.gmra.mxu0 %v845
      %v901 = vpop.f32.mrf.mxu0
      %v902 = vadd.f32 0.0, %v901
      %903 = vmatmul.f32.gmra.mxu0 %v846
      %v904 = vpop.f32.mrf.mxu0
      %v905 = vadd.f32 0.0, %v904
      %906 = vmatmul.f32.gmra.mxu0 %v847
      %v907 = vpop.f32.mrf.mxu0
      %v908 = vadd.f32 0.0, %v907
      %909 = vmatmul.f32.gmra.mxu0 %v848
      %v910 = vpop.f32.mrf.mxu0
      %v911 = vadd.f32 0.0, %v910
      %912 = vmatmul.f32.gmra.mxu0 %v849
      %v913 = vpop.f32.mrf.mxu0
      %v914 = vadd.f32 0.0, %v913
      %915 = vdwg.mxu0
      %v916 = vadd.f32 %v850, %v893
      %v917 = vadd.f32 %v851, %v896
      %v918 = vadd.f32 %v852, %v899
      %v919 = vadd.f32 %v853, %v902
      %v920 = vadd.f32 %v854, %v905
      %v921 = vadd.f32 %v855, %v908
      %v922 = vadd.f32 %v856, %v911
      %v923 = vadd.f32 %v857, %v914
      %924 = vst [vmem:[#allocation2] sm:$0xff] %v916
      %925 = vst [vmem:[#allocation2 + $0x8] sm:$0xff] %v917
      %926 = vst [vmem:[#allocation2 + $0x10] sm:$0xff] %v918
      %927 = vst [vmem:[#allocation2 + $0x18] sm:$0xff] %v919
      %928 = vst [vmem:[#allocation2 + $0x20] sm:$0xff] %v920
      %929 = vst [vmem:[#allocation2 + $0x28] sm:$0xff] %v921
      %930 = vst [vmem:[#allocation2 + $0x30] sm:$0xff] %v922
      %931 = vst [vmem:[#allocation2 + $0x38] sm:$0xff] %v923
      %s932 = scalar_lea.vmem %s272, 160
      %v933 = vld [vmem:[%s932] sm:$0xff]
      %v934 = vld [vmem:[%s932 + $0x10] sm:$0xff]
      %v935 = vld [vmem:[%s932 + $0x20] sm:$0xff]
      %v936 = vld [vmem:[%s932 + $0x30] sm:$0xff]
      %v937 = vld [vmem:[%s932 + $0x40] sm:$0xff]
      %v938 = vld [vmem:[%s932 + $0x50] sm:$0xff]
      %v939 = vld [vmem:[%s932 + $0x60] sm:$0xff]
      %v940 = vld [vmem:[%s932 + $0x70] sm:$0xff]
      %v941 = vld [vmem:[#allocation2] sm:$0xff]
      %v942 = vld [vmem:[#allocation2 + $0x8] sm:$0xff]
      %v943 = vld [vmem:[#allocation2 + $0x10] sm:$0xff]
      %v944 = vld [vmem:[#allocation2 + $0x18] sm:$0xff]
      %v945 = vld [vmem:[#allocation2 + $0x20] sm:$0xff]
      %v946 = vld [vmem:[#allocation2 + $0x28] sm:$0xff]
      %v947 = vld [vmem:[#allocation2 + $0x30] sm:$0xff]
      %v948 = vld [vmem:[#allocation2 + $0x38] sm:$0xff]
      %s949 = scalar_lea.vmem %s276, 896
      %v950 = vld [vmem:[%s949] sm:$0xff]
      %v951 = vld [vmem:[%s949 + $0x8] sm:$0xff]
      %v952 = vld [vmem:[%s949 + $0x10] sm:$0xff]
      %v953 = vld [vmem:[%s949 + $0x18] sm:$0xff]
      %v954 = vld [vmem:[%s949 + $0x20] sm:$0xff]
      %v955 = vld [vmem:[%s949 + $0x28] sm:$0xff]
      %v956 = vld [vmem:[%s949 + $0x30] sm:$0xff]
      %v957 = vld [vmem:[%s949 + $0x38] sm:$0xff]
      %v958 = vld [vmem:[%s949 + $0x40] sm:$0xff]
      %v959 = vld [vmem:[%s949 + $0x48] sm:$0xff]
      %v960 = vld [vmem:[%s949 + $0x50] sm:$0xff]
      %v961 = vld [vmem:[%s949 + $0x58] sm:$0xff]
      %v962 = vld [vmem:[%s949 + $0x60] sm:$0xff]
      %v963 = vld [vmem:[%s949 + $0x68] sm:$0xff]
      %v964 = vld [vmem:[%s949 + $0x70] sm:$0xff]
      %v965 = vld [vmem:[%s949 + $0x78] sm:$0xff]
      %966 = vmatpush.msra.mxu0 %v965
      %967 = vmatpush.msra.mxu0 %v964
      %968 = vmatpush.msra.mxu0 %v963
      %969 = vmatpush.msra.mxu0 %v962
      %970 = vmatpush.msra.mxu0 %v961
      %971 = vmatpush.msra.mxu0 %v960
      %972 = vmatpush.msra.mxu0 %v959
      %973 = vmatpush.msra.mxu0 %v958
      %974 = vmatpush.msra.mxu0 %v957
      %975 = vmatpush.msra.mxu0 %v956
      %976 = vmatpush.msra.mxu0 %v955
      %977 = vmatpush.msra.mxu0 %v954
      %978 = vmatpush.msra.mxu0 %v953
      %979 = vmatpush.msra.mxu0 %v952
      %980 = vmatpush.msra.mxu0 %v951
      %981 = vmatpush.msra.mxu0 %v950
      %982 = vmatmul.f32.gmra.mxu0 %v933
      %v983 = vpop.f32.mrf.mxu0
      %v984 = vadd.f32 0.0, %v983
      %985 = vmatmul.f32.gmra.mxu0 %v934
      %v986 = vpop.f32.mrf.mxu0
      %v987 = vadd.f32 0.0, %v986
      %988 = vmatmul.f32.gmra.mxu0 %v935
      %v989 = vpop.f32.mrf.mxu0
      %v990 = vadd.f32 0.0, %v989
      %991 = vmatmul.f32.gmra.mxu0 %v936
      %v992 = vpop.f32.mrf.mxu0
      %v993 = vadd.f32 0.0, %v992
      %994 = vmatmul.f32.gmra.mxu0 %v937
      %v995 = vpop.f32.mrf.mxu0
      %v996 = vadd.f32 0.0, %v995
      %997 = vmatmul.f32.gmra.mxu0 %v938
      %v998 = vpop.f32.mrf.mxu0
      %v999 = vadd.f32 0.0, %v998
      %1000 = vmatmul.f32.gmra.mxu0 %v939
      %v1001 = vpop.f32.mrf.mxu0
      %v1002 = vadd.f32 0.0, %v1001
      %1003 = vmatmul.f32.gmra.mxu0 %v940
      %v1004 = vpop.f32.mrf.mxu0
      %v1005 = vadd.f32 0.0, %v1004
      %1006 = vdwg.mxu0
      %v1007 = vadd.f32 %v941, %v984
      %v1008 = vadd.f32 %v942, %v987
      %v1009 = vadd.f32 %v943, %v990
      %v1010 = vadd.f32 %v944, %v993
      %v1011 = vadd.f32 %v945, %v996
      %v1012 = vadd.f32 %v946, %v999
      %v1013 = vadd.f32 %v947, %v1002
      %v1014 = vadd.f32 %v948, %v1005
      %1015 = vst [vmem:[#allocation2] sm:$0xff] %v1007
      %1016 = vst [vmem:[#allocation2 + $0x8] sm:$0xff] %v1008
      %1017 = vst [vmem:[#allocation2 + $0x10] sm:$0xff] %v1009
      %1018 = vst [vmem:[#allocation2 + $0x18] sm:$0xff] %v1010
      %1019 = vst [vmem:[#allocation2 + $0x20] sm:$0xff] %v1011
      %1020 = vst [vmem:[#allocation2 + $0x28] sm:$0xff] %v1012
      %1021 = vst [vmem:[#allocation2 + $0x30] sm:$0xff] %v1013
      %1022 = vst [vmem:[#allocation2 + $0x38] sm:$0xff] %v1014
      %v1023 = vld [vmem:[%s841 + $0x1] sm:$0xff]
      %v1024 = vld [vmem:[%s841 + $0x11] sm:$0xff]
      %v1025 = vld [vmem:[%s841 + $0x21] sm:$0xff]
      %v1026 = vld [vmem:[%s841 + $0x31] sm:$0xff]
      %v1027 = vld [vmem:[%s841 + $0x41] sm:$0xff]
      %v1028 = vld [vmem:[%s841 + $0x51] sm:$0xff]
      %v1029 = vld [vmem:[%s841 + $0x61] sm:$0xff]
      %v1030 = vld [vmem:[%s841 + $0x71] sm:$0xff]
      %v1031 = vld [vmem:[#allocation2] sm:$0xff]
      %v1032 = vld [vmem:[#allocation2 + $0x8] sm:$0xff]
      %v1033 = vld [vmem:[#allocation2 + $0x10] sm:$0xff]
      %v1034 = vld [vmem:[#allocation2 + $0x18] sm:$0xff]
      %v1035 = vld [vmem:[#allocation2 + $0x20] sm:$0xff]
      %v1036 = vld [vmem:[#allocation2 + $0x28] sm:$0xff]
      %v1037 = vld [vmem:[#allocation2 + $0x30] sm:$0xff]
      %v1038 = vld [vmem:[#allocation2 + $0x38] sm:$0xff]
      %s1039 = scalar_lea.vmem %s276, 1024
      %v1040 = vld [vmem:[%s1039] sm:$0xff]
      %v1041 = vld [vmem:[%s1039 + $0x8] sm:$0xff]
      %v1042 = vld [vmem:[%s1039 + $0x10] sm:$0xff]
      %v1043 = vld [vmem:[%s1039 + $0x18] sm:$0xff]
      %v1044 = vld [vmem:[%s1039 + $0x20] sm:$0xff]
      %v1045 = vld [vmem:[%s1039 + $0x28] sm:$0xff]
      %v1046 = vld [vmem:[%s1039 + $0x30] sm:$0xff]
      %v1047 = vld [vmem:[%s1039 + $0x38] sm:$0xff]
      %v1048 = vld [vmem:[%s1039 + $0x40] sm:$0xff]
      %v1049 = vld [vmem:[%s1039 + $0x48] sm:$0xff]
      %v1050 = vld [vmem:[%s1039 + $0x50] sm:$0xff]
      %v1051 = vld [vmem:[%s1039 + $0x58] sm:$0xff]
      %v1052 = vld [vmem:[%s1039 + $0x60] sm:$0xff]
      %v1053 = vld [vmem:[%s1039 + $0x68] sm:$0xff]
      %v1054 = vld [vmem:[%s1039 + $0x70] sm:$0xff]
      %v1055 = vld [vmem:[%s1039 + $0x78] sm:$0xff]
      %1056 = vmatpush.msra.mxu0 %v1055
      %1057 = vmatpush.msra.mxu0 %v1054
      %1058 = vmatpush.msra.mxu0 %v1053
      %1059 = vmatpush.msra.mxu0 %v1052
      %1060 = vmatpush.msra.mxu0 %v1051
      %1061 = vmatpush.msra.mxu0 %v1050
      %1062 = vmatpush.msra.mxu0 %v1049
      %1063 = vmatpush.msra.mxu0 %v1048
      %1064 = vmatpush.msra.mxu0 %v1047
      %1065 = vmatpush.msra.mxu0 %v1046
      %1066 = vmatpush.msra.mxu0 %v1045
      %1067 = vmatpush.msra.mxu0 %v1044
      %1068 = vmatpush.msra.mxu0 %v1043
      %1069 = vmatpush.msra.mxu0 %v1042
      %1070 = vmatpush.msra.mxu0 %v1041
      %1071 = vmatpush.msra.mxu0 %v1040
      %1072 = vmatmul.f32.gmra.mxu0 %v1023
      %v1073 = vpop.f32.mrf.mxu0
      %v1074 = vadd.f32 0.0, %v1073
      %1075 = vmatmul.f32.gmra.mxu0 %v1024
      %v1076 = vpop.f32.mrf.mxu0
      %v1077 = vadd.f32 0.0, %v1076
      %1078 = vmatmul.f32.gmra.mxu0 %v1025
      %v1079 = vpop.f32.mrf.mxu0
      %v1080 = vadd.f32 0.0, %v1079
      %1081 = vmatmul.f32.gmra.mxu0 %v1026
      %v1082 = vpop.f32.mrf.mxu0
      %v1083 = vadd.f32 0.0, %v1082
      %1084 = vmatmul.f32.gmra.mxu0 %v1027
      %v1085 = vpop.f32.mrf.mxu0
      %v1086 = vadd.f32 0.0, %v1085
      %1087 = vmatmul.f32.gmra.mxu0 %v1028
      %v1088 = vpop.f32.mrf.mxu0
      %v1089 = vadd.f32 0.0, %v1088
      %1090 = vmatmul.f32.gmra.mxu0 %v1029
      %v1091 = vpop.f32.mrf.mxu0
      %v1092 = vadd.f32 0.0, %v1091
      %1093 = vmatmul.f32.gmra.mxu0 %v1030
      %v1094 = vpop.f32.mrf.mxu0
      %v1095 = vadd.f32 0.0, %v1094
      %1096 = vdwg.mxu0
      %v1097 = vadd.f32 %v1031, %v1074
      %v1098 = vadd.f32 %v1032, %v1077
      %v1099 = vadd.f32 %v1033, %v1080
      %v1100 = vadd.f32 %v1034, %v1083
      %v1101 = vadd.f32 %v1035, %v1086
      %v1102 = vadd.f32 %v1036, %v1089
      %v1103 = vadd.f32 %v1037, %v1092
      %v1104 = vadd.f32 %v1038, %v1095
      %1105 = vst [vmem:[#allocation2] sm:$0xff] %v1097
      %1106 = vst [vmem:[#allocation2 + $0x8] sm:$0xff] %v1098
      %1107 = vst [vmem:[#allocation2 + $0x10] sm:$0xff] %v1099
      %1108 = vst [vmem:[#allocation2 + $0x18] sm:$0xff] %v1100
      %1109 = vst [vmem:[#allocation2 + $0x20] sm:$0xff] %v1101
      %1110 = vst [vmem:[#allocation2 + $0x28] sm:$0xff] %v1102
      %1111 = vst [vmem:[#allocation2 + $0x30] sm:$0xff] %v1103
      %1112 = vst [vmem:[#allocation2 + $0x38] sm:$0xff] %v1104
      %v1113 = vld [vmem:[#allocation2] sm:$0xff]
      %v1114 = vld [vmem:[#allocation2 + $0x8] sm:$0xff]
      %v1115 = vld [vmem:[#allocation2 + $0x10] sm:$0xff]
      %v1116 = vld [vmem:[#allocation2 + $0x18] sm:$0xff]
      %v1117 = vld [vmem:[#allocation2 + $0x20] sm:$0xff]
      %v1118 = vld [vmem:[#allocation2 + $0x28] sm:$0xff]
      %v1119 = vld [vmem:[#allocation2 + $0x30] sm:$0xff]
      %v1120 = vld [vmem:[#allocation2 + $0x38] sm:$0xff]
      %v1121 = vld [vmem:[%s279] sm:$0x1]
      %v1123 = vperm.slane %v1121, 0
      %v1125 = vmul.f32 %v1113, %v1123
      %v1126 = vmul.f32 %v1114, %v1123
      %v1127 = vmul.f32 %v1115, %v1123
      %v1128 = vmul.f32 %v1116, %v1123
      %v1129 = vmul.f32 %v1117, %v1123
      %v1130 = vmul.f32 %v1118, %v1123
      %v1131 = vmul.f32 %v1119, %v1123
      %v1132 = vmul.f32 %v1120, %v1123
      %v1133 = vld [vmem:[%s282] sm:$0x1]
      %v1135 = vperm.slane %v1133, 0
      %v1137 = vadd.f32 %v1125, %v1135
      %v1138 = vadd.f32 %v1126, %v1135
      %v1139 = vadd.f32 %v1127, %v1135
      %v1140 = vadd.f32 %v1128, %v1135
      %v1141 = vadd.f32 %v1129, %v1135
      %v1142 = vadd.f32 %v1130, %v1135
      %v1143 = vadd.f32 %v1131, %v1135
      %v1144 = vadd.f32 %v1132, %v1135
      %s1145 = sld [smem:[#allocation3]]
      %vm1146 = vcmp.ge.f32.partialorder %v1137, 0.0
      %vm1147 = vcmp.ge.f32.partialorder %v1138, 0.0
      %vm1148 = vcmp.ge.f32.partialorder %v1139, 0.0
      %vm1149 = vcmp.ge.f32.partialorder %v1140, 0.0
      %vm1150 = vcmp.ge.f32.partialorder %v1141, 0.0
      %vm1151 = vcmp.ge.f32.partialorder %v1142, 0.0
      %vm1152 = vcmp.ge.f32.partialorder %v1143, 0.0
      %vm1153 = vcmp.ge.f32.partialorder %v1144, 0.0
      %v1154 = vstv %s1145
      %v1155 = vmul.f32 %v1154, %v1137
      %v1156 = vmul.f32 %v1154, %v1138
      %v1157 = vmul.f32 %v1154, %v1139
      %v1158 = vmul.f32 %v1154, %v1140
      %v1159 = vmul.f32 %v1154, %v1141
      %v1160 = vmul.f32 %v1154, %v1142
      %v1161 = vmul.f32 %v1154, %v1143
      %v1162 = vmul.f32 %v1154, %v1144
      %v1163 = vsel %vm1146, %v1137, %v1155
      %v1164 = vsel %vm1147, %v1138, %v1156
      %v1165 = vsel %vm1148, %v1139, %v1157
      %v1166 = vsel %vm1149, %v1140, %v1158
      %v1167 = vsel %vm1150, %v1141, %v1159
      %v1168 = vsel %vm1151, %v1142, %v1160
      %v1169 = vsel %vm1152, %v1143, %v1161
      %v1170 = vsel %vm1153, %v1144, %v1162
      %1171 = vst [vmem:[%s290] sm:$0xff] %v1163
      %1172 = vst [vmem:[%s290 + $0x8] sm:$0xff] %v1164
      %1173 = vst [vmem:[%s290 + $0x10] sm:$0xff] %v1165
      %1174 = vst [vmem:[%s290 + $0x18] sm:$0xff] %v1166
      %1175 = vst [vmem:[%s290 + $0x20] sm:$0xff] %v1167
      %1176 = vst [vmem:[%s290 + $0x28] sm:$0xff] %v1168
      %1177 = vst [vmem:[%s290 + $0x30] sm:$0xff] %v1169
      %1178 = vst [vmem:[%s290 + $0x38] sm:$0xff] %v1170
      %p1179 = scmp.lt.s32.totalorder %s21, 1
      %s1180 = scalar_select %p1179, %s21, 1
      %p1181 = scmp.lt.s32.totalorder %s22, 0
      %s1182 = scalar_select %p1181, %s22, 0
      %s1183 = smul.addr %s1180, 8
      %s1184 = sadd.s32 %s1182, %s1183
      %s1185 = smul.addr %s1184, 8
      %s1186 = scalar_lea.vmem %s5, %s1185
      // Predicated region
      $region41: #{resnet_block_forward.2} parent=39 // pred_check
        %p1187 = pneg %p174
      $region42: #{resnet_block_forward.2} parent=39 // pred_check_branch
        %1189 = sbr.rel (%p1187) target = $region44
      $region43: #{resnet_block_forward.2} parent=39 // pred_region
        _
      $region44: #{resnet_block_forward.2} parent=39 // pred_fallthru
        _
    $region40: #{resnet_block_forward.2} parent=5 // pred_fallthru
      _
    %p1190 = scmp.le.s32.totalorder 2, %s12
    // Predicated region
    $region45: #{resnet_block_forward.2} parent=5 // pred_check
      %p1191 = pneg %p1190
    $region46: #{resnet_block_forward.2} parent=5 // pred_check_branch
      %1193 = sbr.rel (%p1191) target = $region48
    $region47: #{resnet_block_forward.2} parent=5 // pred_region
      %s1194 = ssub.s32 %s12, 2
      // Predicated region
      $region49: #{resnet_block_forward.2} parent=47 // pred_check
        %p1195 = pneg %p180
      $region50: #{resnet_block_forward.2} parent=47 // pred_check_branch
        %1197 = sbr.rel (%p1195) target = $region52
      $region51: #{resnet_block_forward.2} parent=47 // pred_region
        %p1198 = scmp.lt.s32.totalorder %s23, 1
        %s1199 = scalar_select %p1198, %s23, 1
        %p1200 = scmp.lt.s32.totalorder %s24, 0
        %s1201 = scalar_select %p1200, %s24, 0
        %s1202 = smul.addr %s1199, 8
        %s1203 = sadd.s32 %s1201, %s1202
        %s1204 = smul.addr %s1203, 8
        %s1205 = scalar_lea.vmem %s5, %s1204
      $region52: #{resnet_block_forward.2} parent=47 // pred_fallthru
        _
    $region48: #{resnet_block_forward.2} parent=5 // pred_fallthru
      _
  $region6: #{resnet_block_forward.2} parent=0 // loop_footer
    %s16 = sadd.s32 1, %s12
  $region7: #{resnet_block_forward.2} parent=0 // loop_footer_branch
    %11 = sbr.rel target = $region3
  $region8: #{resnet_block_forward.2} parent=0 // loop_exit
    _

// kernel: resnet_block_forward.3
$region0: #{resnet_block_forward.3}
  #allocation0 [shape = 'u32[]', space=smem, size = 0x4, offset = 0x4, fixed_abs, tag = 'smem constant byte address 0x4 - core index']
  #allocation1 [shape = 'u32[72,128]{1,0:T(1,128)}', space=vmem, size = 0x9000, scoped, tag = 'internal scratch']
  #allocation2 [shape = 'f32[64,128]{1,0:T(8,128)}', space=vmem, size = 0x8000, scoped, tag = 'scratch operand']
  #allocation3 [shape = 'f32[1]{0:T(128)S(6)}', space=smem, size = 0x200, scoped, tag = 'scoped memory for resnet_block_forward.3']
  %s0 = inlined_call_operand.vmem [shape: f32[2,1,10,10,128], index: 0, kind: input, shape index: {}]
  %s1 = inlined_call_operand.vmem [shape: f32[9,128,128], index: 1, kind: input, shape index: {}]
  %s2 = inlined_call_operand.vmem [shape: f32[1,128], index: 2, kind: input, shape index: {}]
  %s3 = inlined_call_operand.vmem [shape: f32[1,128], index: 3, kind: input, shape index: {}]
  %s4 = inlined_call_operand.<no memory space> [shape: f32[1], index: 4, kind: input, shape index: {}]
  %s5 = inlined_call_operand.vmem [shape: f32[2,64,128], index: 5, kind: input, shape index: {}]
  %s6 = inlined_call_operand.vmem [shape: f32[128,128], index: 6, kind: input, shape index: {}]
  %s7 = inlined_call_operand.vmem [shape: f32[1,128], index: 7, kind: input, shape index: {}]
  %s8 = inlined_call_operand.vmem [shape: f32[2,64,128], index: 8, kind: output, shape index: {}]
  %s9 = sld [smem:[#allocation0]]
  $region65: #{resnet_block_forward.3} parent=0
    _
  %s11 = ssub.s32 1, %s9
  %s12 = scalar_select 0, %s11, %s9
  %13 = sst [smem:[#allocation3]] %s4
  loop: start=0, step=1, limit=4
  $region2: #{resnet_block_forward.3} parent=0 // loop_pre_header
    _
  $region3: #{resnet_block_forward.3} parent=0 // loop_header
    %s15 = sphi 0, %s19
    %p16 = scmp.ge.s32.totalorder %s15, 4
    %s22 = sphi 0, %s34
    %s23 = sphi 0, %s30
    %s24 = sphi 0, %s22
    %s25 = sphi 0, %s23
    %s26 = sphi 0, %s24
    %s27 = sphi 0, %s25
    %s37 = sphi 0, %s39
    %s40 = sphi 0, %s37
    %s41 = sphi 0, %s40
    %s57 = sphi 0, %s41
    %s63 = sphi 0, %s65
    %s66 = sphi 0, %s63
    %s67 = sphi 0, %s66
    %s83 = sphi 0, %s67
    %s89 = sphi 0, %s91
    %s92 = sphi 0, %s89
    %s93 = sphi 0, %s92
    %s109 = sphi 0, %s93
    %s115 = sphi 0, %s117
    %s118 = sphi 0, %s115
    %s119 = sphi 0, %s118
    %s135 = sphi 0, %s119
    %s139 = sphi 0, %s139
    %s141 = sphi 0, %s139
    %s142 = sphi 0, %s141
    %s156 = sphi 0, %s142
    %s162 = sphi 0, %s164
    %s165 = sphi 0, %s162
    %s166 = sphi 0, %s165
    %s182 = sphi 0, %s166
    %s188 = sphi 0, %s190
    %s191 = sphi 0, %s188
    %s192 = sphi 0, %s191
    %s208 = sphi 0, %s192
    %s214 = sphi 0, %s216
    %s217 = sphi 0, %s214
    %s218 = sphi 0, %s217
    %s234 = sphi 0, %s218
    %s242 = sphi 0, %s244
    %s245 = sphi 0, %s242
    %s246 = sphi 0, %s245
    %s262 = sphi 0, %s246
  $region4: #{resnet_block_forward.3} parent=0 // loop_header_branch
    %18 = sbr.rel (%p16) target = $region8
  $region5: #{resnet_block_forward.3} parent=0 // loop_body
    %s20 = ssub.s32 %s15, 1
    %s21 = ssub.s32 %s15, 2
    %s28 = sadd.s32 1, %s23
    %p29 = scmp.ge.s32.totalorder %s28, 1
    %s30 = scalar_select %p29, 0, %s28
    %s31 = sadd.s32 1, %s22
    %s32 = scalar_select %p29, %s31, %s22
    %p33 = scmp.ge.s32.totalorder %s32, 2
    %s34 = scalar_select %p33, 0, %s32
    %s35 = ssub.s32 %s22, %s34
    %p36 = scmp.eq.s32.totalorder %s35, 0
    %s38 = sadd.s32 %s37, 1
    %s39 = scalar_select %p36, %s37, %s38
    %p42 = pneg %p36
    %p43 = scmp.eq.s32.totalorder %s15, 1
    %p44 = por %p42, %p43
    %p45 = scmp.ne.s32.totalorder %s37, %s40
    %p46 = scmp.eq.s32.totalorder %s15, 0
    %p47 = por %p45, %p46
    %p48 = scmp.ne.s32.totalorder %s37, %s40
    %p49 = scmp.eq.s32.totalorder %s20, 1
    %p50 = por %p48, %p49
    %p51 = scmp.ne.s32.totalorder %s40, %s41
    %p52 = scmp.eq.s32.totalorder %s20, 0
    %p53 = por %p51, %p52
    %p54 = scmp.ne.s32.totalorder %s40, %s41
    %p55 = scmp.eq.s32.totalorder %s21, 1
    %p56 = por %p54, %p55
    %p58 = scmp.ne.s32.totalorder %s41, %s57
    %p59 = scmp.eq.s32.totalorder %s21, 0
    %p60 = por %p58, %p59
    %s61 = ssub.s32 %s23, %s30
    %p62 = scmp.eq.s32.totalorder %s61, 0
    %s64 = sadd.s32 %s63, 1
    %s65 = scalar_select %p62, %s63, %s64
    %p68 = pneg %p62
    %p69 = scmp.eq.s32.totalorder %s15, 1
    %p70 = por %p68, %p69
    %p71 = scmp.ne.s32.totalorder %s63, %s66
    %p72 = scmp.eq.s32.totalorder %s15, 0
    %p73 = por %p71, %p72
    %p74 = scmp.ne.s32.totalorder %s63, %s66
    %p75 = scmp.eq.s32.totalorder %s20, 1
    %p76 = por %p74, %p75
    %p77 = scmp.ne.s32.totalorder %s66, %s67
    %p78 = scmp.eq.s32.totalorder %s20, 0
    %p79 = por %p77, %p78
    %p80 = scmp.ne.s32.totalorder %s66, %s67
    %p81 = scmp.eq.s32.totalorder %s21, 1
    %p82 = por %p80, %p81
    %p84 = scmp.ne.s32.totalorder %s67, %s83
    %p85 = scmp.eq.s32.totalorder %s21, 0
    %p86 = por %p84, %p85
    %s87 = ssub.s32 %s23, %s30
    %p88 = scmp.eq.s32.totalorder %s87, 0
    %s90 = sadd.s32 %s89, 1
    %s91 = scalar_select %p88, %s89, %s90
    %p94 = pneg %p88
    %p95 = scmp.eq.s32.totalorder %s15, 1
    %p96 = por %p94, %p95
    %p97 = scmp.ne.s32.totalorder %s89, %s92
    %p98 = scmp.eq.s32.totalorder %s15, 0
    %p99 = por %p97, %p98
    %p100 = scmp.ne.s32.totalorder %s89, %s92
    %p101 = scmp.eq.s32.totalorder %s20, 1
    %p102 = por %p100, %p101
    %p103 = scmp.ne.s32.totalorder %s92, %s93
    %p104 = scmp.eq.s32.totalorder %s20, 0
    %p105 = por %p103, %p104
    %p106 = scmp.ne.s32.totalorder %s92, %s93
    %p107 = scmp.eq.s32.totalorder %s21, 1
    %p108 = por %p106, %p107
    %p110 = scmp.ne.s32.totalorder %s93, %s109
    %p111 = scmp.eq.s32.totalorder %s21, 0
    %p112 = por %p110, %p111
    %s113 = ssub.s32 %s23, %s30
    %p114 = scmp.eq.s32.totalorder %s113, 0
    %s116 = sadd.s32 %s115, 1
    %s117 = scalar_select %p114, %s115, %s116
    %p120 = pneg %p114
    %p121 = scmp.eq.s32.totalorder %s15, 1
    %p122 = por %p120, %p121
    %p123 = scmp.ne.s32.totalorder %s115, %s118
    %p124 = scmp.eq.s32.totalorder %s15, 0
    %p125 = por %p123, %p124
    %p126 = scmp.ne.s32.totalorder %s115, %s118
    %p127 = scmp.eq.s32.totalorder %s20, 1
    %p128 = por %p126, %p127
    %p129 = scmp.ne.s32.totalorder %s118, %s119
    %p130 = scmp.eq.s32.totalorder %s20, 0
    %p131 = por %p129, %p130
    %p132 = scmp.ne.s32.totalorder %s118, %s119
    %p133 = scmp.eq.s32.totalorder %s21, 1
    %p134 = por %p132, %p133
    %p136 = scmp.ne.s32.totalorder %s119, %s135
    %p137 = scmp.eq.s32.totalorder %s21, 0
    %p138 = por %p136, %p137
    %s140 = sadd.s32 %s139, 1
    %p143 = scmp.eq.s32.totalorder %s15, 1
    %p144 = scmp.ne.s32.totalorder %s139, %s141
    %p145 = scmp.eq.s32.totalorder %s15, 0
    %p146 = por %p144, %p145
    %p147 = scmp.ne.s32.totalorder %s139, %s141
    %p148 = scmp.eq.s32.totalorder %s20, 1
    %p149 = por %p147, %p148
    %p150 = scmp.ne.s32.totalorder %s141, %s142
    %p151 = scmp.eq.s32.totalorder %s20, 0
    %p152 = por %p150, %p151
    %p153 = scmp.ne.s32.totalorder %s141, %s142
    %p154 = scmp.eq.s32.totalorder %s21, 1
    %p155 = por %p153, %p154
    %p157 = scmp.ne.s32.totalorder %s142, %s156
    %p158 = scmp.eq.s32.totalorder %s21, 0
    %p159 = por %p157, %p158
    %s160 = ssub.s32 %s22, %s34
    %p161 = scmp.eq.s32.totalorder %s160, 0
    %s163 = sadd.s32 %s162, 1
    %s164 = scalar_select %p161, %s162, %s163
    %p167 = pneg %p161
    %p168 = scmp.eq.s32.totalorder %s15, 1
    %p169 = por %p167, %p168
    %p170 = scmp.ne.s32.totalorder %s162, %s165
    %p171 = scmp.eq.s32.totalorder %s15, 0
    %p172 = por %p170, %p171
    %p173 = scmp.ne.s32.totalorder %s162, %s165
    %p174 = scmp.eq.s32.totalorder %s20, 1
    %p175 = por %p173, %p174
    %p176 = scmp.ne.s32.totalorder %s165, %s166
    %p177 = scmp.eq.s32.totalorder %s20, 0
    %p178 = por %p176, %p177
    %p179 = scmp.ne.s32.totalorder %s165, %s166
    %p180 = scmp.eq.s32.totalorder %s21, 1
    %p181 = por %p179, %p180
    %p183 = scmp.ne.s32.totalorder %s166, %s182
    %p184 = scmp.eq.s32.totalorder %s21, 0
    %p185 = por %p183, %p184
    %s186 = ssub.s32 %s23, %s30
    %p187 = scmp.eq.s32.totalorder %s186, 0
    %s189 = sadd.s32 %s188, 1
    %s190 = scalar_select %p187, %s188, %s189
    %p193 = pneg %p187
    %p194 = scmp.eq.s32.totalorder %s15, 1
    %p195 = por %p193, %p194
    %p196 = scmp.ne.s32.totalorder %s188, %s191
    %p197 = scmp.eq.s32.totalorder %s15, 0
    %p198 = por %p196, %p197
    %p199 = scmp.ne.s32.totalorder %s188, %s191
    %p200 = scmp.eq.s32.totalorder %s20, 1
    %p201 = por %p199, %p200
    %p202 = scmp.ne.s32.totalorder %s191, %s192
    %p203 = scmp.eq.s32.totalorder %s20, 0
    %p204 = por %p202, %p203
    %p205 = scmp.ne.s32.totalorder %s191, %s192
    %p206 = scmp.eq.s32.totalorder %s21, 1
    %p207 = por %p205, %p206
    %p209 = scmp.ne.s32.totalorder %s192, %s208
    %p210 = scmp.eq.s32.totalorder %s21, 0
    %p211 = por %p209, %p210
    %s212 = ssub.s32 %s23, %s30
    %p213 = scmp.eq.s32.totalorder %s212, 0
    %s215 = sadd.s32 %s214, 1
    %s216 = scalar_select %p213, %s214, %s215
    %p219 = pneg %p213
    %p220 = scmp.eq.s32.totalorder %s15, 1
    %p221 = por %p219, %p220
    %p222 = scmp.ne.s32.totalorder %s214, %s217
    %p223 = scmp.eq.s32.totalorder %s15, 0
    %p224 = por %p222, %p223
    %p225 = scmp.ne.s32.totalorder %s214, %s217
    %p226 = scmp.eq.s32.totalorder %s20, 1
    %p227 = por %p225, %p226
    %p228 = scmp.ne.s32.totalorder %s217, %s218
    %p229 = scmp.eq.s32.totalorder %s20, 0
    %p230 = por %p228, %p229
    %p231 = scmp.ne.s32.totalorder %s217, %s218
    %p232 = scmp.eq.s32.totalorder %s21, 1
    %p233 = por %p231, %p232
    %p235 = scmp.ne.s32.totalorder %s218, %s234
    %p236 = scmp.eq.s32.totalorder %s21, 0
    %p237 = por %p235, %p236
    %s238 = ssub.s32 %s22, %s34
    %s239 = ssub.s32 %s23, %s30
    %s240 = sor.u32 %s238, %s239
    %p241 = scmp.eq.s32.totalorder %s240, 0
    %s243 = sadd.s32 %s242, 1
    %s244 = scalar_select %p241, %s242, %s243
    %p247 = pneg %p241
    %p248 = scmp.eq.s32.totalorder %s15, 1
    %p249 = por %p247, %p248
    %p250 = scmp.ne.s32.totalorder %s242, %s245
    %p251 = scmp.eq.s32.totalorder %s15, 0
    %p252 = por %p250, %p251
    %p253 = scmp.ne.s32.totalorder %s242, %s245
    %p254 = scmp.eq.s32.totalorder %s20, 1
    %p255 = por %p253, %p254
    %p256 = scmp.ne.s32.totalorder %s245, %s246
    %p257 = scmp.eq.s32.totalorder %s20, 0
    %p258 = por %p256, %p257
    %p259 = scmp.ne.s32.totalorder %s245, %s246
    %p260 = scmp.eq.s32.totalorder %s21, 1
    %p261 = por %p259, %p260
    %p263 = scmp.ne.s32.totalorder %s246, %s262
    %p264 = scmp.eq.s32.totalorder %s21, 0
    %p265 = por %p263, %p264
    %p266 = scmp.le.s32.totalorder 1, %s15
    %p267 = scmp.lt.s32.totalorder %s15, 3
    %p268 = pnand %p266, %p267
    %p269 = pneg %p268
    // Predicated region
    $region9: #{resnet_block_forward.3} parent=5 // pred_check
      _
    $region10: #{resnet_block_forward.3} parent=5 // pred_check_branch
      %271 = sbr.rel (%p268) target = $region12
    $region11: #{resnet_block_forward.3} parent=5 // pred_region
      %s272 = ssub.s32 %s15, 1
      // Predicated region
      $region13: #{resnet_block_forward.3} parent=11 // pred_check
        %p273 = pneg %p79
      $region14: #{resnet_block_forward.3} parent=11 // pred_check_branch
        %275 = sbr.rel (%p273) target = $region16
      $region15: #{resnet_block_forward.3} parent=11 // pred_region
        %p276 = scmp.lt.s32.totalorder %s25, 0
        %s277 = scalar_select %p276, %s25, 0
        %s278 = smul.addr %s277, 8
        %s279 = scalar_lea.vmem %s1, %s278
      $region16: #{resnet_block_forward.3} parent=11 // pred_fallthru
        _
      // Predicated region
      $region17: #{resnet_block_forward.3} parent=11 // pred_check
        %p280 = pneg %p105
      $region18: #{resnet_block_forward.3} parent=11 // pred_check_branch
        %282 = sbr.rel (%p280) target = $region20
      $region19: #{resnet_block_forward.3} parent=11 // pred_region
        %p283 = scmp.lt.s32.totalorder %s25, 0
        %s284 = scalar_select %p283, %s25, 0
        %s285 = scalar_lea.vmem %s2, %s284
      $region20: #{resnet_block_forward.3} parent=11 // pred_fallthru
        _
      // Predicated region
      $region21: #{resnet_block_forward.3} parent=11 // pred_check
        %p286 = pneg %p131
      $region22: #{resnet_block_forward.3} parent=11 // pred_check_branch
        %288 = sbr.rel (%p286) target = $region24
      $region23: #{resnet_block_forward.3} parent=11 // pred_region
        %p289 = scmp.lt.s32.totalorder %s25, 0
        %s290 = scalar_select %p289, %s25, 0
        %s291 = scalar_lea.vmem %s3, %s290
      $region24: #{resnet_block_forward.3} parent=11 // pred_fallthru
        _
      // Predicated region
      $region25: #{resnet_block_forward.3} parent=11 // pred_check
        %p292 = pneg %p152
      $region26: #{resnet_block_forward.3} parent=11 // pred_check_branch
        %294 = sbr.rel (%p292) target = $region28
      $region27: #{resnet_block_forward.3} parent=11 // pred_region
        _
      $region28: #{resnet_block_forward.3} parent=11 // pred_fallthru
        _
      // Predicated region
      $region29: #{resnet_block_forward.3} parent=11 // pred_check
        %p295 = pneg %p204
      $region30: #{resnet_block_forward.3} parent=11 // pred_check_branch
        %297 = sbr.rel (%p295) target = $region32
      $region31: #{resnet_block_forward.3} parent=11 // pred_region
        %p298 = scmp.lt.s32.totalorder %s25, 0
        %s299 = scalar_select %p298, %s25, 0
        %s300 = smul.addr %s299, 8
        %s301 = scalar_lea.vmem %s6, %s300
      $region32: #{resnet_block_forward.3} parent=11 // pred_fallthru
        _
      // Predicated region
      $region33: #{resnet_block_forward.3} parent=11 // pred_check
        %p302 = pneg %p230
      $region34: #{resnet_block_forward.3} parent=11 // pred_check_branch
        %304 = sbr.rel (%p302) target = $region36
      $region35: #{resnet_block_forward.3} parent=11 // pred_region
        %p305 = scmp.lt.s32.totalorder %s25, 0
        %s306 = scalar_select %p305, %s25, 0
        %s307 = scalar_lea.vmem %s7, %s306
      $region36: #{resnet_block_forward.3} parent=11 // pred_fallthru
        _
    $region12: #{resnet_block_forward.3} parent=5 // pred_fallthru
      _
    %p308 = scmp.lt.s32.totalorder %s15, 2
    // Predicated region
    $region37: #{resnet_block_forward.3} parent=5 // pred_check
      %p309 = pneg %p308
    $region38: #{resnet_block_forward.3} parent=5 // pred_check_branch
      %311 = sbr.rel (%p309) target = $region40
    $region39: #{resnet_block_forward.3} parent=5 // pred_region
      // Predicated region
      $region41: #{resnet_block_forward.3} parent=39 // pred_check
        %p312 = pneg %p47
      $region42: #{resnet_block_forward.3} parent=39 // pred_check_branch
        %314 = sbr.rel (%p312) target = $region44
      $region43: #{resnet_block_forward.3} parent=39 // pred_region
        %p315 = scmp.lt.s32.totalorder %s22, 1
        %s316 = scalar_select %p315, %s22, 1
        %s317 = smul.addr %s316, 20
        %s318 = smul.addr %s317, 8
        %s319 = scalar_lea.vmem %s0, %s318
      $region44: #{resnet_block_forward.3} parent=39 // pred_fallthru
        _
      // Predicated region
      $region45: #{resnet_block_forward.3} parent=39 // pred_check
        %p320 = pneg %p172
      $region46: #{resnet_block_forward.3} parent=39 // pred_check_branch
        %322 = sbr.rel (%p320) target = $region48
      $region47: #{resnet_block_forward.3} parent=39 // pred_region
        %p323 = scmp.lt.s32.totalorder %s22, 1
        %s324 = scalar_select %p323, %s22, 1
        %s325 = smul.addr %s324, 8
        %s326 = smul.addr %s325, 8
        %s327 = scalar_lea.vmem %s5, %s326
      $region48: #{resnet_block_forward.3} parent=39 // pred_fallthru
        _
    $region40: #{resnet_block_forward.3} parent=5 // pred_fallthru
      _
    %p328 = scmp.le.s32.totalorder 1, %s15
    %p329 = scmp.lt.s32.totalorder %s15, 3
    %p330 = pnand %p328, %p329
    %p331 = pneg %p330
    // Predicated region
    $region49: #{resnet_block_forward.3} parent=5 // pred_check
      _
    $region50: #{resnet_block_forward.3} parent=5 // pred_check_branch
      %333 = sbr.rel (%p330) target = $region52
    $region51: #{resnet_block_forward.3} parent=5 // pred_region
      %s334 = ssub.s32 %s15, 1
      %p335 = scmp.lt.s32.totalorder %s24, 1
      %s336 = scalar_select %p335, %s24, 1
      %s337 = smul.addr %s336, 20
      %s338 = smul.addr %s337, 8
      %s339 = scalar_lea.vmem %s0, %s338
      %p340 = pneg %p53
      %p341 = pneg %p50
      %p342 = scmp.lt.s32.totalorder %s25, 0
      %s343 = scalar_select %p342, %s25, 0
      %s344 = smul.addr %s343, 8
      %s345 = scalar_lea.vmem %s1, %s344
      %p346 = pneg %p79
      %p347 = pneg %p76
      %p348 = scmp.lt.s32.totalorder %s25, 0
      %s349 = scalar_select %p348, %s25, 0
      %s350 = scalar_lea.vmem %s2, %s349
      %p351 = pneg %p105
      %p352 = pneg %p102
      %p353 = scmp.lt.s32.totalorder %s25, 0
      %s354 = scalar_select %p353, %s25, 0
      %s355 = scalar_lea.vmem %s3, %s354
      %p356 = pneg %p131
      %p357 = pneg %p128
      %p358 = pneg %p152
      %p359 = pneg %p149
      %p360 = scmp.lt.s32.totalorder %s24, 1
      %s361 = scalar_select %p360, %s24, 1
      %s362 = smul.addr %s361, 8
      %s363 = smul.addr %s362, 8
      %s364 = scalar_lea.vmem %s5, %s363
      %p365 = pneg %p178
      %p366 = pneg %p175
      %p367 = scmp.lt.s32.totalorder %s25, 0
      %s368 = scalar_select %p367, %s25, 0
      %s369 = smul.addr %s368, 8
      %s370 = scalar_lea.vmem %s6, %s369
      %p371 = pneg %p204
      %p372 = pneg %p201
      %p373 = scmp.lt.s32.totalorder %s25, 0
      %s374 = scalar_select %p373, %s25, 0
      %s375 = scalar_lea.vmem %s7, %s374
      %p376 = pneg %p230
      %p377 = pneg %p227
      %p378 = pneg %p258
      %p379 = pneg %p255
      %p380 = scmp.lt.s32.totalorder %s24, 1
      %s381 = scalar_select %p380, %s24, 1
      %p382 = scmp.lt.s32.totalorder %s25, 0
      %s383 = scalar_select %p382, %s25, 0
      %s384 = smul.addr %s381, 8
      %s385 = sadd.s32 %s383, %s384
      %s386 = smul.addr %s385, 8
      %s387 = scalar_lea.vmem %s8, %s386
      %p388 = scmp.lt.s32.totalorder %s24, 1
      %s389 = scalar_select %p388, %s24, 1
      %s390 = smul.addr %s389, 20
      %s391 = smul.addr %s390, 8
      %s392 = scalar_lea.vmem %s0, %s391
      %p393 = scmp.lt.s32.totalorder %s25, 0
      %s394 = scalar_select %p393, %s25, 0
      %s395 = smul.addr %s394, 8
      %s396 = scalar_lea.vmem %s1, %s395
      %p397 = scmp.lt.s32.totalorder %s25, 0
      %s398 = scalar_select %p397, %s25, 0
      %s399 = scalar_lea.vmem %s2, %s398
      %p400 = scmp.lt.s32.totalorder %s25, 0
      %s401 = scalar_select %p400, %s25, 0
      %s402 = scalar_lea.vmem %s3, %s401
      %p403 = scmp.lt.s32.totalorder %s24, 1
      %s404 = scalar_select %p403, %s24, 1
      %s405 = smul.addr %s404, 8
      %s406 = smul.addr %s405, 8
      %s407 = scalar_lea.vmem %s5, %s406
      %p408 = scmp.lt.s32.totalorder %s25, 0
      %s409 = scalar_select %p408, %s25, 0
      %s410 = smul.addr %s409, 8
      %s411 = scalar_lea.vmem %s6, %s410
      %p412 = scmp.lt.s32.totalorder %s25, 0
      %s413 = scalar_select %p412, %s25, 0
      %s414 = scalar_lea.vmem %s7, %s413
      %p415 = scmp.lt.s32.totalorder %s24, 1
      %s416 = scalar_select %p415, %s24, 1
      %p417 = scmp.lt.s32.totalorder %s25, 0
      %s418 = scalar_select %p417, %s25, 0
      %s419 = smul.addr %s416, 8
      %s420 = sadd.s32 %s418, %s419
      %s421 = smul.addr %s420, 8
      %s422 = scalar_lea.vmem %s8, %s421
      %423 = vst [vmem:[#allocation2] sm:$0xff] 0.0
      %424 = vst [vmem:[#allocation2 + $0x8] sm:$0xff] 0.0
      %425 = vst [vmem:[#allocation2 + $0x10] sm:$0xff] 0.0
      %426 = vst [vmem:[#allocation2 + $0x18] sm:$0xff] 0.0
      %427 = vst [vmem:[#allocation2 + $0x20] sm:$0xff] 0.0
      %428 = vst [vmem:[#allocation2 + $0x28] sm:$0xff] 0.0
      %429 = vst [vmem:[#allocation2 + $0x30] sm:$0xff] 0.0
      %430 = vst [vmem:[#allocation2 + $0x38] sm:$0xff] 0.0
      %v431 = vld [vmem:[%s392] sm:$0xff]
      %v432 = vld [vmem:[%s392 + $0x10] sm:$0xff]
      %v433 = vld [vmem:[%s392 + $0x20] sm:$0xff]
      %v434 = vld [vmem:[%s392 + $0x30] sm:$0xff]
      %v435 = vld [vmem:[%s392 + $0x40] sm:$0xff]
      %v436 = vld [vmem:[%s392 + $0x50] sm:$0xff]
      %v437 = vld [vmem:[%s392 + $0x60] sm:$0xff]
      %v438 = vld [vmem:[%s392 + $0x70] sm:$0xff]
      %v439 = vld [vmem:[#allocation2] sm:$0xff]
      %v440 = vld [vmem:[#allocation2 + $0x8] sm:$0xff]
      %v441 = vld [vmem:[#allocation2 + $0x10] sm:$0xff]
      %v442 = vld [vmem:[#allocation2 + $0x18] sm:$0xff]
      %v443 = vld [vmem:[#allocation2 + $0x20] sm:$0xff]
      %v444 = vld [vmem:[#allocation2 + $0x28] sm:$0xff]
      %v445 = vld [vmem:[#allocation2 + $0x30] sm:$0xff]
      %v446 = vld [vmem:[#allocation2 + $0x38] sm:$0xff]
      %v447 = vld [vmem:[%s396] sm:$0xff]
      %v448 = vld [vmem:[%s396 + $0x8] sm:$0xff]
      %v449 = vld [vmem:[%s396 + $0x10] sm:$0xff]
      %v450 = vld [vmem:[%s396 + $0x18] sm:$0xff]
      %v451 = vld [vmem:[%s396 + $0x20] sm:$0xff]
      %v452 = vld [vmem:[%s396 + $0x28] sm:$0xff]
      %v453 = vld [vmem:[%s396 + $0x30] sm:$0xff]
      %v454 = vld [vmem:[%s396 + $0x38] sm:$0xff]
      %v455 = vld [vmem:[%s396 + $0x40] sm:$0xff]
      %v456 = vld [vmem:[%s396 + $0x48] sm:$0xff]
      %v457 = vld [vmem:[%s396 + $0x50] sm:$0xff]
      %v458 = vld [vmem:[%s396 + $0x58] sm:$0xff]
      %v459 = vld [vmem:[%s396 + $0x60] sm:$0xff]
      %v460 = vld [vmem:[%s396 + $0x68] sm:$0xff]
      %v461 = vld [vmem:[%s396 + $0x70] sm:$0xff]
      %v462 = vld [vmem:[%s396 + $0x78] sm:$0xff]
      %463 = vmatpush.msra.mxu0 %v462
      %464 = vmatpush.msra.mxu0 %v461
      %465 = vmatpush.msra.mxu0 %v460
      %466 = vmatpush.msra.mxu0 %v459
      %467 = vmatpush.msra.mxu0 %v458
      %468 = vmatpush.msra.mxu0 %v457
      %469 = vmatpush.msra.mxu0 %v456
      %470 = vmatpush.msra.mxu0 %v455
      %471 = vmatpush.msra.mxu0 %v454
      %472 = vmatpush.msra.mxu0 %v453
      %473 = vmatpush.msra.mxu0 %v452
      %474 = vmatpush.msra.mxu0 %v451
      %475 = vmatpush.msra.mxu0 %v450
      %476 = vmatpush.msra.mxu0 %v449
      %477 = vmatpush.msra.mxu0 %v448
      %478 = vmatpush.msra.mxu0 %v447
      %479 = vmatmul.f32.gmra.mxu0 %v431
      %v480 = vpop.f32.mrf.mxu0
      %v481 = vadd.f32 0.0, %v480
      %482 = vmatmul.f32.gmra.mxu0 %v432
      %v483 = vpop.f32.mrf.mxu0
      %v484 = vadd.f32 0.0, %v483
      %485 = vmatmul.f32.gmra.mxu0 %v433
      %v486 = vpop.f32.mrf.mxu0
      %v487 = vadd.f32 0.0, %v486
      %488 = vmatmul.f32.gmra.mxu0 %v434
      %v489 = vpop.f32.mrf.mxu0
      %v490 = vadd.f32 0.0, %v489
      %491 = vmatmul.f32.gmra.mxu0 %v435
      %v492 = vpop.f32.mrf.mxu0
      %v493 = vadd.f32 0.0, %v492
      %494 = vmatmul.f32.gmra.mxu0 %v436
      %v495 = vpop.f32.mrf.mxu0
      %v496 = vadd.f32 0.0, %v495
      %497 = vmatmul.f32.gmra.mxu0 %v437
      %v498 = vpop.f32.mrf.mxu0
      %v499 = vadd.f32 0.0, %v498
      %500 = vmatmul.f32.gmra.mxu0 %v438
      %v501 = vpop.f32.mrf.mxu0
      %v502 = vadd.f32 0.0, %v501
      %503 = vdwg.mxu0
      %v504 = vadd.f32 %v439, %v481
      %v505 = vadd.f32 %v440, %v484
      %v506 = vadd.f32 %v441, %v487
      %v507 = vadd.f32 %v442, %v490
      %v508 = vadd.f32 %v443, %v493
      %v509 = vadd.f32 %v444, %v496
      %v510 = vadd.f32 %v445, %v499
      %v511 = vadd.f32 %v446, %v502
      %512 = vst [vmem:[#allocation2] sm:$0xff] %v504
      %513 = vst [vmem:[#allocation2 + $0x8] sm:$0xff] %v505
      %514 = vst [vmem:[#allocation2 + $0x10] sm:$0xff] %v506
      %515 = vst [vmem:[#allocation2 + $0x18] sm:$0xff] %v507
      %516 = vst [vmem:[#allocation2 + $0x20] sm:$0xff] %v508
      %517 = vst [vmem:[#allocation2 + $0x28] sm:$0xff] %v509
      %518 = vst [vmem:[#allocation2 + $0x30] sm:$0xff] %v510
      %519 = vst [vmem:[#allocation2 + $0x38] sm:$0xff] %v511
      %v520 = vld [vmem:[%s392 + $0x1] sm:$0xff]
      %v521 = vld [vmem:[%s392 + $0x11] sm:$0xff]
      %v522 = vld [vmem:[%s392 + $0x21] sm:$0xff]
      %v523 = vld [vmem:[%s392 + $0x31] sm:$0xff]
      %v524 = vld [vmem:[%s392 + $0x41] sm:$0xff]
      %v525 = vld [vmem:[%s392 + $0x51] sm:$0xff]
      %v526 = vld [vmem:[%s392 + $0x61] sm:$0xff]
      %v527 = vld [vmem:[%s392 + $0x71] sm:$0xff]
      %v528 = vld [vmem:[#allocation2] sm:$0xff]
      %v529 = vld [vmem:[#allocation2 + $0x8] sm:$0xff]
      %v530 = vld [vmem:[#allocation2 + $0x10] sm:$0xff]
      %v531 = vld [vmem:[#allocation2 + $0x18] sm:$0xff]
      %v532 = vld [vmem:[#allocation2 + $0x20] sm:$0xff]
      %v533 = vld [vmem:[#allocation2 + $0x28] sm:$0xff]
      %v534 = vld [vmem:[#allocation2 + $0x30] sm:$0xff]
      %v535 = vld [vmem:[#allocation2 + $0x38] sm:$0xff]
      %s536 = scalar_lea.vmem %s396, 128
      %v537 = vld [vmem:[%s536] sm:$0xff]
      %v538 = vld [vmem:[%s536 + $0x8] sm:$0xff]
      %v539 = vld [vmem:[%s536 + $0x10] sm:$0xff]
      %v540 = vld [vmem:[%s536 + $0x18] sm:$0xff]
      %v541 = vld [vmem:[%s536 + $0x20] sm:$0xff]
      %v542 = vld [vmem:[%s536 + $0x28] sm:$0xff]
      %v543 = vld [vmem:[%s536 + $0x30] sm:$0xff]
      %v544 = vld [vmem:[%s536 + $0x38] sm:$0xff]
      %v545 = vld [vmem:[%s536 + $0x40] sm:$0xff]
      %v546 = vld [vmem:[%s536 + $0x48] sm:$0xff]
      %v547 = vld [vmem:[%s536 + $0x50] sm:$0xff]
      %v548 = vld [vmem:[%s536 + $0x58] sm:$0xff]
      %v549 = vld [vmem:[%s536 + $0x60] sm:$0xff]
      %v550 = vld [vmem:[%s536 + $0x68] sm:$0xff]
      %v551 = vld [vmem:[%s536 + $0x70] sm:$0xff]
      %v552 = vld [vmem:[%s536 + $0x78] sm:$0xff]
      %553 = vmatpush.msra.mxu0 %v552
      %554 = vmatpush.msra.mxu0 %v551
      %555 = vmatpush.msra.mxu0 %v550
      %556 = vmatpush.msra.mxu0 %v549
      %557 = vmatpush.msra.mxu0 %v548
      %558 = vmatpush.msra.mxu0 %v547
      %559 = vmatpush.msra.mxu0 %v546
      %560 = vmatpush.msra.mxu0 %v545
      %561 = vmatpush.msra.mxu0 %v544
      %562 = vmatpush.msra.mxu0 %v543
      %563 = vmatpush.msra.mxu0 %v542
      %564 = vmatpush.msra.mxu0 %v541
      %565 = vmatpush.msra.mxu0 %v540
      %566 = vmatpush.msra.mxu0 %v539
      %567 = vmatpush.msra.mxu0 %v538
      %568 = vmatpush.msra.mxu0 %v537
      %569 = vmatmul.f32.gmra.mxu0 %v520
      %v570 = vpop.f32.mrf.mxu0
      %v571 = vadd.f32 0.0, %v570
      %572 = vmatmul.f32.gmra.mxu0 %v521
      %v573 = vpop.f32.mrf.mxu0
      %v574 = vadd.f32 0.0, %v573
      %575 = vmatmul.f32.gmra.mxu0 %v522
      %v576 = vpop.f32.mrf.mxu0
      %v577 = vadd.f32 0.0, %v576
      %578 = vmatmul.f32.gmra.mxu0 %v523
      %v579 = vpop.f32.mrf.mxu0
      %v580 = vadd.f32 0.0, %v579
      %581 = vmatmul.f32.gmra.mxu0 %v524
      %v582 = vpop.f32.mrf.mxu0
      %v583 = vadd.f32 0.0, %v582
      %584 = vmatmul.f32.gmra.mxu0 %v525
      %v585 = vpop.f32.mrf.mxu0
      %v586 = vadd.f32 0.0, %v585
      %587 = vmatmul.f32.gmra.mxu0 %v526
      %v588 = vpop.f32.mrf.mxu0
      %v589 = vadd.f32 0.0, %v588
      %590 = vmatmul.f32.gmra.mxu0 %v527
      %v591 = vpop.f32.mrf.mxu0
      %v592 = vadd.f32 0.0, %v591
      %593 = vdwg.mxu0
      %v594 = vadd.f32 %v528, %v571
      %v595 = vadd.f32 %v529, %v574
      %v596 = vadd.f32 %v530, %v577
      %v597 = vadd.f32 %v531, %v580
      %v598 = vadd.f32 %v532, %v583
      %v599 = vadd.f32 %v533, %v586
      %v600 = vadd.f32 %v534, %v589
      %v601 = vadd.f32 %v535, %v592
      %602 = vst [vmem:[#allocation2] sm:$0xff] %v594
      %603 = vst [vmem:[#allocation2 + $0x8] sm:$0xff] %v595
      %604 = vst [vmem:[#allocation2 + $0x10] sm:$0xff] %v596
      %605 = vst [vmem:[#allocation2 + $0x18] sm:$0xff] %v597
      %606 = vst [vmem:[#allocation2 + $0x20] sm:$0xff] %v598
      %607 = vst [vmem:[#allocation2 + $0x28] sm:$0xff] %v599
      %608 = vst [vmem:[#allocation2 + $0x30] sm:$0xff] %v600
      %609 = vst [vmem:[#allocation2 + $0x38] sm:$0xff] %v601
      %v610 = vld [vmem:[%s392 + $0x2] sm:$0xff]
      %v611 = vld [vmem:[%s392 + $0x12] sm:$0xff]
      %v612 = vld [vmem:[%s392 + $0x22] sm:$0xff]
      %v613 = vld [vmem:[%s392 + $0x32] sm:$0xff]
      %v614 = vld [vmem:[%s392 + $0x42] sm:$0xff]
      %v615 = vld [vmem:[%s392 + $0x52] sm:$0xff]
      %v616 = vld [vmem:[%s392 + $0x62] sm:$0xff]
      %v617 = vld [vmem:[%s392 + $0x72] sm:$0xff]
      %v618 = vld [vmem:[#allocation2] sm:$0xff]
      %v619 = vld [vmem:[#allocation2 + $0x8] sm:$0xff]
      %v620 = vld [vmem:[#allocation2 + $0x10] sm:$0xff]
      %v621 = vld [vmem:[#allocation2 + $0x18] sm:$0xff]
      %v622 = vld [vmem:[#allocation2 + $0x20] sm:$0xff]
      %v623 = vld [vmem:[#allocation2 + $0x28] sm:$0xff]
      %v624 = vld [vmem:[#allocation2 + $0x30] sm:$0xff]
      %v625 = vld [vmem:[#allocation2 + $0x38] sm:$0xff]
      %s626 = scalar_lea.vmem %s396, 256
      %v627 = vld [vmem:[%s626] sm:$0xff]
      %v628 = vld [vmem:[%s626 + $0x8] sm:$0xff]
      %v629 = vld [vmem:[%s626 + $0x10] sm:$0xff]
      %v630 = vld [vmem:[%s626 + $0x18] sm:$0xff]
      %v631 = vld [vmem:[%s626 + $0x20] sm:$0xff]
      %v632 = vld [vmem:[%s626 + $0x28] sm:$0xff]
      %v633 = vld [vmem:[%s626 + $0x30] sm:$0xff]
      %v634 = vld [vmem:[%s626 + $0x38] sm:$0xff]
      %v635 = vld [vmem:[%s626 + $0x40] sm:$0xff]
      %v636 = vld [vmem:[%s626 + $0x48] sm:$0xff]
      %v637 = vld [vmem:[%s626 + $0x50] sm:$0xff]
      %v638 = vld [vmem:[%s626 + $0x58] sm:$0xff]
      %v639 = vld [vmem:[%s626 + $0x60] sm:$0xff]
      %v640 = vld [vmem:[%s626 + $0x68] sm:$0xff]
      %v641 = vld [vmem:[%s626 + $0x70] sm:$0xff]
      %v642 = vld [vmem:[%s626 + $0x78] sm:$0xff]
      %643 = vmatpush.msra.mxu0 %v642
      %644 = vmatpush.msra.mxu0 %v641
      %645 = vmatpush.msra.mxu0 %v640
      %646 = vmatpush.msra.mxu0 %v639
      %647 = vmatpush.msra.mxu0 %v638
      %648 = vmatpush.msra.mxu0 %v637
      %649 = vmatpush.msra.mxu0 %v636
      %650 = vmatpush.msra.mxu0 %v635
      %651 = vmatpush.msra.mxu0 %v634
      %652 = vmatpush.msra.mxu0 %v633
      %653 = vmatpush.msra.mxu0 %v632
      %654 = vmatpush.msra.mxu0 %v631
      %655 = vmatpush.msra.mxu0 %v630
      %656 = vmatpush.msra.mxu0 %v629
      %657 = vmatpush.msra.mxu0 %v628
      %658 = vmatpush.msra.mxu0 %v627
      %659 = vmatmul.f32.gmra.mxu0 %v610
      %v660 = vpop.f32.mrf.mxu0
      %v661 = vadd.f32 0.0, %v660
      %662 = vmatmul.f32.gmra.mxu0 %v611
      %v663 = vpop.f32.mrf.mxu0
      %v664 = vadd.f32 0.0, %v663
      %665 = vmatmul.f32.gmra.mxu0 %v612
      %v666 = vpop.f32.mrf.mxu0
      %v667 = vadd.f32 0.0, %v666
      %668 = vmatmul.f32.gmra.mxu0 %v613
      %v669 = vpop.f32.mrf.mxu0
      %v670 = vadd.f32 0.0, %v669
      %671 = vmatmul.f32.gmra.mxu0 %v614
      %v672 = vpop.f32.mrf.mxu0
      %v673 = vadd.f32 0.0, %v672
      %674 = vmatmul.f32.gmra.mxu0 %v615
      %v675 = vpop.f32.mrf.mxu0
      %v676 = vadd.f32 0.0, %v675
      %677 = vmatmul.f32.gmra.mxu0 %v616
      %v678 = vpop.f32.mrf.mxu0
      %v679 = vadd.f32 0.0, %v678
      %680 = vmatmul.f32.gmra.mxu0 %v617
      %v681 = vpop.f32.mrf.mxu0
      %v682 = vadd.f32 0.0, %v681
      %683 = vdwg.mxu0
      %v684 = vadd.f32 %v618, %v661
      %v685 = vadd.f32 %v619, %v664
      %v686 = vadd.f32 %v620, %v667
      %v687 = vadd.f32 %v621, %v670
      %v688 = vadd.f32 %v622, %v673
      %v689 = vadd.f32 %v623, %v676
      %v690 = vadd.f32 %v624, %v679
      %v691 = vadd.f32 %v625, %v682
      %692 = vst [vmem:[#allocation2] sm:$0xff] %v684
      %693 = vst [vmem:[#allocation2 + $0x8] sm:$0xff] %v685
      %694 = vst [vmem:[#allocation2 + $0x10] sm:$0xff] %v686
      %695 = vst [vmem:[#allocation2 + $0x18] sm:$0xff] %v687
      %696 = vst [vmem:[#allocation2 + $0x20] sm:$0xff] %v688
      %697 = vst [vmem:[#allocation2 + $0x28] sm:$0xff] %v689
      %698 = vst [vmem:[#allocation2 + $0x30] sm:$0xff] %v690
      %699 = vst [vmem:[#allocation2 + $0x38] sm:$0xff] %v691
      %s700 = scalar_lea.vmem %s392, 16
      %v701 = vld [vmem:[%s700] sm:$0xff]
      %v702 = vld [vmem:[%s700 + $0x10] sm:$0xff]
      %v703 = vld [vmem:[%s700 + $0x20] sm:$0xff]
      %v704 = vld [vmem:[%s700 + $0x30] sm:$0xff]
      %v705 = vld [vmem:[%s700 + $0x40] sm:$0xff]
      %v706 = vld [vmem:[%s700 + $0x50] sm:$0xff]
      %v707 = vld [vmem:[%s700 + $0x60] sm:$0xff]
      %v708 = vld [vmem:[%s700 + $0x70] sm:$0xff]
      %v709 = vld [vmem:[#allocation2] sm:$0xff]
      %v710 = vld [vmem:[#allocation2 + $0x8] sm:$0xff]
      %v711 = vld [vmem:[#allocation2 + $0x10] sm:$0xff]
      %v712 = vld [vmem:[#allocation2 + $0x18] sm:$0xff]
      %v713 = vld [vmem:[#allocation2 + $0x20] sm:$0xff]
      %v714 = vld [vmem:[#allocation2 + $0x28] sm:$0xff]
      %v715 = vld [vmem:[#allocation2 + $0x30] sm:$0xff]
      %v716 = vld [vmem:[#allocation2 + $0x38] sm:$0xff]
      %s717 = scalar_lea.vmem %s396, 384
      %v718 = vld [vmem:[%s717] sm:$0xff]
      %v719 = vld [vmem:[%s717 + $0x8] sm:$0xff]
      %v720 = vld [vmem:[%s717 + $0x10] sm:$0xff]
      %v721 = vld [vmem:[%s717 + $0x18] sm:$0xff]
      %v722 = vld [vmem:[%s717 + $0x20] sm:$0xff]
      %v723 = vld [vmem:[%s717 + $0x28] sm:$0xff]
      %v724 = vld [vmem:[%s717 + $0x30] sm:$0xff]
      %v725 = vld [vmem:[%s717 + $0x38] sm:$0xff]
      %v726 = vld [vmem:[%s717 + $0x40] sm:$0xff]
      %v727 = vld [vmem:[%s717 + $0x48] sm:$0xff]
      %v728 = vld [vmem:[%s717 + $0x50] sm:$0xff]
      %v729 = vld [vmem:[%s717 + $0x58] sm:$0xff]
      %v730 = vld [vmem:[%s717 + $0x60] sm:$0xff]
      %v731 = vld [vmem:[%s717 + $0x68] sm:$0xff]
      %v732 = vld [vmem:[%s717 + $0x70] sm:$0xff]
      %v733 = vld [vmem:[%s717 + $0x78] sm:$0xff]
      %734 = vmatpush.msra.mxu0 %v733
      %735 = vmatpush.msra.mxu0 %v732
      %736 = vmatpush.msra.mxu0 %v731
      %737 = vmatpush.msra.mxu0 %v730
      %738 = vmatpush.msra.mxu0 %v729
      %739 = vmatpush.msra.mxu0 %v728
      %740 = vmatpush.msra.mxu0 %v727
      %741 = vmatpush.msra.mxu0 %v726
      %742 = vmatpush.msra.mxu0 %v725
      %743 = vmatpush.msra.mxu0 %v724
      %744 = vmatpush.msra.mxu0 %v723
      %745 = vmatpush.msra.mxu0 %v722
      %746 = vmatpush.msra.mxu0 %v721
      %747 = vmatpush.msra.mxu0 %v720
      %748 = vmatpush.msra.mxu0 %v719
      %749 = vmatpush.msra.mxu0 %v718
      %750 = vmatmul.f32.gmra.mxu0 %v701
      %v751 = vpop.f32.mrf.mxu0
      %v752 = vadd.f32 0.0, %v751
      %753 = vmatmul.f32.gmra.mxu0 %v702
      %v754 = vpop.f32.mrf.mxu0
      %v755 = vadd.f32 0.0, %v754
      %756 = vmatmul.f32.gmra.mxu0 %v703
      %v757 = vpop.f32.mrf.mxu0
      %v758 = vadd.f32 0.0, %v757
      %759 = vmatmul.f32.gmra.mxu0 %v704
      %v760 = vpop.f32.mrf.mxu0
      %v761 = vadd.f32 0.0, %v760
      %762 = vmatmul.f32.gmra.mxu0 %v705
      %v763 = vpop.f32.mrf.mxu0
      %v764 = vadd.f32 0.0, %v763
      %765 = vmatmul.f32.gmra.mxu0 %v706
      %v766 = vpop.f32.mrf.mxu0
      %v767 = vadd.f32 0.0, %v766
      %768 = vmatmul.f32.gmra.mxu0 %v707
      %v769 = vpop.f32.mrf.mxu0
      %v770 = vadd.f32 0.0, %v769
      %771 = vmatmul.f32.gmra.mxu0 %v708
      %v772 = vpop.f32.mrf.mxu0
      %v773 = vadd.f32 0.0, %v772
      %774 = vdwg.mxu0
      %v775 = vadd.f32 %v709, %v752
      %v776 = vadd.f32 %v710, %v755
      %v777 = vadd.f32 %v711, %v758
      %v778 = vadd.f32 %v712, %v761
      %v779 = vadd.f32 %v713, %v764
      %v780 = vadd.f32 %v714, %v767
      %v781 = vadd.f32 %v715, %v770
      %v782 = vadd.f32 %v716, %v773
      %783 = vst [vmem:[#allocation2] sm:$0xff] %v775
      %784 = vst [vmem:[#allocation2 + $0x8] sm:$0xff] %v776
      %785 = vst [vmem:[#allocation2 + $0x10] sm:$0xff] %v777
      %786 = vst [vmem:[#allocation2 + $0x18] sm:$0xff] %v778
      %787 = vst [vmem:[#allocation2 + $0x20] sm:$0xff] %v779
      %788 = vst [vmem:[#allocation2 + $0x28] sm:$0xff] %v780
      %789 = vst [vmem:[#allocation2 + $0x30] sm:$0xff] %v781
      %790 = vst [vmem:[#allocation2 + $0x38] sm:$0xff] %v782
      %v791 = vld [vmem:[%s700 + $0x1] sm:$0xff]
      %v792 = vld [vmem:[%s700 + $0x11] sm:$0xff]
      %v793 = vld [vmem:[%s700 + $0x21] sm:$0xff]
      %v794 = vld [vmem:[%s700 + $0x31] sm:$0xff]
      %v795 = vld [vmem:[%s700 + $0x41] sm:$0xff]
      %v796 = vld [vmem:[%s700 + $0x51] sm:$0xff]
      %v797 = vld [vmem:[%s700 + $0x61] sm:$0xff]
      %v798 = vld [vmem:[%s700 + $0x71] sm:$0xff]
      %v799 = vld [vmem:[#allocation2] sm:$0xff]
      %v800 = vld [vmem:[#allocation2 + $0x8] sm:$0xff]
      %v801 = vld [vmem:[#allocation2 + $0x10] sm:$0xff]
      %v802 = vld [vmem:[#allocation2 + $0x18] sm:$0xff]
      %v803 = vld [vmem:[#allocation2 + $0x20] sm:$0xff]
      %v804 = vld [vmem:[#allocation2 + $0x28] sm:$0xff]
      %v805 = vld [vmem:[#allocation2 + $0x30] sm:$0xff]
      %v806 = vld [vmem:[#allocation2 + $0x38] sm:$0xff]
      %s807 = scalar_lea.vmem %s396, 512
      %v808 = vld [vmem:[%s807] sm:$0xff]
      %v809 = vld [vmem:[%s807 + $0x8] sm:$0xff]
      %v810 = vld [vmem:[%s807 + $0x10] sm:$0xff]
      %v811 = vld [vmem:[%s807 + $0x18] sm:$0xff]
      %v812 = vld [vmem:[%s807 + $0x20] sm:$0xff]
      %v813 = vld [vmem:[%s807 + $0x28] sm:$0xff]
      %v814 = vld [vmem:[%s807 + $0x30] sm:$0xff]
      %v815 = vld [vmem:[%s807 + $0x38] sm:$0xff]
      %v816 = vld [vmem:[%s807 + $0x40] sm:$0xff]
      %v817 = vld [vmem:[%s807 + $0x48] sm:$0xff]
      %v818 = vld [vmem:[%s807 + $0x50] sm:$0xff]
      %v819 = vld [vmem:[%s807 + $0x58] sm:$0xff]
      %v820 = vld [vmem:[%s807 + $0x60] sm:$0xff]
      %v821 = vld [vmem:[%s807 + $0x68] sm:$0xff]
      %v822 = vld [vmem:[%s807 + $0x70] sm:$0xff]
      %v823 = vld [vmem:[%s807 + $0x78] sm:$0xff]
      %824 = vmatpush.msra.mxu0 %v823
      %825 = vmatpush.msra.mxu0 %v822
      %826 = vmatpush.msra.mxu0 %v821
      %827 = vmatpush.msra.mxu0 %v820
      %828 = vmatpush.msra.mxu0 %v819
      %829 = vmatpush.msra.mxu0 %v818
      %830 = vmatpush.msra.mxu0 %v817
      %831 = vmatpush.msra.mxu0 %v816
      %832 = vmatpush.msra.mxu0 %v815
      %833 = vmatpush.msra.mxu0 %v814
      %834 = vmatpush.msra.mxu0 %v813
      %835 = vmatpush.msra.mxu0 %v812
      %836 = vmatpush.msra.mxu0 %v811
      %837 = vmatpush.msra.mxu0 %v810
      %838 = vmatpush.msra.mxu0 %v809
      %839 = vmatpush.msra.mxu0 %v808
      %840 = vmatmul.f32.gmra.mxu0 %v791
      %v841 = vpop.f32.mrf.mxu0
      %v842 = vadd.f32 0.0, %v841
      %843 = vmatmul.f32.gmra.mxu0 %v792
      %v844 = vpop.f32.mrf.mxu0
      %v845 = vadd.f32 0.0, %v844
      %846 = vmatmul.f32.gmra.mxu0 %v793
      %v847 = vpop.f32.mrf.mxu0
      %v848 = vadd.f32 0.0, %v847
      %849 = vmatmul.f32.gmra.mxu0 %v794
      %v850 = vpop.f32.mrf.mxu0
      %v851 = vadd.f32 0.0, %v850
      %852 = vmatmul.f32.gmra.mxu0 %v795
      %v853 = vpop.f32.mrf.mxu0
      %v854 = vadd.f32 0.0, %v853
      %855 = vmatmul.f32.gmra.mxu0 %v796
      %v856 = vpop.f32.mrf.mxu0
      %v857 = vadd.f32 0.0, %v856
      %858 = vmatmul.f32.gmra.mxu0 %v797
      %v859 = vpop.f32.mrf.mxu0
      %v860 = vadd.f32 0.0, %v859
      %861 = vmatmul.f32.gmra.mxu0 %v798
      %v862 = vpop.f32.mrf.mxu0
      %v863 = vadd.f32 0.0, %v862
      %864 = vdwg.mxu0
      %v865 = vadd.f32 %v799, %v842
      %v866 = vadd.f32 %v800, %v845
      %v867 = vadd.f32 %v801, %v848
      %v868 = vadd.f32 %v802, %v851
      %v869 = vadd.f32 %v803, %v854
      %v870 = vadd.f32 %v804, %v857
      %v871 = vadd.f32 %v805, %v860
      %v872 = vadd.f32 %v806, %v863
      %873 = vst [vmem:[#allocation2] sm:$0xff] %v865
      %874 = vst [vmem:[#allocation2 + $0x8] sm:$0xff] %v866
      %875 = vst [vmem:[#allocation2 + $0x10] sm:$0xff] %v867
      %876 = vst [vmem:[#allocation2 + $0x18] sm:$0xff] %v868
      %877 = vst [vmem:[#allocation2 + $0x20] sm:$0xff] %v869
      %878 = vst [vmem:[#allocation2 + $0x28] sm:$0xff] %v870
      %879 = vst [vmem:[#allocation2 + $0x30] sm:$0xff] %v871
      %880 = vst [vmem:[#allocation2 + $0x38] sm:$0xff] %v872
      %v881 = vld [vmem:[%s700 + $0x2] sm:$0xff]
      %v882 = vld [vmem:[%s700 + $0x12] sm:$0xff]
      %v883 = vld [vmem:[%s700 + $0x22] sm:$0xff]
      %v884 = vld [vmem:[%s700 + $0x32] sm:$0xff]
      %v885 = vld [vmem:[%s700 + $0x42] sm:$0xff]
      %v886 = vld [vmem:[%s700 + $0x52] sm:$0xff]
      %v887 = vld [vmem:[%s700 + $0x62] sm:$0xff]
      %v888 = vld [vmem:[%s700 + $0x72] sm:$0xff]
      %v889 = vld [vmem:[#allocation2] sm:$0xff]
      %v890 = vld [vmem:[#allocation2 + $0x8] sm:$0xff]
      %v891 = vld [vmem:[#allocation2 + $0x10] sm:$0xff]
      %v892 = vld [vmem:[#allocation2 + $0x18] sm:$0xff]
      %v893 = vld [vmem:[#allocation2 + $0x20] sm:$0xff]
      %v894 = vld [vmem:[#allocation2 + $0x28] sm:$0xff]
      %v895 = vld [vmem:[#allocation2 + $0x30] sm:$0xff]
      %v896 = vld [vmem:[#allocation2 + $0x38] sm:$0xff]
      %s897 = scalar_lea.vmem %s396, 640
      %v898 = vld [vmem:[%s897] sm:$0xff]
      %v899 = vld [vmem:[%s897 + $0x8] sm:$0xff]
      %v900 = vld [vmem:[%s897 + $0x10] sm:$0xff]
      %v901 = vld [vmem:[%s897 + $0x18] sm:$0xff]
      %v902 = vld [vmem:[%s897 + $0x20] sm:$0xff]
      %v903 = vld [vmem:[%s897 + $0x28] sm:$0xff]
      %v904 = vld [vmem:[%s897 + $0x30] sm:$0xff]
      %v905 = vld [vmem:[%s897 + $0x38] sm:$0xff]
      %v906 = vld [vmem:[%s897 + $0x40] sm:$0xff]
      %v907 = vld [vmem:[%s897 + $0x48] sm:$0xff]
      %v908 = vld [vmem:[%s897 + $0x50] sm:$0xff]
      %v909 = vld [vmem:[%s897 + $0x58] sm:$0xff]
      %v910 = vld [vmem:[%s897 + $0x60] sm:$0xff]
      %v911 = vld [vmem:[%s897 + $0x68] sm:$0xff]
      %v912 = vld [vmem:[%s897 + $0x70] sm:$0xff]
      %v913 = vld [vmem:[%s897 + $0x78] sm:$0xff]
      %914 = vmatpush.msra.mxu0 %v913
      %915 = vmatpush.msra.mxu0 %v912
      %916 = vmatpush.msra.mxu0 %v911
      %917 = vmatpush.msra.mxu0 %v910
      %918 = vmatpush.msra.mxu0 %v909
      %919 = vmatpush.msra.mxu0 %v908
      %920 = vmatpush.msra.mxu0 %v907
      %921 = vmatpush.msra.mxu0 %v906
      %922 = vmatpush.msra.mxu0 %v905
      %923 = vmatpush.msra.mxu0 %v904
      %924 = vmatpush.msra.mxu0 %v903
      %925 = vmatpush.msra.mxu0 %v902
      %926 = vmatpush.msra.mxu0 %v901
      %927 = vmatpush.msra.mxu0 %v900
      %928 = vmatpush.msra.mxu0 %v899
      %929 = vmatpush.msra.mxu0 %v898
      %930 = vmatmul.f32.gmra.mxu0 %v881
      %v931 = vpop.f32.mrf.mxu0
      %v932 = vadd.f32 0.0, %v931
      %933 = vmatmul.f32.gmra.mxu0 %v882
      %v934 = vpop.f32.mrf.mxu0
      %v935 = vadd.f32 0.0, %v934
      %936 = vmatmul.f32.gmra.mxu0 %v883
      %v937 = vpop.f32.mrf.mxu0
      %v938 = vadd.f32 0.0, %v937
      %939 = vmatmul.f32.gmra.mxu0 %v884
      %v940 = vpop.f32.mrf.mxu0
      %v941 = vadd.f32 0.0, %v940
      %942 = vmatmul.f32.gmra.mxu0 %v885
      %v943 = vpop.f32.mrf.mxu0
      %v944 = vadd.f32 0.0, %v943
      %945 = vmatmul.f32.gmra.mxu0 %v886
      %v946 = vpop.f32.mrf.mxu0
      %v947 = vadd.f32 0.0, %v946
      %948 = vmatmul.f32.gmra.mxu0 %v887
      %v949 = vpop.f32.mrf.mxu0
      %v950 = vadd.f32 0.0, %v949
      %951 = vmatmul.f32.gmra.mxu0 %v888
      %v952 = vpop.f32.mrf.mxu0
      %v953 = vadd.f32 0.0, %v952
      %954 = vdwg.mxu0
      %v955 = vadd.f32 %v889, %v932
      %v956 = vadd.f32 %v890, %v935
      %v957 = vadd.f32 %v891, %v938
      %v958 = vadd.f32 %v892, %v941
      %v959 = vadd.f32 %v893, %v944
      %v960 = vadd.f32 %v894, %v947
      %v961 = vadd.f32 %v895, %v950
      %v962 = vadd.f32 %v896, %v953
      %963 = vst [vmem:[#allocation2] sm:$0xff] %v955
      %964 = vst [vmem:[#allocation2 + $0x8] sm:$0xff] %v956
      %965 = vst [vmem:[#allocation2 + $0x10] sm:$0xff] %v957
      %966 = vst [vmem:[#allocation2 + $0x18] sm:$0xff] %v958
      %967 = vst [vmem:[#allocation2 + $0x20] sm:$0xff] %v959
      %968 = vst [vmem:[#allocation2 + $0x28] sm:$0xff] %v960
      %969 = vst [vmem:[#allocation2 + $0x30] sm:$0xff] %v961
      %970 = vst [vmem:[#allocation2 + $0x38] sm:$0xff] %v962
      %s971 = scalar_lea.vmem %s392, 32
      %v972 = vld [vmem:[%s971] sm:$0xff]
      %v973 = vld [vmem:[%s971 + $0x10] sm:$0xff]
      %v974 = vld [vmem:[%s971 + $0x20] sm:$0xff]
      %v975 = vld [vmem:[%s971 + $0x30] sm:$0xff]
      %v976 = vld [vmem:[%s971 + $0x40] sm:$0xff]
      %v977 = vld [vmem:[%s971 + $0x50] sm:$0xff]
      %v978 = vld [vmem:[%s971 + $0x60] sm:$0xff]
      %v979 = vld [vmem:[%s971 + $0x70] sm:$0xff]
      %v980 = vld [vmem:[#allocation2] sm:$0xff]
      %v981 = vld [vmem:[#allocation2 + $0x8] sm:$0xff]
      %v982 = vld [vmem:[#allocation2 + $0x10] sm:$0xff]
      %v983 = vld [vmem:[#allocation2 + $0x18] sm:$0xff]
      %v984 = vld [vmem:[#allocation2 + $0x20] sm:$0xff]
      %v985 = vld [vmem:[#allocation2 + $0x28] sm:$0xff]
      %v986 = vld [vmem:[#allocation2 + $0x30] sm:$0xff]
      %v987 = vld [vmem:[#allocation2 + $0x38] sm:$0xff]
      %s988 = scalar_lea.vmem %s396, 768
      %v989 = vld [vmem:[%s988] sm:$0xff]
      %v990 = vld [vmem:[%s988 + $0x8] sm:$0xff]
      %v991 = vld [vmem:[%s988 + $0x10] sm:$0xff]
      %v992 = vld [vmem:[%s988 + $0x18] sm:$0xff]
      %v993 = vld [vmem:[%s988 + $0x20] sm:$0xff]
      %v994 = vld [vmem:[%s988 + $0x28] sm:$0xff]
      %v995 = vld [vmem:[%s988 + $0x30] sm:$0xff]
      %v996 = vld [vmem:[%s988 + $0x38] sm:$0xff]
      %v997 = vld [vmem:[%s988 + $0x40] sm:$0xff]
      %v998 = vld [vmem:[%s988 + $0x48] sm:$0xff]
      %v999 = vld [vmem:[%s988 + $0x50] sm:$0xff]
      %v1000 = vld [vmem:[%s988 + $0x58] sm:$0xff]
      %v1001 = vld [vmem:[%s988 + $0x60] sm:$0xff]
      %v1002 = vld [vmem:[%s988 + $0x68] sm:$0xff]
      %v1003 = vld [vmem:[%s988 + $0x70] sm:$0xff]
      %v1004 = vld [vmem:[%s988 + $0x78] sm:$0xff]
      %1005 = vmatpush.msra.mxu0 %v1004
      %1006 = vmatpush.msra.mxu0 %v1003
      %1007 = vmatpush.msra.mxu0 %v1002
      %1008 = vmatpush.msra.mxu0 %v1001
      %1009 = vmatpush.msra.mxu0 %v1000
      %1010 = vmatpush.msra.mxu0 %v999
      %1011 = vmatpush.msra.mxu0 %v998
      %1012 = vmatpush.msra.mxu0 %v997
      %1013 = vmatpush.msra.mxu0 %v996
      %1014 = vmatpush.msra.mxu0 %v995
      %1015 = vmatpush.msra.mxu0 %v994
      %1016 = vmatpush.msra.mxu0 %v993
      %1017 = vmatpush.msra.mxu0 %v992
      %1018 = vmatpush.msra.mxu0 %v991
      %1019 = vmatpush.msra.mxu0 %v990
      %1020 = vmatpush.msra.mxu0 %v989
      %1021 = vmatmul.f32.gmra.mxu0 %v972
      %v1022 = vpop.f32.mrf.mxu0
      %v1023 = vadd.f32 0.0, %v1022
      %1024 = vmatmul.f32.gmra.mxu0 %v973
      %v1025 = vpop.f32.mrf.mxu0
      %v1026 = vadd.f32 0.0, %v1025
      %1027 = vmatmul.f32.gmra.mxu0 %v974
      %v1028 = vpop.f32.mrf.mxu0
      %v1029 = vadd.f32 0.0, %v1028
      %1030 = vmatmul.f32.gmra.mxu0 %v975
      %v1031 = vpop.f32.mrf.mxu0
      %v1032 = vadd.f32 0.0, %v1031
      %1033 = vmatmul.f32.gmra.mxu0 %v976
      %v1034 = vpop.f32.mrf.mxu0
      %v1035 = vadd.f32 0.0, %v1034
      %1036 = vmatmul.f32.gmra.mxu0 %v977
      %v1037 = vpop.f32.mrf.mxu0
      %v1038 = vadd.f32 0.0, %v1037
      %1039 = vmatmul.f32.gmra.mxu0 %v978
      %v1040 = vpop.f32.mrf.mxu0
      %v1041 = vadd.f32 0.0, %v1040
      %1042 = vmatmul.f32.gmra.mxu0 %v979
      %v1043 = vpop.f32.mrf.mxu0
      %v1044 = vadd.f32 0.0, %v1043
      %1045 = vdwg.mxu0
      %v1046 = vadd.f32 %v980, %v1023
      %v1047 = vadd.f32 %v981, %v1026
      %v1048 = vadd.f32 %v982, %v1029
      %v1049 = vadd.f32 %v983, %v1032
      %v1050 = vadd.f32 %v984, %v1035
      %v1051 = vadd.f32 %v985, %v1038
      %v1052 = vadd.f32 %v986, %v1041
      %v1053 = vadd.f32 %v987, %v1044
      %1054 = vst [vmem:[#allocation2] sm:$0xff] %v1046
      %1055 = vst [vmem:[#allocation2 + $0x8] sm:$0xff] %v1047
      %1056 = vst [vmem:[#allocation2 + $0x10] sm:$0xff] %v1048
      %1057 = vst [vmem:[#allocation2 + $0x18] sm:$0xff] %v1049
      %1058 = vst [vmem:[#allocation2 + $0x20] sm:$0xff] %v1050
      %1059 = vst [vmem:[#allocation2 + $0x28] sm:$0xff] %v1051
      %1060 = vst [vmem:[#allocation2 + $0x30] sm:$0xff] %v1052
      %1061 = vst [vmem:[#allocation2 + $0x38] sm:$0xff] %v1053
      %v1062 = vld [vmem:[%s971 + $0x1] sm:$0xff]
      %v1063 = vld [vmem:[%s971 + $0x11] sm:$0xff]
      %v1064 = vld [vmem:[%s971 + $0x21] sm:$0xff]
      %v1065 = vld [vmem:[%s971 + $0x31] sm:$0xff]
      %v1066 = vld [vmem:[%s971 + $0x41] sm:$0xff]
      %v1067 = vld [vmem:[%s971 + $0x51] sm:$0xff]
      %v1068 = vld [vmem:[%s971 + $0x61] sm:$0xff]
      %v1069 = vld [vmem:[%s971 + $0x71] sm:$0xff]
      %v1070 = vld [vmem:[#allocation2] sm:$0xff]
      %v1071 = vld [vmem:[#allocation2 + $0x8] sm:$0xff]
      %v1072 = vld [vmem:[#allocation2 + $0x10] sm:$0xff]
      %v1073 = vld [vmem:[#allocation2 + $0x18] sm:$0xff]
      %v1074 = vld [vmem:[#allocation2 + $0x20] sm:$0xff]
      %v1075 = vld [vmem:[#allocation2 + $0x28] sm:$0xff]
      %v1076 = vld [vmem:[#allocation2 + $0x30] sm:$0xff]
      %v1077 = vld [vmem:[#allocation2 + $0x38] sm:$0xff]
      %s1078 = scalar_lea.vmem %s396, 896
      %v1079 = vld [vmem:[%s1078] sm:$0xff]
      %v1080 = vld [vmem:[%s1078 + $0x8] sm:$0xff]
      %v1081 = vld [vmem:[%s1078 + $0x10] sm:$0xff]
      %v1082 = vld [vmem:[%s1078 + $0x18] sm:$0xff]
      %v1083 = vld [vmem:[%s1078 + $0x20] sm:$0xff]
      %v1084 = vld [vmem:[%s1078 + $0x28] sm:$0xff]
      %v1085 = vld [vmem:[%s1078 + $0x30] sm:$0xff]
      %v1086 = vld [vmem:[%s1078 + $0x38] sm:$0xff]
      %v1087 = vld [vmem:[%s1078 + $0x40] sm:$0xff]
      %v1088 = vld [vmem:[%s1078 + $0x48] sm:$0xff]
      %v1089 = vld [vmem:[%s1078 + $0x50] sm:$0xff]
      %v1090 = vld [vmem:[%s1078 + $0x58] sm:$0xff]
      %v1091 = vld [vmem:[%s1078 + $0x60] sm:$0xff]
      %v1092 = vld [vmem:[%s1078 + $0x68] sm:$0xff]
      %v1093 = vld [vmem:[%s1078 + $0x70] sm:$0xff]
      %v1094 = vld [vmem:[%s1078 + $0x78] sm:$0xff]
      %1095 = vmatpush.msra.mxu0 %v1094
      %1096 = vmatpush.msra.mxu0 %v1093
      %1097 = vmatpush.msra.mxu0 %v1092
      %1098 = vmatpush.msra.mxu0 %v1091
      %1099 = vmatpush.msra.mxu0 %v1090
      %1100 = vmatpush.msra.mxu0 %v1089
      %1101 = vmatpush.msra.mxu0 %v1088
      %1102 = vmatpush.msra.mxu0 %v1087
      %1103 = vmatpush.msra.mxu0 %v1086
      %1104 = vmatpush.msra.mxu0 %v1085
      %1105 = vmatpush.msra.mxu0 %v1084
      %1106 = vmatpush.msra.mxu0 %v1083
      %1107 = vmatpush.msra.mxu0 %v1082
      %1108 = vmatpush.msra.mxu0 %v1081
      %1109 = vmatpush.msra.mxu0 %v1080
      %1110 = vmatpush.msra.mxu0 %v1079
      %1111 = vmatmul.f32.gmra.mxu0 %v1062
      %v1112 = vpop.f32.mrf.mxu0
      %v1113 = vadd.f32 0.0, %v1112
      %1114 = vmatmul.f32.gmra.mxu0 %v1063
      %v1115 = vpop.f32.mrf.mxu0
      %v1116 = vadd.f32 0.0, %v1115
      %1117 = vmatmul.f32.gmra.mxu0 %v1064
      %v1118 = vpop.f32.mrf.mxu0
      %v1119 = vadd.f32 0.0, %v1118
      %1120 = vmatmul.f32.gmra.mxu0 %v1065
      %v1121 = vpop.f32.mrf.mxu0
      %v1122 = vadd.f32 0.0, %v1121
      %1123 = vmatmul.f32.gmra.mxu0 %v1066
      %v1124 = vpop.f32.mrf.mxu0
      %v1125 = vadd.f32 0.0, %v1124
      %1126 = vmatmul.f32.gmra.mxu0 %v1067
      %v1127 = vpop.f32.mrf.mxu0
      %v1128 = vadd.f32 0.0, %v1127
      %1129 = vmatmul.f32.gmra.mxu0 %v1068
      %v1130 = vpop.f32.mrf.mxu0
      %v1131 = vadd.f32 0.0, %v1130
      %1132 = vmatmul.f32.gmra.mxu0 %v1069
      %v1133 = vpop.f32.mrf.mxu0
      %v1134 = vadd.f32 0.0, %v1133
      %1135 = vdwg.mxu0
      %v1136 = vadd.f32 %v1070, %v1113
      %v1137 = vadd.f32 %v1071, %v1116
      %v1138 = vadd.f32 %v1072, %v1119
      %v1139 = vadd.f32 %v1073, %v1122
      %v1140 = vadd.f32 %v1074, %v1125
      %v1141 = vadd.f32 %v1075, %v1128
      %v1142 = vadd.f32 %v1076, %v1131
      %v1143 = vadd.f32 %v1077, %v1134
      %1144 = vst [vmem:[#allocation2] sm:$0xff] %v1136
      %1145 = vst [vmem:[#allocation2 + $0x8] sm:$0xff] %v1137
      %1146 = vst [vmem:[#allocation2 + $0x10] sm:$0xff] %v1138
      %1147 = vst [vmem:[#allocation2 + $0x18] sm:$0xff] %v1139
      %1148 = vst [vmem:[#allocation2 + $0x20] sm:$0xff] %v1140
      %1149 = vst [vmem:[#allocation2 + $0x28] sm:$0xff] %v1141
      %1150 = vst [vmem:[#allocation2 + $0x30] sm:$0xff] %v1142
      %1151 = vst [vmem:[#allocation2 + $0x38] sm:$0xff] %v1143
      %v1152 = vld [vmem:[%s971 + $0x2] sm:$0xff]
      %v1153 = vld [vmem:[%s971 + $0x12] sm:$0xff]
      %v1154 = vld [vmem:[%s971 + $0x22] sm:$0xff]
      %v1155 = vld [vmem:[%s971 + $0x32] sm:$0xff]
      %v1156 = vld [vmem:[%s971 + $0x42] sm:$0xff]
      %v1157 = vld [vmem:[%s971 + $0x52] sm:$0xff]
      %v1158 = vld [vmem:[%s971 + $0x62] sm:$0xff]
      %v1159 = vld [vmem:[%s971 + $0x72] sm:$0xff]
      %v1160 = vld [vmem:[#allocation2] sm:$0xff]
      %v1161 = vld [vmem:[#allocation2 + $0x8] sm:$0xff]
      %v1162 = vld [vmem:[#allocation2 + $0x10] sm:$0xff]
      %v1163 = vld [vmem:[#allocation2 + $0x18] sm:$0xff]
      %v1164 = vld [vmem:[#allocation2 + $0x20] sm:$0xff]
      %v1165 = vld [vmem:[#allocation2 + $0x28] sm:$0xff]
      %v1166 = vld [vmem:[#allocation2 + $0x30] sm:$0xff]
      %v1167 = vld [vmem:[#allocation2 + $0x38] sm:$0xff]
      %s1168 = scalar_lea.vmem %s396, 1024
      %v1169 = vld [vmem:[%s1168] sm:$0xff]
      %v1170 = vld [vmem:[%s1168 + $0x8] sm:$0xff]
      %v1171 = vld [vmem:[%s1168 + $0x10] sm:$0xff]
      %v1172 = vld [vmem:[%s1168 + $0x18] sm:$0xff]
      %v1173 = vld [vmem:[%s1168 + $0x20] sm:$0xff]
      %v1174 = vld [vmem:[%s1168 + $0x28] sm:$0xff]
      %v1175 = vld [vmem:[%s1168 + $0x30] sm:$0xff]
      %v1176 = vld [vmem:[%s1168 + $0x38] sm:$0xff]
      %v1177 = vld [vmem:[%s1168 + $0x40] sm:$0xff]
      %v1178 = vld [vmem:[%s1168 + $0x48] sm:$0xff]
      %v1179 = vld [vmem:[%s1168 + $0x50] sm:$0xff]
      %v1180 = vld [vmem:[%s1168 + $0x58] sm:$0xff]
      %v1181 = vld [vmem:[%s1168 + $0x60] sm:$0xff]
      %v1182 = vld [vmem:[%s1168 + $0x68] sm:$0xff]
      %v1183 = vld [vmem:[%s1168 + $0x70] sm:$0xff]
      %v1184 = vld [vmem:[%s1168 + $0x78] sm:$0xff]
      %1185 = vmatpush.msra.mxu0 %v1184
      %1186 = vmatpush.msra.mxu0 %v1183
      %1187 = vmatpush.msra.mxu0 %v1182
      %1188 = vmatpush.msra.mxu0 %v1181
      %1189 = vmatpush.msra.mxu0 %v1180
      %1190 = vmatpush.msra.mxu0 %v1179
      %1191 = vmatpush.msra.mxu0 %v1178
      %1192 = vmatpush.msra.mxu0 %v1177
      %1193 = vmatpush.msra.mxu0 %v1176
      %1194 = vmatpush.msra.mxu0 %v1175
      %1195 = vmatpush.msra.mxu0 %v1174
      %1196 = vmatpush.msra.mxu0 %v1173
      %1197 = vmatpush.msra.mxu0 %v1172
      %1198 = vmatpush.msra.mxu0 %v1171
      %1199 = vmatpush.msra.mxu0 %v1170
      %1200 = vmatpush.msra.mxu0 %v1169
      %1201 = vmatmul.f32.gmra.mxu0 %v1152
      %v1202 = vpop.f32.mrf.mxu0
      %v1203 = vadd.f32 0.0, %v1202
      %1204 = vmatmul.f32.gmra.mxu0 %v1153
      %v1205 = vpop.f32.mrf.mxu0
      %v1206 = vadd.f32 0.0, %v1205
      %1207 = vmatmul.f32.gmra.mxu0 %v1154
      %v1208 = vpop.f32.mrf.mxu0
      %v1209 = vadd.f32 0.0, %v1208
      %1210 = vmatmul.f32.gmra.mxu0 %v1155
      %v1211 = vpop.f32.mrf.mxu0
      %v1212 = vadd.f32 0.0, %v1211
      %1213 = vmatmul.f32.gmra.mxu0 %v1156
      %v1214 = vpop.f32.mrf.mxu0
      %v1215 = vadd.f32 0.0, %v1214
      %1216 = vmatmul.f32.gmra.mxu0 %v1157
      %v1217 = vpop.f32.mrf.mxu0
      %v1218 = vadd.f32 0.0, %v1217
      %1219 = vmatmul.f32.gmra.mxu0 %v1158
      %v1220 = vpop.f32.mrf.mxu0
      %v1221 = vadd.f32 0.0, %v1220
      %1222 = vmatmul.f32.gmra.mxu0 %v1159
      %v1223 = vpop.f32.mrf.mxu0
      %v1224 = vadd.f32 0.0, %v1223
      %1225 = vdwg.mxu0
      %v1226 = vadd.f32 %v1160, %v1203
      %v1227 = vadd.f32 %v1161, %v1206
      %v1228 = vadd.f32 %v1162, %v1209
      %v1229 = vadd.f32 %v1163, %v1212
      %v1230 = vadd.f32 %v1164, %v1215
      %v1231 = vadd.f32 %v1165, %v1218
      %v1232 = vadd.f32 %v1166, %v1221
      %v1233 = vadd.f32 %v1167, %v1224
      %1234 = vst [vmem:[#allocation2] sm:$0xff] %v1226
      %1235 = vst [vmem:[#allocation2 + $0x8] sm:$0xff] %v1227
      %1236 = vst [vmem:[#allocation2 + $0x10] sm:$0xff] %v1228
      %1237 = vst [vmem:[#allocation2 + $0x18] sm:$0xff] %v1229
      %1238 = vst [vmem:[#allocation2 + $0x20] sm:$0xff] %v1230
      %1239 = vst [vmem:[#allocation2 + $0x28] sm:$0xff] %v1231
      %1240 = vst [vmem:[#allocation2 + $0x30] sm:$0xff] %v1232
      %1241 = vst [vmem:[#allocation2 + $0x38] sm:$0xff] %v1233
      %v1242 = vld [vmem:[#allocation2] sm:$0xff]
      %v1243 = vld [vmem:[#allocation2 + $0x8] sm:$0xff]
      %v1244 = vld [vmem:[#allocation2 + $0x10] sm:$0xff]
      %v1245 = vld [vmem:[#allocation2 + $0x18] sm:$0xff]
      %v1246 = vld [vmem:[#allocation2 + $0x20] sm:$0xff]
      %v1247 = vld [vmem:[#allocation2 + $0x28] sm:$0xff]
      %v1248 = vld [vmem:[#allocation2 + $0x30] sm:$0xff]
      %v1249 = vld [vmem:[#allocation2 + $0x38] sm:$0xff]
      %v1250 = vld [vmem:[%s399] sm:$0x1]
      %v1252 = vperm.slane %v1250, 0
      %v1254 = vmul.f32 %v1242, %v1252
      %v1255 = vmul.f32 %v1243, %v1252
      %v1256 = vmul.f32 %v1244, %v1252
      %v1257 = vmul.f32 %v1245, %v1252
      %v1258 = vmul.f32 %v1246, %v1252
      %v1259 = vmul.f32 %v1247, %v1252
      %v1260 = vmul.f32 %v1248, %v1252
      %v1261 = vmul.f32 %v1249, %v1252
      %v1262 = vld [vmem:[%s402] sm:$0x1]
      %v1264 = vperm.slane %v1262, 0
      %v1266 = vadd.f32 %v1254, %v1264
      %v1267 = vadd.f32 %v1255, %v1264
      %v1268 = vadd.f32 %v1256, %v1264
      %v1269 = vadd.f32 %v1257, %v1264
      %v1270 = vadd.f32 %v1258, %v1264
      %v1271 = vadd.f32 %v1259, %v1264
      %v1272 = vadd.f32 %v1260, %v1264
      %v1273 = vadd.f32 %v1261, %v1264
      %s1274 = sld [smem:[#allocation3]]
      %vm1275 = vcmp.ge.f32.partialorder %v1266, 0.0
      %vm1276 = vcmp.ge.f32.partialorder %v1267, 0.0
      %vm1277 = vcmp.ge.f32.partialorder %v1268, 0.0
      %vm1278 = vcmp.ge.f32.partialorder %v1269, 0.0
      %vm1279 = vcmp.ge.f32.partialorder %v1270, 0.0
      %vm1280 = vcmp.ge.f32.partialorder %v1271, 0.0
      %vm1281 = vcmp.ge.f32.partialorder %v1272, 0.0
      %vm1282 = vcmp.ge.f32.partialorder %v1273, 0.0
      %v1283 = vstv %s1274
      %v1284 = vmul.f32 %v1283, %v1266
      %v1285 = vmul.f32 %v1283, %v1267
      %v1286 = vmul.f32 %v1283, %v1268
      %v1287 = vmul.f32 %v1283, %v1269
      %v1288 = vmul.f32 %v1283, %v1270
      %v1289 = vmul.f32 %v1283, %v1271
      %v1290 = vmul.f32 %v1283, %v1272
      %v1291 = vmul.f32 %v1283, %v1273
      %v1292 = vsel %vm1275, %v1266, %v1284
      %v1293 = vsel %vm1276, %v1267, %v1285
      %v1294 = vsel %vm1277, %v1268, %v1286
      %v1295 = vsel %vm1278, %v1269, %v1287
      %v1296 = vsel %vm1279, %v1270, %v1288
      %v1297 = vsel %vm1280, %v1271, %v1289
      %v1298 = vsel %vm1281, %v1272, %v1290
      %v1299 = vsel %vm1282, %v1273, %v1291
      %v1300 = vld [vmem:[%s407] sm:$0xff]
      %v1301 = vld [vmem:[%s407 + $0x8] sm:$0xff]
      %v1302 = vld [vmem:[%s407 + $0x10] sm:$0xff]
      %v1303 = vld [vmem:[%s407 + $0x18] sm:$0xff]
      %v1304 = vld [vmem:[%s407 + $0x20] sm:$0xff]
      %v1305 = vld [vmem:[%s407 + $0x28] sm:$0xff]
      %v1306 = vld [vmem:[%s407 + $0x30] sm:$0xff]
      %v1307 = vld [vmem:[%s407 + $0x38] sm:$0xff]
      %v1308 = vld [vmem:[%s411] sm:$0xff]
      %v1309 = vld [vmem:[%s411 + $0x8] sm:$0xff]
      %v1310 = vld [vmem:[%s411 + $0x10] sm:$0xff]
      %v1311 = vld [vmem:[%s411 + $0x18] sm:$0xff]
      %v1312 = vld [vmem:[%s411 + $0x20] sm:$0xff]
      %v1313 = vld [vmem:[%s411 + $0x28] sm:$0xff]
      %v1314 = vld [vmem:[%s411 + $0x30] sm:$0xff]
      %v1315 = vld [vmem:[%s411 + $0x38] sm:$0xff]
      %v1316 = vld [vmem:[%s411 + $0x40] sm:$0xff]
      %v1317 = vld [vmem:[%s411 + $0x48] sm:$0xff]
      %v1318 = vld [vmem:[%s411 + $0x50] sm:$0xff]
      %v1319 = vld [vmem:[%s411 + $0x58] sm:$0xff]
      %v1320 = vld [vmem:[%s411 + $0x60] sm:$0xff]
      %v1321 = vld [vmem:[%s411 + $0x68] sm:$0xff]
      %v1322 = vld [vmem:[%s411 + $0x70] sm:$0xff]
      %v1323 = vld [vmem:[%s411 + $0x78] sm:$0xff]
      %v1324 = vld [vmem:[%s414] sm:$0x1]
      %v1326 = vperm.slane %v1324, 0
      %1328 = vmatpush.msra.mxu0 %v1323
      %1329 = vmatpush.msra.mxu0 %v1322
      %1330 = vmatpush.msra.mxu0 %v1321
      %1331 = vmatpush.msra.mxu0 %v1320
      %1332 = vmatpush.msra.mxu0 %v1319
      %1333 = vmatpush.msra.mxu0 %v1318
      %1334 = vmatpush.msra.mxu0 %v1317
      %1335 = vmatpush.msra.mxu0 %v1316
      %1336 = vmatpush.msra.mxu0 %v1315
      %1337 = vmatpush.msra.mxu0 %v1314
      %1338 = vmatpush.msra.mxu0 %v1313
      %1339 = vmatpush.msra.mxu0 %v1312
      %1340 = vmatpush.msra.mxu0 %v1311
      %1341 = vmatpush.msra.mxu0 %v1310
      %1342 = vmatpush.msra.mxu0 %v1309
      %1343 = vmatpush.msra.mxu0 %v1308
      %1344 = vmatmul.f32.gmra.mxu0 %v1300
      %v1345 = vpop.f32.mrf.mxu0
      %v1346 = vadd.f32 %v1326, %v1345
      %1347 = vmatmul.f32.gmra.mxu0 %v1301
      %v1348 = vpop.f32.mrf.mxu0
      %v1349 = vadd.f32 %v1326, %v1348
      %1350 = vmatmul.f32.gmra.mxu0 %v1302
      %v1351 = vpop.f32.mrf.mxu0
      %v1352 = vadd.f32 %v1326, %v1351
      %1353 = vmatmul.f32.gmra.mxu0 %v1303
      %v1354 = vpop.f32.mrf.mxu0
      %v1355 = vadd.f32 %v1326, %v1354
      %1356 = vmatmul.f32.gmra.mxu0 %v1304
      %v1357 = vpop.f32.mrf.mxu0
      %v1358 = vadd.f32 %v1326, %v1357
      %1359 = vmatmul.f32.gmra.mxu0 %v1305
      %v1360 = vpop.f32.mrf.mxu0
      %v1361 = vadd.f32 %v1326, %v1360
      %1362 = vmatmul.f32.gmra.mxu0 %v1306
      %v1363 = vpop.f32.mrf.mxu0
      %v1364 = vadd.f32 %v1326, %v1363
      %1365 = vmatmul.f32.gmra.mxu0 %v1307
      %v1366 = vpop.f32.mrf.mxu0
      %v1367 = vadd.f32 %v1326, %v1366
      %1368 = vdwg.mxu0
      %v1369 = vadd.f32 %v1292, %v1346
      %v1370 = vadd.f32 %v1293, %v1349
      %v1371 = vadd.f32 %v1294, %v1352
      %v1372 = vadd.f32 %v1295, %v1355
      %v1373 = vadd.f32 %v1296, %v1358
      %v1374 = vadd.f32 %v1297, %v1361
      %v1375 = vadd.f32 %v1298, %v1364
      %v1376 = vadd.f32 %v1299, %v1367
      %1377 = vst [vmem:[%s422] sm:$0xff] %v1369
      %1378 = vst [vmem:[%s422 + $0x8] sm:$0xff] %v1370
      %1379 = vst [vmem:[%s422 + $0x10] sm:$0xff] %v1371
      %1380 = vst [vmem:[%s422 + $0x18] sm:$0xff] %v1372
      %1381 = vst [vmem:[%s422 + $0x20] sm:$0xff] %v1373
      %1382 = vst [vmem:[%s422 + $0x28] sm:$0xff] %v1374
      %1383 = vst [vmem:[%s422 + $0x30] sm:$0xff] %v1375
      %1384 = vst [vmem:[%s422 + $0x38] sm:$0xff] %v1376
      %p1385 = scmp.lt.s32.totalorder %s24, 1
      %s1386 = scalar_select %p1385, %s24, 1
      %p1387 = scmp.lt.s32.totalorder %s25, 0
      %s1388 = scalar_select %p1387, %s25, 0
      %s1389 = smul.addr %s1386, 8
      %s1390 = sadd.s32 %s1388, %s1389
      %s1391 = smul.addr %s1390, 8
      %s1392 = scalar_lea.vmem %s8, %s1391
      // Predicated region
      $region53: #{resnet_block_forward.3} parent=51 // pred_check
        %p1393 = pneg %p255
      $region54: #{resnet_block_forward.3} parent=51 // pred_check_branch
        %1395 = sbr.rel (%p1393) target = $region56
      $region55: #{resnet_block_forward.3} parent=51 // pred_region
        _
      $region56: #{resnet_block_forward.3} parent=51 // pred_fallthru
        _
    $region52: #{resnet_block_forward.3} parent=5 // pred_fallthru
      _
    %p1396 = scmp.le.s32.totalorder 2, %s15
    // Predicated region
    $region57: #{resnet_block_forward.3} parent=5 // pred_check
      %p1397 = pneg %p1396
    $region58: #{resnet_block_forward.3} parent=5 // pred_check_branch
      %1399 = sbr.rel (%p1397) target = $region60
    $region59: #{resnet_block_forward.3} parent=5 // pred_region
      %s1400 = ssub.s32 %s15, 2
      // Predicated region
      $region61: #{resnet_block_forward.3} parent=59 // pred_check
        %p1401 = pneg %p261
      $region62: #{resnet_block_forward.3} parent=59 // pred_check_branch
        %1403 = sbr.rel (%p1401) target = $region64
      $region63: #{resnet_block_forward.3} parent=59 // pred_region
        %p1404 = scmp.lt.s32.totalorder %s26, 1
        %s1405 = scalar_select %p1404, %s26, 1
        %p1406 = scmp.lt.s32.totalorder %s27, 0
        %s1407 = scalar_select %p1406, %s27, 0
        %s1408 = smul.addr %s1405, 8
        %s1409 = sadd.s32 %s1407, %s1408
        %s1410 = smul.addr %s1409, 8
        %s1411 = scalar_lea.vmem %s8, %s1410
      $region64: #{resnet_block_forward.3} parent=59 // pred_fallthru
        _
    $region60: #{resnet_block_forward.3} parent=5 // pred_fallthru
      _
  $region6: #{resnet_block_forward.3} parent=0 // loop_footer
    %s19 = sadd.s32 1, %s15
  $region7: #{resnet_block_forward.3} parent=0 // loop_footer_branch
    %14 = sbr.rel target = $region3
  $region8: #{resnet_block_forward.3} parent=0 // loop_exit
    _

</llo_original>
